<compile_context>
chip_gen: v7x
topology: tpu7x:2x2x1
jax: 0.10.0
libtpu: 0.0.40
codegen_flags: <defaults>
</compile_context>

<pallas_src>
import functools

import jax
import jax.numpy as jnp
from jax.experimental import pallas as pl
from jax.experimental.pallas import tpu as pltpu


# ------------------------------ helpers ------------------------------------ #


def _vmem_limit_bytes():
    """Per-generation VMEM request: leave headroom (v7x has only 64 MiB/TC)."""
    try:
        cap = pltpu.get_tpu_info().vmem_capacity_bytes
        return int(min(cap * 3 // 4, 100 * 1024 * 1024))
    except Exception:  # pragma: no cover - conservative fallback
        return 48 * 1024 * 1024


def _tap_masks(hp, wp, s_pad):
    """(8, s_pad) zero-padding masks for the 8 NON-center conv taps.

    Tap order is (dy, dx) row-major with the center (0, 0) tap omitted.  Lanes
    beyond hp*wp (spatial padding to a lane multiple) are masked to zero.
    """
    h = jnp.arange(hp)[:, None]
    w = jnp.arange(wp)[None, :]
    rows = []
    for dy in (-1, 0, 1):
        for dx in (-1, 0, 1):
            if dy == 0 and dx == 0:
                continue
            valid = ((h + dy >= 0) & (h + dy < hp) &
                     (w + dx >= 0) & (w + dx < wp))
            rows.append(valid.reshape(-1))
    m = jnp.stack(rows).astype(jnp.float32)                 # (8, hp*wp)
    if s_pad != hp * wp:
        m = jnp.pad(m, ((0, 0), (0, s_pad - hp * wp)))
    return m


# ----------------------------- Pallas kernels ------------------------------ #


def _maxpool_kernel(x_ref, sel_even_ref, sel_odd_ref, o_ref, *, width):
    """2x2 / stride-2 max pool on a row tile.

    x_ref        : (1, rows, 2*width)  row r = (channel, pooled-row) pair,
                   lanes hold [even-H input row | odd-H input row].
    sel_even_ref : (width, width//2)  0/1 matrix picking columns 2j.
    sel_odd_ref  : (width, width//2)  0/1 matrix picking columns 2j+1.
    o_ref        : (1, rows, width//2)
    """
    v = x_ref[0].astype(jnp.float32)                        # (rows, 2W)
    hmax = jnp.maximum(v[:, :width], v[:, width:])          # H-pair max (rows, W)
    dn = (((1,), (0,)), ((), ()))
    # Exact stride-2 column selection: 0/1 matrices, full-f32-precision matmul
    # (default MXU precision would round the f32 operands to bf16).
    even = jax.lax.dot_general(hmax, sel_even_ref[...], dn,
                               precision=jax.lax.Precision.HIGHEST,
                               preferred_element_type=jnp.float32)
    odd = jax.lax.dot_general(hmax, sel_odd_ref[...], dn,
                              precision=jax.lax.Precision.HIGHEST,
                              preferred_element_type=jnp.float32)
    o_ref[0] = jnp.maximum(even, odd).astype(o_ref.dtype)


def _convs_kernel(x_ref, masks_ref, *rest,
                  num_layers, wp, compute_dtype, f32_precision):
    """Fused [Conv3x3(pad=1) + BN(eval) + ReLU] x num_layers for one sample.

    rest = (w_ref_0, sh_ref_0, ..., w_ref_{L-1}, sh_ref_{L-1}, out_ref)
      x_ref    : (1, Cin, S_pad)      pooled activation, flat spatial on lanes
      masks_ref: (8, S_pad)           per-tap zero-padding masks (compute_dtype)
      w_ref_l  : (Cout_l, 9*Cin_l)    tap-concatenated weights, BN scale folded
      sh_ref_l : (Cout_l, 1)          folded conv-bias + BN shift, f32
      out_ref  : (1, Cout_last, S_pad)
    """
    out_ref = rest[-1]
    layer_refs = rest[:-1]

    masks = masks_ref[...]                                  # (8, S_pad)
    act = x_ref[0].astype(compute_dtype)                    # (Cin, S_pad)
    s_len = act.shape[1]

    # tap order (dy, dx) matches mask / weight preparation in the wrapper
    offsets = [dy * wp + dx for dy in (-1, 0, 1) for dx in (-1, 0, 1)]

    for l in range(num_layers):
        w_ref = layer_refs[2 * l]                           # (Cout, 9*Cin)
        sh_ref = layer_refs[2 * l + 1]                      # (Cout, 1)

        taps = []
        for t, off in enumerate(offsets):
            if off == 0:                                    # center tap: all-ones mask
                taps.append(act)
                continue
            # shifted[c, s] = act[c, (s + off) mod S_pad]; any wrapped / padded
            # source lane is killed by the mask.
            shifted = pltpu.roll(act, (-off) % s_len, axis=1)
            m = t if t < 4 else t - 1
            taps.append(shifted * masks[m:m + 1, :])
        x_cat = jnp.concatenate(taps, axis=0)               # (9*Cin, S_pad)

        acc = jax.lax.dot_general(                          # ONE matmul, K = 9*Cin
            w_ref[...], x_cat,
            dimension_numbers=(((1,), (0,)), ((), ())),
            precision=f32_precision,
            preferred_element_type=jnp.float32)             # (Cout, S_pad) f32
        act = jnp.maximum(acc + sh_ref[...], 0.0)           # bias+BN shift, ReLU
        if l + 1 < num_layers:
            act = act.astype(compute_dtype)

    out_ref[0] = act.astype(out_ref.dtype)


# ------------------------------- wrappers ---------------------------------- #


def maxpool2x2(x_nchw):
    """nn.MaxPool2d(2) on NCHW input -> NCHW output, one gridded Pallas kernel."""
    N, C, H, W = x_nchw.shape
    if (H % 2) or (W % 2):  # MaxPool2d(2) floors odd spatial dims
        x_nchw = x_nchw[:, :, :(H // 2) * 2, :(W // 2) * 2]
        N, C, H, W = x_nchw.shape
    Hp, Wp = H // 2, W // 2
    R = C * Hp

    # Free row-major reshape: row (c*Hp + hp) = [x[c, 2hp, :], x[c, 2hp+1, :]]
    xr = x_nchw.reshape(N, R, 2 * W)
    cols = jnp.arange(W)[:, None]
    sel_even = (cols == 2 * jnp.arange(Wp)[None, :]).astype(jnp.float32)
    sel_odd = (cols == 2 * jnp.arange(Wp)[None, :] + 1).astype(jnp.float32)

    # HBM-roofline bound: large row tiles amortize the ~0.35us/step overhead.
    rtile = R if R <= 1024 else 1024
    grid = (N, pl.cdiv(R, rtile))

    out = pl.pallas_call(
        functools.partial(_maxpool_kernel, width=W),
        out_shape=jax.ShapeDtypeStruct((N, R, Wp), x_nchw.dtype),
        grid_spec=pltpu.PrefetchScalarGridSpec(
            num_scalar_prefetch=0,
            grid=grid,
            in_specs=[
                pl.BlockSpec((1, rtile, 2 * W), lambda n, r: (n, r, 0)),
                pl.BlockSpec((W, Wp), lambda n, r: (0, 0)),
                pl.BlockSpec((W, Wp), lambda n, r: (0, 0)),
            ],
            out_specs=pl.BlockSpec((1, rtile, Wp), lambda n, r: (n, r, 0)),
        ),
        compiler_params=pltpu.CompilerParams(
            dimension_semantics=("parallel", "parallel"),
            vmem_limit_bytes=_vmem_limit_bytes()),
    )(xr, sel_even, sel_odd)
    return out.reshape(N, C, Hp, Wp)


def conv_bn_relu_stack(pooled_nchw, layer_params, compute_dtype, eps=1e-5):
    """Fused [Conv3x3(pad=1) + BN(eval) + ReLU] x L, single pallas_call, NCHW in/out."""
    N, Cin, Hp, Wp = pooled_nchw.shape
    S = Hp * Wp
    S_pad = ((S + 127) // 128) * 128        # lane-dense stores + native lane rolls
    x_flat = pooled_nchw.reshape(N, Cin, S)                 # free reshape
    if S_pad != S:
        x_flat = jnp.pad(x_flat, ((0, 0), (0, 0), (0, S_pad - S)))
    masks = _tap_masks(Hp, Wp, S_pad).astype(compute_dtype)  # (8, S_pad)

    # f32 operands: force exact multi-pass MXU emulation (v5e path / tight check);
    # bf16 operands (v6e/v7x fast path): single-pass MXU with f32 accumulation.
    f32_precision = (jax.lax.Precision.HIGHEST
                     if jnp.dtype(compute_dtype) == jnp.dtype(jnp.float32) else None)

    args = [x_flat, masks]
    in_specs = [
        pl.BlockSpec((1, Cin, S_pad), lambda n: (n, 0, 0)),
        pl.BlockSpec((8, S_pad), lambda n: (0, 0)),
    ]
    flops = 0
    weight_bytes = 0
    for p in layer_params:
        cout, cin = p["w"].shape[0], p["w"].shape[1]
        inv_std = 1.0 / jnp.sqrt(p["var"] + eps)
        scale = p["gamma"] * inv_std                        # (Cout,)
        shift = p["beta"] + scale * (p["b"] - p["mean"])    # (Cout,)
        # (Cout, Cin, 3, 3) -> (Cout, ky, kx, Cin) -> (Cout, 9*Cin); col = t*Cin + i
        w_cat = jnp.transpose(p["w"], (0, 2, 3, 1)).reshape(cout, 9 * cin)
        w_cat = (w_cat * scale[:, None]).astype(compute_dtype)   # BN scale folded
        sh = shift.reshape(cout, 1).astype(jnp.float32)
        args += [w_cat, sh]
        in_specs += [
            pl.BlockSpec((cout, 9 * cin), lambda n: (0, 0)),
            pl.BlockSpec((cout, 1), lambda n: (0, 0)),
        ]
        flops += 2 * N * S_pad * cout * 9 * cin
        weight_bytes += w_cat.size * w_cat.dtype.itemsize + sh.size * 4
    cout_last = layer_params[-1]["w"].shape[0]

    out_dtype = pooled_nchw.dtype
    bytes_accessed = (x_flat.size * x_flat.dtype.itemsize
                      + N * cout_last * S_pad * jnp.dtype(out_dtype).itemsize
                      + weight_bytes + masks.size * masks.dtype.itemsize)

    out = pl.pallas_call(
        functools.partial(_convs_kernel, num_layers=len(layer_params), wp=Wp,
                          compute_dtype=compute_dtype, f32_precision=f32_precision),
        out_shape=jax.ShapeDtypeStruct((N, cout_last, S_pad), out_dtype),
        grid_spec=pltpu.PrefetchScalarGridSpec(
            num_scalar_prefetch=0,
            grid=(N,),
            in_specs=in_specs,
            out_specs=pl.BlockSpec((1, cout_last, S_pad), lambda n: (n, 0, 0)),
        ),
        compiler_params=pltpu.CompilerParams(
            dimension_semantics=("parallel",),
            vmem_limit_bytes=_vmem_limit_bytes()),
        cost_estimate=pl.CostEstimate(flops=int(flops), transcendentals=0,
                                      bytes_accessed=int(bytes_accessed)),
    )(*args)
    if S_pad != S:
        out = out[:, :, :S]
    return out.reshape(N, cout_last, Hp, Wp)                # free reshape -> NCHW


@functools.partial(jax.jit, static_argnames=("compute_dtype",))
def down_block(x_nchw, layer_params, compute_dtype=jnp.float32):
    """DownBlock forward: NCHW in -> NCHW out (no layout transposes anywhere)."""
    pooled = maxpool2x2(x_nchw)
    return conv_bn_relu_stack(pooled, layer_params, compute_dtype)


# ------------------------------- reference --------------------------------- #


def down_block_ref(x_nchw, layer_params, eps=1e-5):
    x = jnp.transpose(x_nchw, (0, 2, 3, 1))
    x = jax.lax.reduce_window(x, -jnp.inf, jax.lax.max,
                              (1, 2, 2, 1), (1, 2, 2, 1), "VALID")
    for p in layer_params:
        w_hwio = jnp.transpose(p["w"], (2, 3, 1, 0))
        y = jax.lax.conv_general_dilated(
            x, w_hwio, window_strides=(1, 1), padding="SAME",
            dimension_numbers=("NHWC", "HWIO", "NHWC"),
            precision=jax.lax.Precision.HIGHEST) + p["b"]
        y = (y - p["mean"]) / jnp.sqrt(p["var"] + eps) * p["gamma"] + p["beta"]
        x = jnp.maximum(y, 0.0)
    return jnp.transpose(x, (0, 3, 1, 2))


# --------------------------------- main ------------------------------------ #


def _init_params(key, in_channels, out_channels, nb_conv):
    params = []
    cin = in_channels
    for _ in range(nb_conv):
        key, kw, kb, kg, kbeta, km, kv = jax.random.split(key, 7)
        params.append(dict(
            w=0.1 * jax.random.normal(kw, (out_channels, cin, 3, 3), jnp.float32),
            b=0.05 * jax.random.normal(kb, (out_channels,), jnp.float32),
            gamma=1.0 + 0.1 * jax.random.normal(kg, (out_channels,), jnp.float32),
            beta=0.05 * jax.random.normal(kbeta, (out_channels,), jnp.float32),
            mean=0.05 * jax.random.normal(km, (out_channels,), jnp.float32),
            var=0.5 + jnp.abs(jax.random.normal(kv, (out_channels,), jnp.float32)),
        ))
        cin = out_channels
    return params


if __name__ == "__main__":
    key = jax.random.PRNGKey(0)
    key, kx = jax.random.split(key)

    in_channels, out_channels, nb_conv = 4, 8, 2
    x = jax.random.normal(kx, (2, in_channels, 16, 16), jnp.float32)  # NCHW
    params = _init_params(key, in_channels, out_channels, nb_conv)

    ref = jax.block_until_ready(down_block_ref(x, params))

    # f32 MXU operands (exact path): tight numerical check
    out = jax.block_until_ready(down_block(x, params, compute_dtype=jnp.float32))
    assert out.shape == (2, out_channels, 8, 8), out.shape
    assert jnp.allclose(out, ref, atol=1e-4, rtol=1e-4), "f32 mismatch vs reference"

    # bf16 MXU operands (v6e/v7x fast path), f32 accumulation + f32 epilogue
    out_bf16 = jax.block_until_ready(down_block(x, params, compute_dtype=jnp.bfloat16))
    assert out_bf16.shape == (2, out_channels, 8, 8), out_bf16.shape
    assert jnp.allclose(out_bf16, ref, atol=5e-2, rtol=5e-2), "bf16 mismatch vs reference"

    print("KERNEL_OK")
</pallas_src>

<mosaic_0001>
module attributes {stable_mosaic.version = 11 : i64} {
  func.func @_maxpool_kernel(%arg0: i32, %arg1: i32, %arg2: memref<1x32x32xf32, #tpu.memory_space<vmem>>, %arg3: memref<16x8xf32, #tpu.memory_space<vmem>>, %arg4: memref<16x8xf32, #tpu.memory_space<vmem>>, %arg5: memref<1x32x8xf32, #tpu.memory_space<vmem>>) attributes {dimension_semantics = [#tpu.dimension_semantics<parallel>, #tpu.dimension_semantics<parallel>], iteration_bounds = array<i64: 2, 1>, scalar_prefetch = 0 : i64, scratch_operands = 0 : i64, tpu.core_type = #tpu.core_type<tc>, window_params = [{transform_indices = @transform_0, window_bounds = array<i64: 1, 32, 32>}, {pipeline_mode = #tpu.pipeline_mode<synchronous>, transform_indices = @transform_1, window_bounds = array<i64: 16, 8>}, {pipeline_mode = #tpu.pipeline_mode<synchronous>, transform_indices = @transform_2, window_bounds = array<i64: 16, 8>}, {transform_indices = @transform_3, window_bounds = array<i64: 1, 32, 8>}]} {
    %c0 = arith.constant 0 : index
    %c0_0 = arith.constant 0 : index
    %c0_1 = arith.constant 0 : index
    %0 = vector.load %arg2[%c0, %c0_0, %c0_1] : memref<1x32x32xf32, #tpu.memory_space<vmem>>, vector<1x32x32xf32>
    %1 = vector.shape_cast %0 : vector<1x32x32xf32> to vector<32x32xf32>
    %2 = vector.extract_strided_slice %1 {offsets = [0, 0], sizes = [32, 16], strides = [1, 1]} : vector<32x32xf32> to vector<32x16xf32>
    %3 = vector.extract_strided_slice %1 {offsets = [0, 16], sizes = [32, 16], strides = [1, 1]} : vector<32x32xf32> to vector<32x16xf32>
    %4 = arith.maximumf %2, %3 : vector<32x16xf32>
    %c0_2 = arith.constant 0 : index
    %c0_3 = arith.constant 0 : index
    %5 = vector.load %arg3[%c0_2, %c0_3] : memref<16x8xf32, #tpu.memory_space<vmem>>, vector<16x8xf32>
    %cst = arith.constant dense<0.000000e+00> : vector<32x8xf32>
    %6 = tpu.matmul %4, %5, %cst {dimension_numbers = #tpu.dot_dimension_numbers<[1], [0], [0], [1], [0, 0, 1, 1], [], []>, precision = #tpu.contract_precision<fp32>} : vector<32x16xf32>, vector<16x8xf32>, vector<32x8xf32> -> vector<32x8xf32>
    %c0_4 = arith.constant 0 : index
    %c0_5 = arith.constant 0 : index
    %7 = vector.load %arg4[%c0_4, %c0_5] : memref<16x8xf32, #tpu.memory_space<vmem>>, vector<16x8xf32>
    %cst_6 = arith.constant dense<0.000000e+00> : vector<32x8xf32>
    %8 = tpu.matmul %4, %7, %cst_6 {dimension_numbers = #tpu.dot_dimension_numbers<[1], [0], [0], [1], [0, 0, 1, 1], [], []>, precision = #tpu.contract_precision<fp32>} : vector<32x16xf32>, vector<16x8xf32>, vector<32x8xf32> -> vector<32x8xf32>
    %9 = arith.maximumf %6, %8 : vector<32x8xf32>
    %c0_7 = arith.constant 0 : index
    %c0_8 = arith.constant 0 : index
    %c0_9 = arith.constant 0 : index
    %10 = vector.load %arg5[%c0_7, %c0_8, %c0_9] : memref<1x32x8xf32, #tpu.memory_space<vmem>>, vector<1x32x8xf32>
    %11 = vector.shape_cast %10 : vector<1x32x8xf32> to vector<32x8xf32>
    %12 = vector.shape_cast %9 : vector<32x8xf32> to vector<1x32x8xf32>
    tpu.vector_store %arg5[%c0_7, %c0_8, %c0_9], %12 {strides = array<i32>} : memref<1x32x8xf32, #tpu.memory_space<vmem>>, vector<1x32x8xf32>,
    return
  }
  func.func @transform_0(%arg0: i32, %arg1: i32) -> (i32, i32, i32) {
    %c0_i32 = arith.constant 0 : i32
    %c0_i32_0 = arith.constant 0 : i32
    return %arg0, %arg1, %c0_i32 : i32, i32, i32
  }
  func.func @transform_1(%arg0: i32, %arg1: i32) -> (i32, i32) {
    %c0_i32 = arith.constant 0 : i32
    %c0_i32_0 = arith.constant 0 : i32
    %c0_i32_1 = arith.constant 0 : i32
    return %c0_i32, %c0_i32_0 : i32, i32
  }
  func.func @transform_2(%arg0: i32, %arg1: i32) -> (i32, i32) {
    %c0_i32 = arith.constant 0 : i32
    %c0_i32_0 = arith.constant 0 : i32
    %c0_i32_1 = arith.constant 0 : i32
    return %c0_i32, %c0_i32_0 : i32, i32
  }
  func.func @transform_3(%arg0: i32, %arg1: i32) -> (i32, i32, i32) {
    %c0_i32 = arith.constant 0 : i32
    %c0_i32_0 = arith.constant 0 : i32
    return %arg0, %arg1, %c0_i32 : i32, i32, i32
  }
}

module attributes {stable_mosaic.version = 11 : i64} {
  func.func @_convs_kernel(%arg0: i32, %arg1: memref<1x4x128xf32, #tpu.memory_space<vmem>>, %arg2: memref<8x128xf32, #tpu.memory_space<vmem>>, %arg3: memref<8x36xf32, #tpu.memory_space<vmem>>, %arg4: memref<8x1xf32, #tpu.memory_space<vmem>>, %arg5: memref<8x72xf32, #tpu.memory_space<vmem>>, %arg6: memref<8x1xf32, #tpu.memory_space<vmem>>, %arg7: memref<1x8x128xf32, #tpu.memory_space<vmem>>) attributes {dimension_semantics = [#tpu.dimension_semantics<parallel>], iteration_bounds = array<i64: 2>, scalar_prefetch = 0 : i64, scratch_operands = 0 : i64, tpu.core_type = #tpu.core_type<tc>, window_params = [{transform_indices = @transform_0, window_bounds = array<i64: 1, 4, 128>}, {pipeline_mode = #tpu.pipeline_mode<synchronous>, transform_indices = @transform_1, window_bounds = array<i64: 8, 128>}, {pipeline_mode = #tpu.pipeline_mode<synchronous>, transform_indices = @transform_2, window_bounds = array<i64: 8, 36>}, {pipeline_mode = #tpu.pipeline_mode<synchronous>, transform_indices = @transform_3, window_bounds = array<i64: 8, 1>}, {pipeline_mode = #tpu.pipeline_mode<synchronous>, transform_indices = @transform_4, window_bounds = array<i64: 8, 72>}, {pipeline_mode = #tpu.pipeline_mode<synchronous>, transform_indices = @transform_5, window_bounds = array<i64: 8, 1>}, {transform_indices = @transform_6, window_bounds = array<i64: 1, 8, 128>}]} {
    %c0 = arith.constant 0 : index
    %c0_0 = arith.constant 0 : index
    %0 = vector.load %arg2[%c0, %c0_0] : memref<8x128xf32, #tpu.memory_space<vmem>>, vector<8x128xf32>
    %c0_1 = arith.constant 0 : index
    %c0_2 = arith.constant 0 : index
    %c0_3 = arith.constant 0 : index
    %1 = vector.load %arg1[%c0_1, %c0_2, %c0_3] : memref<1x4x128xf32, #tpu.memory_space<vmem>>, vector<1x4x128xf32>
    %2 = vector.shape_cast %1 : vector<1x4x128xf32> to vector<4x128xf32>
    %c9_i32 = arith.constant 9 : i32
    %3 = tpu.dynamic_rotate %2 by %c9_i32 dim 1 : vector<4x128xf32>, i32 -> vector<4x128xf32>
    %4 = vector.extract_strided_slice %0 {offsets = [0, 0], sizes = [1, 128], strides = [1, 1]} : vector<8x128xf32> to vector<1x128xf32>
    %5 = vector.broadcast %4 : vector<1x128xf32> to vector<4x128xf32>
    %6 = arith.mulf %3, %5 : vector<4x128xf32>
    %c8_i32 = arith.constant 8 : i32
    %7 = tpu.dynamic_rotate %2 by %c8_i32 dim 1 : vector<4x128xf32>, i32 -> vector<4x128xf32>
    %8 = vector.extract_strided_slice %0 {offsets = [1, 0], sizes = [1, 128], strides = [1, 1]} : vector<8x128xf32> to vector<1x128xf32>
    %9 = vector.broadcast %8 : vector<1x128xf32> to vector<4x128xf32>
    %10 = arith.mulf %7, %9 : vector<4x128xf32>
    %c7_i32 = arith.constant 7 : i32
    %11 = tpu.dynamic_rotate %2 by %c7_i32 dim 1 : vector<4x128xf32>, i32 -> vector<4x128xf32>
    %12 = vector.extract_strided_slice %0 {offsets = [2, 0], sizes = [1, 128], strides = [1, 1]} : vector<8x128xf32> to vector<1x128xf32>
    %13 = vector.broadcast %12 : vector<1x128xf32> to vector<4x128xf32>
    %14 = arith.mulf %11, %13 : vector<4x128xf32>
    %c1_i32 = arith.constant 1 : i32
    %15 = tpu.dynamic_rotate %2 by %c1_i32 dim 1 : vector<4x128xf32>, i32 -> vector<4x128xf32>
    %16 = vector.extract_strided_slice %0 {offsets = [3, 0], sizes = [1, 128], strides = [1, 1]} : vector<8x128xf32> to vector<1x128xf32>
    %17 = vector.broadcast %16 : vector<1x128xf32> to vector<4x128xf32>
    %18 = arith.mulf %15, %17 : vector<4x128xf32>
    %c127_i32 = arith.constant 127 : i32
    %19 = tpu.dynamic_rotate %2 by %c127_i32 dim 1 : vector<4x128xf32>, i32 -> vector<4x128xf32>
    %20 = vector.extract_strided_slice %0 {offsets = [4, 0], sizes = [1, 128], strides = [1, 1]} : vector<8x128xf32> to vector<1x128xf32>
    %21 = vector.broadcast %20 : vector<1x128xf32> to vector<4x128xf32>
    %22 = arith.mulf %19, %21 : vector<4x128xf32>
    %c121_i32 = arith.constant 121 : i32
    %23 = tpu.dynamic_rotate %2 by %c121_i32 dim 1 : vector<4x128xf32>, i32 -> vector<4x128xf32>
    %24 = vector.extract_strided_slice %0 {offsets = [5, 0], sizes = [1, 128], strides = [1, 1]} : vector<8x128xf32> to vector<1x128xf32>
    %25 = vector.broadcast %24 : vector<1x128xf32> to vector<4x128xf32>
    %26 = arith.mulf %23, %25 : vector<4x128xf32>
    %c120_i32 = arith.constant 120 : i32
    %27 = tpu.dynamic_rotate %2 by %c120_i32 dim 1 : vector<4x128xf32>, i32 -> vector<4x128xf32>
    %28 = vector.extract_strided_slice %0 {offsets = [6, 0], sizes = [1, 128], strides = [1, 1]} : vector<8x128xf32> to vector<1x128xf32>
    %29 = vector.broadcast %28 : vector<1x128xf32> to vector<4x128xf32>
    %30 = arith.mulf %27, %29 : vector<4x128xf32>
    %c119_i32 = arith.constant 119 : i32
    %31 = tpu.dynamic_rotate %2 by %c119_i32 dim 1 : vector<4x128xf32>, i32 -> vector<4x128xf32>
    %32 = vector.extract_strided_slice %0 {offsets = [7, 0], sizes = [1, 128], strides = [1, 1]} : vector<8x128xf32> to vector<1x128xf32>
    %33 = vector.broadcast %32 : vector<1x128xf32> to vector<4x128xf32>
    %34 = arith.mulf %31, %33 : vector<4x128xf32>
    %35 = tpu.concatenate %6, %10, %14, %18, %2, %22, %26, %30, %34 in 0 : vector<4x128xf32>, vector<4x128xf32>, vector<4x128xf32>, vector<4x128xf32>, vector<4x128xf32>, vector<4x128xf32>, vector<4x128xf32>, vector<4x128xf32>, vector<4x128xf32> -> vector<36x128xf32>
    %c0_4 = arith.constant 0 : index
    %c0_5 = arith.constant 0 : index
    %36 = vector.load %arg3[%c0_4, %c0_5] : memref<8x36xf32, #tpu.memory_space<vmem>>, vector<8x36xf32>
    %cst = arith.constant dense<0.000000e+00> : vector<8x128xf32>
    %37 = tpu.matmul %36, %35, %cst {dimension_numbers = #tpu.dot_dimension_numbers<[1], [0], [0], [1], [0, 0, 1, 1], [], []>, precision = #tpu.contract_precision<fp32>} : vector<8x36xf32>, vector<36x128xf32>, vector<8x128xf32> -> vector<8x128xf32>
    %c0_6 = arith.constant 0 : index
    %c0_7 = arith.constant 0 : index
    %38 = vector.load %arg4[%c0_6, %c0_7] : memref<8x1xf32, #tpu.memory_space<vmem>>, vector<8x1xf32>
    %39 = vector.broadcast %38 : vector<8x1xf32> to vector<8x128xf32>
    %40 = arith.addf %37, %39 : vector<8x128xf32>
    %cst_8 = arith.constant 0.000000e+00 : f32
    %41 = vector.broadcast %cst_8 : f32 to vector<8x128xf32>
    %42 = arith.maximumf %40, %41 : vector<8x128xf32>
    %c9_i32_9 = arith.constant 9 : i32
    %43 = tpu.dynamic_rotate %42 by %c9_i32_9 dim 1 : vector<8x128xf32>, i32 -> vector<8x128xf32>
    %44 = vector.extract_strided_slice %0 {offsets = [0, 0], sizes = [1, 128], strides = [1, 1]} : vector<8x128xf32> to vector<1x128xf32>
    %45 = vector.broadcast %44 : vector<1x128xf32> to vector<8x128xf32>
    %46 = arith.mulf %43, %45 : vector<8x128xf32>
    %c8_i32_10 = arith.constant 8 : i32
    %47 = tpu.dynamic_rotate %42 by %c8_i32_10 dim 1 : vector<8x128xf32>, i32 -> vector<8x128xf32>
    %48 = vector.extract_strided_slice %0 {offsets = [1, 0], sizes = [1, 128], strides = [1, 1]} : vector<8x128xf32> to vector<1x128xf32>
    %49 = vector.broadcast %48 : vector<1x128xf32> to vector<8x128xf32>
    %50 = arith.mulf %47, %49 : vector<8x128xf32>
    %c7_i32_11 = arith.constant 7 : i32
    %51 = tpu.dynamic_rotate %42 by %c7_i32_11 dim 1 : vector<8x128xf32>, i32 -> vector<8x128xf32>
    %52 = vector.extract_strided_slice %0 {offsets = [2, 0], sizes = [1, 128], strides = [1, 1]} : vector<8x128xf32> to vector<1x128xf32>
    %53 = vector.broadcast %52 : vector<1x128xf32> to vector<8x128xf32>
    %54 = arith.mulf %51, %53 : vector<8x128xf32>
    %c1_i32_12 = arith.constant 1 : i32
    %55 = tpu.dynamic_rotate %42 by %c1_i32_12 dim 1 : vector<8x128xf32>, i32 -> vector<8x128xf32>
    %56 = vector.extract_strided_slice %0 {offsets = [3, 0], sizes = [1, 128], strides = [1, 1]} : vector<8x128xf32> to vector<1x128xf32>
    %57 = vector.broadcast %56 : vector<1x128xf32> to vector<8x128xf32>
    %58 = arith.mulf %55, %57 : vector<8x128xf32>
    %c127_i32_13 = arith.constant 127 : i32
    %59 = tpu.dynamic_rotate %42 by %c127_i32_13 dim 1 : vector<8x128xf32>, i32 -> vector<8x128xf32>
    %60 = vector.extract_strided_slice %0 {offsets = [4, 0], sizes = [1, 128], strides = [1, 1]} : vector<8x128xf32> to vector<1x128xf32>
    %61 = vector.broadcast %60 : vector<1x128xf32> to vector<8x128xf32>
    %62 = arith.mulf %59, %61 : vector<8x128xf32>
    %c121_i32_14 = arith.constant 121 : i32
    %63 = tpu.dynamic_rotate %42 by %c121_i32_14 dim 1 : vector<8x128xf32>, i32 -> vector<8x128xf32>
    %64 = vector.extract_strided_slice %0 {offsets = [5, 0], sizes = [1, 128], strides = [1, 1]} : vector<8x128xf32> to vector<1x128xf32>
    %65 = vector.broadcast %64 : vector<1x128xf32> to vector<8x128xf32>
    %66 = arith.mulf %63, %65 : vector<8x128xf32>
    %c120_i32_15 = arith.constant 120 : i32
    %67 = tpu.dynamic_rotate %42 by %c120_i32_15 dim 1 : vector<8x128xf32>, i32 -> vector<8x128xf32>
    %68 = vector.extract_strided_slice %0 {offsets = [6, 0], sizes = [1, 128], strides = [1, 1]} : vector<8x128xf32> to vector<1x128xf32>
    %69 = vector.broadcast %68 : vector<1x128xf32> to vector<8x128xf32>
    %70 = arith.mulf %67, %69 : vector<8x128xf32>
    %c119_i32_16 = arith.constant 119 : i32
    %71 = tpu.dynamic_rotate %42 by %c119_i32_16 dim 1 : vector<8x128xf32>, i32 -> vector<8x128xf32>
    %72 = vector.extract_strided_slice %0 {offsets = [7, 0], sizes = [1, 128], strides = [1, 1]} : vector<8x128xf32> to vector<1x128xf32>
    %73 = vector.broadcast %72 : vector<1x128xf32> to vector<8x128xf32>
    %74 = arith.mulf %71, %73 : vector<8x128xf32>
    %75 = tpu.concatenate %46, %50, %54, %58, %42, %62, %66, %70, %74 in 0 : vector<8x128xf32>, vector<8x128xf32>, vector<8x128xf32>, vector<8x128xf32>, vector<8x128xf32>, vector<8x128xf32>, vector<8x128xf32>, vector<8x128xf32>, vector<8x128xf32> -> vector<72x128xf32>
    %c0_17 = arith.constant 0 : index
    %c0_18 = arith.constant 0 : index
    %76 = vector.load %arg5[%c0_17, %c0_18] : memref<8x72xf32, #tpu.memory_space<vmem>>, vector<8x72xf32>
    %cst_19 = arith.constant dense<0.000000e+00> : vector<8x128xf32>
    %77 = tpu.matmul %76, %75, %cst_19 {dimension_numbers = #tpu.dot_dimension_numbers<[1], [0], [0], [1], [0, 0, 1, 1], [], []>, precision = #tpu.contract_precision<fp32>} : vector<8x72xf32>, vector<72x128xf32>, vector<8x128xf32> -> vector<8x128xf32>
    %c0_20 = arith.constant 0 : index
    %c0_21 = arith.constant 0 : index
    %78 = vector.load %arg6[%c0_20, %c0_21] : memref<8x1xf32, #tpu.memory_space<vmem>>, vector<8x1xf32>
    %79 = vector.broadcast %78 : vector<8x1xf32> to vector<8x128xf32>
    %80 = arith.addf %77, %79 : vector<8x128xf32>
    %cst_22 = arith.constant 0.000000e+00 : f32
    %81 = vector.broadcast %cst_22 : f32 to vector<8x128xf32>
    %82 = arith.maximumf %80, %81 : vector<8x128xf32>
    %c0_23 = arith.constant 0 : index
    %c0_24 = arith.constant 0 : index
    %c0_25 = arith.constant 0 : index
    %83 = vector.load %arg7[%c0_23, %c0_24, %c0_25] : memref<1x8x128xf32, #tpu.memory_space<vmem>>, vector<1x8x128xf32>
    %84 = vector.shape_cast %83 : vector<1x8x128xf32> to vector<8x128xf32>
    %85 = vector.shape_cast %82 : vector<8x128xf32> to vector<1x8x128xf32>
    tpu.vector_store %arg7[%c0_23, %c0_24, %c0_25], %85 {strides = array<i32>} : memref<1x8x128xf32, #tpu.memory_space<vmem>>, vector<1x8x128xf32>,
    return
  }
  func.func @transform_0(%arg0: i32) -> (i32, i32, i32) {
    %c0_i32 = arith.constant 0 : i32
    %c0_i32_0 = arith.constant 0 : i32
    %c0_i32_1 = arith.constant 0 : i32
    return %arg0, %c0_i32, %c0_i32_0 : i32, i32, i32
  }
  func.func @transform_1(%arg0: i32) -> (i32, i32) {
    %c0_i32 = arith.constant 0 : i32
    %c0_i32_0 = arith.constant 0 : i32
    %c0_i32_1 = arith.constant 0 : i32
    return %c0_i32, %c0_i32_0 : i32, i32
  }
  func.func @transform_2(%arg0: i32) -> (i32, i32) {
    %c0_i32 = arith.constant 0 : i32
    %c0_i32_0 = arith.constant 0 : i32
    %c0_i32_1 = arith.constant 0 : i32
    return %c0_i32, %c0_i32_0 : i32, i32
  }
  func.func @transform_3(%arg0: i32) -> (i32, i32) {
    %c0_i32 = arith.constant 0 : i32
    %c0_i32_0 = arith.constant 0 : i32
    %c0_i32_1 = arith.constant 0 : i32
    return %c0_i32, %c0_i32_0 : i32, i32
  }
  func.func @transform_4(%arg0: i32) -> (i32, i32) {
    %c0_i32 = arith.constant 0 : i32
    %c0_i32_0 = arith.constant 0 : i32
    %c0_i32_1 = arith.constant 0 : i32
    return %c0_i32, %c0_i32_0 : i32, i32
  }
  func.func @transform_5(%arg0: i32) -> (i32, i32) {
    %c0_i32 = arith.constant 0 : i32
    %c0_i32_0 = arith.constant 0 : i32
    %c0_i32_1 = arith.constant 0 : i32
    return %c0_i32, %c0_i32_0 : i32, i32
  }
  func.func @transform_6(%arg0: i32) -> (i32, i32, i32) {
    %c0_i32 = arith.constant 0 : i32
    %c0_i32_0 = arith.constant 0 : i32
    %c0_i32_1 = arith.constant 0 : i32
    return %arg0, %c0_i32, %c0_i32_0 : i32, i32, i32
  }
}

</mosaic_0001>

<llo_original>
// kernel: down_block.2
$region0: #{down_block.2}
  #allocation0 [shape = 'u32[]', space=smem, size = 0x4, offset = 0x4, fixed_abs, tag = 'smem constant byte address 0x4 - core index']
  #allocation1 [shape = 'u32[144,128]{1,0:T(1,128)}', space=vmem, size = 0x12000, scoped, tag = 'internal scratch']
  %s0 = inlined_call_operand.vmem [shape: f32[2,32,32], index: 0, kind: input, shape index: {}]
  %s1 = inlined_call_operand.vmem [shape: f32[16,8], index: 1, kind: input, shape index: {}]
  %s2 = inlined_call_operand.vmem [shape: f32[16,8], index: 2, kind: input, shape index: {}]
  %s3 = inlined_call_operand.vmem [shape: f32[2,32,8], index: 3, kind: output, shape index: {}]
  %s4 = sld [smem:[#allocation0]]
  $region45: #{down_block.2} parent=0
    _
  %s6 = ssub.s32 1, %s4
  %s7 = scalar_select 0, %s6, %s4
  loop: start=0, step=1, limit=4
  $region2: #{down_block.2} parent=0 // loop_pre_header
    _
  $region3: #{down_block.2} parent=0 // loop_header
    %s9 = sphi 0, %s13
    %p10 = scmp.ge.s32.totalorder %s9, 4
    %s16 = sphi 0, %s28
    %s17 = sphi 0, %s24
    %s18 = sphi 0, %s16
    %s19 = sphi 0, %s17
    %s20 = sphi 0, %s18
    %s21 = sphi 0, %s19
    %s33 = sphi 0, %s35
    %s36 = sphi 0, %s33
    %s37 = sphi 0, %s36
    %s53 = sphi 0, %s37
    %s57 = sphi 0, %s57
    %s59 = sphi 0, %s57
    %s60 = sphi 0, %s59
    %s74 = sphi 0, %s60
    %s78 = sphi 0, %s78
    %s80 = sphi 0, %s78
    %s81 = sphi 0, %s80
    %s95 = sphi 0, %s81
    %s103 = sphi 0, %s105
    %s106 = sphi 0, %s103
    %s107 = sphi 0, %s106
    %s123 = sphi 0, %s107
  $region4: #{down_block.2} parent=0 // loop_header_branch
    %12 = sbr.rel (%p10) target = $region8
  $region5: #{down_block.2} parent=0 // loop_body
    %s14 = ssub.s32 %s9, 1
    %s15 = ssub.s32 %s9, 2
    %s22 = sadd.s32 1, %s17
    %p23 = scmp.ge.s32.totalorder %s22, 1
    %s24 = scalar_select %p23, 0, %s22
    %s25 = sadd.s32 1, %s16
    %s26 = scalar_select %p23, %s25, %s16
    %p27 = scmp.ge.s32.totalorder %s26, 2
    %s28 = scalar_select %p27, 0, %s26
    %s29 = ssub.s32 %s16, %s28
    %s30 = ssub.s32 %s17, %s24
    %s31 = sor.u32 %s29, %s30
    %p32 = scmp.eq.s32.totalorder %s31, 0
    %s34 = sadd.s32 %s33, 1
    %s35 = scalar_select %p32, %s33, %s34
    %p38 = pneg %p32
    %p39 = scmp.eq.s32.totalorder %s9, 1
    %p40 = por %p38, %p39
    %p41 = scmp.ne.s32.totalorder %s33, %s36
    %p42 = scmp.eq.s32.totalorder %s9, 0
    %p43 = por %p41, %p42
    %p44 = scmp.ne.s32.totalorder %s33, %s36
    %p45 = scmp.eq.s32.totalorder %s14, 1
    %p46 = por %p44, %p45
    %p47 = scmp.ne.s32.totalorder %s36, %s37
    %p48 = scmp.eq.s32.totalorder %s14, 0
    %p49 = por %p47, %p48
    %p50 = scmp.ne.s32.totalorder %s36, %s37
    %p51 = scmp.eq.s32.totalorder %s15, 1
    %p52 = por %p50, %p51
    %p54 = scmp.ne.s32.totalorder %s37, %s53
    %p55 = scmp.eq.s32.totalorder %s15, 0
    %p56 = por %p54, %p55
    %s58 = sadd.s32 %s57, 1
    %p61 = scmp.eq.s32.totalorder %s9, 1
    %p62 = scmp.ne.s32.totalorder %s57, %s59
    %p63 = scmp.eq.s32.totalorder %s9, 0
    %p64 = por %p62, %p63
    %p65 = scmp.ne.s32.totalorder %s57, %s59
    %p66 = scmp.eq.s32.totalorder %s14, 1
    %p67 = por %p65, %p66
    %p68 = scmp.ne.s32.totalorder %s59, %s60
    %p69 = scmp.eq.s32.totalorder %s14, 0
    %p70 = por %p68, %p69
    %p71 = scmp.ne.s32.totalorder %s59, %s60
    %p72 = scmp.eq.s32.totalorder %s15, 1
    %p73 = por %p71, %p72
    %p75 = scmp.ne.s32.totalorder %s60, %s74
    %p76 = scmp.eq.s32.totalorder %s15, 0
    %p77 = por %p75, %p76
    %s79 = sadd.s32 %s78, 1
    %p82 = scmp.eq.s32.totalorder %s9, 1
    %p83 = scmp.ne.s32.totalorder %s78, %s80
    %p84 = scmp.eq.s32.totalorder %s9, 0
    %p85 = por %p83, %p84
    %p86 = scmp.ne.s32.totalorder %s78, %s80
    %p87 = scmp.eq.s32.totalorder %s14, 1
    %p88 = por %p86, %p87
    %p89 = scmp.ne.s32.totalorder %s80, %s81
    %p90 = scmp.eq.s32.totalorder %s14, 0
    %p91 = por %p89, %p90
    %p92 = scmp.ne.s32.totalorder %s80, %s81
    %p93 = scmp.eq.s32.totalorder %s15, 1
    %p94 = por %p92, %p93
    %p96 = scmp.ne.s32.totalorder %s81, %s95
    %p97 = scmp.eq.s32.totalorder %s15, 0
    %p98 = por %p96, %p97
    %s99 = ssub.s32 %s16, %s28
    %s100 = ssub.s32 %s17, %s24
    %s101 = sor.u32 %s99, %s100
    %p102 = scmp.eq.s32.totalorder %s101, 0
    %s104 = sadd.s32 %s103, 1
    %s105 = scalar_select %p102, %s103, %s104
    %p108 = pneg %p102
    %p109 = scmp.eq.s32.totalorder %s9, 1
    %p110 = por %p108, %p109
    %p111 = scmp.ne.s32.totalorder %s103, %s106
    %p112 = scmp.eq.s32.totalorder %s9, 0
    %p113 = por %p111, %p112
    %p114 = scmp.ne.s32.totalorder %s103, %s106
    %p115 = scmp.eq.s32.totalorder %s14, 1
    %p116 = por %p114, %p115
    %p117 = scmp.ne.s32.totalorder %s106, %s107
    %p118 = scmp.eq.s32.totalorder %s14, 0
    %p119 = por %p117, %p118
    %p120 = scmp.ne.s32.totalorder %s106, %s107
    %p121 = scmp.eq.s32.totalorder %s15, 1
    %p122 = por %p120, %p121
    %p124 = scmp.ne.s32.totalorder %s107, %s123
    %p125 = scmp.eq.s32.totalorder %s15, 0
    %p126 = por %p124, %p125
    %p127 = scmp.le.s32.totalorder 1, %s9
    %p128 = scmp.lt.s32.totalorder %s9, 3
    %p129 = pnand %p127, %p128
    %p130 = pneg %p129
    // Predicated region
    $region9: #{down_block.2} parent=5 // pred_check
      _
    $region10: #{down_block.2} parent=5 // pred_check_branch
      %132 = sbr.rel (%p129) target = $region12
    $region11: #{down_block.2} parent=5 // pred_region
      %s133 = ssub.s32 %s9, 1
      // Predicated region
      $region13: #{down_block.2} parent=11 // pred_check
        %p134 = pneg %p70
      $region14: #{down_block.2} parent=11 // pred_check_branch
        %136 = sbr.rel (%p134) target = $region16
      $region15: #{down_block.2} parent=11 // pred_region
        _
      $region16: #{down_block.2} parent=11 // pred_fallthru
        _
      // Predicated region
      $region17: #{down_block.2} parent=11 // pred_check
        %p137 = pneg %p91
      $region18: #{down_block.2} parent=11 // pred_check_branch
        %139 = sbr.rel (%p137) target = $region20
      $region19: #{down_block.2} parent=11 // pred_region
        _
      $region20: #{down_block.2} parent=11 // pred_fallthru
        _
    $region12: #{down_block.2} parent=5 // pred_fallthru
      _
    %p140 = scmp.lt.s32.totalorder %s9, 2
    // Predicated region
    $region21: #{down_block.2} parent=5 // pred_check
      %p141 = pneg %p140
    $region22: #{down_block.2} parent=5 // pred_check_branch
      %143 = sbr.rel (%p141) target = $region24
    $region23: #{down_block.2} parent=5 // pred_region
      // Predicated region
      $region25: #{down_block.2} parent=23 // pred_check
        %p144 = pneg %p43
      $region26: #{down_block.2} parent=23 // pred_check_branch
        %146 = sbr.rel (%p144) target = $region28
      $region27: #{down_block.2} parent=23 // pred_region
        %s147 = smul.u32 4, %s17
        %p148 = scmp.lt.s32.totalorder %s16, 1
        %s149 = scalar_select %p148, %s16, 1
        %p150 = scmp.lt.s32.totalorder %s147, 3
        %s151 = scalar_select %p150, %s147, 3
        %s152 = smul.addr %s149, 4
        %s153 = sadd.s32 %s151, %s152
        %s154 = smul.addr %s153, 8
        %s155 = scalar_lea.vmem %s0, %s154
        %s156 = smul.u32 4, %s17
      $region28: #{down_block.2} parent=23 // pred_fallthru
        _
    $region24: #{down_block.2} parent=5 // pred_fallthru
      _
    %p157 = scmp.le.s32.totalorder 1, %s9
    %p158 = scmp.lt.s32.totalorder %s9, 3
    %p159 = pnand %p157, %p158
    %p160 = pneg %p159
    // Predicated region
    $region29: #{down_block.2} parent=5 // pred_check
      _
    $region30: #{down_block.2} parent=5 // pred_check_branch
      %162 = sbr.rel (%p159) target = $region32
    $region31: #{down_block.2} parent=5 // pred_region
      %s163 = ssub.s32 %s9, 1
      %s164 = smul.u32 4, %s19
      %p165 = scmp.lt.s32.totalorder %s18, 1
      %s166 = scalar_select %p165, %s18, 1
      %p167 = scmp.lt.s32.totalorder %s164, 3
      %s168 = scalar_select %p167, %s164, 3
      %s169 = smul.addr %s166, 4
      %s170 = sadd.s32 %s168, %s169
      %s171 = smul.addr %s170, 8
      %s172 = scalar_lea.vmem %s0, %s171
      %p173 = pneg %p49
      %p174 = pneg %p46
      %p175 = pneg %p70
      %p176 = pneg %p67
      %p177 = pneg %p91
      %p178 = pneg %p88
      %p179 = pneg %p119
      %p180 = pneg %p116
      %s181 = smul.u32 4, %s19
      %p182 = scmp.lt.s32.totalorder %s18, 1
      %s183 = scalar_select %p182, %s18, 1
      %p184 = scmp.lt.s32.totalorder %s181, 3
      %s185 = scalar_select %p184, %s181, 3
      %s186 = smul.addr %s183, 4
      %s187 = sadd.s32 %s185, %s186
      %s188 = smul.addr %s187, 8
      %s189 = scalar_lea.vmem %s3, %s188
      %s190 = smul.u32 4, %s19
      %p191 = scmp.lt.s32.totalorder %s18, 1
      %s192 = scalar_select %p191, %s18, 1
      %p193 = scmp.lt.s32.totalorder %s190, 3
      %s194 = scalar_select %p193, %s190, 3
      %s195 = smul.addr %s192, 4
      %s196 = sadd.s32 %s194, %s195
      %s197 = smul.addr %s196, 8
      %s198 = scalar_lea.vmem %s0, %s197
      %s199 = smul.u32 4, %s19
      %s200 = smul.u32 4, %s19
      %p201 = scmp.lt.s32.totalorder %s18, 1
      %s202 = scalar_select %p201, %s18, 1
      %p203 = scmp.lt.s32.totalorder %s200, 3
      %s204 = scalar_select %p203, %s200, 3
      %s205 = smul.addr %s202, 4
      %s206 = sadd.s32 %s204, %s205
      %s207 = smul.addr %s206, 8
      %s208 = scalar_lea.vmem %s3, %s207
      %s209 = smul.u32 4, %s19
      %v210 = vld [vmem:[%s198] sm:$0xff]
      %v211 = vld [vmem:[%s198 + $0x8] sm:$0xff]
      %v212 = vld [vmem:[%s198 + $0x10] sm:$0xff]
      %v213 = vld [vmem:[%s198 + $0x18] sm:$0xff]
      %218 = vrot.lane.b32.xlu0 %v210, 112
      %v219 = vpop.permute.xlu0 %218
      %220 = vrot.lane.b32.xlu0 %v211, 112
      %v221 = vpop.permute.xlu0 %220
      %222 = vrot.lane.b32.xlu0 %v212, 112
      %v223 = vpop.permute.xlu0 %222
      %224 = vrot.lane.b32.xlu0 %v213, 112
      %v225 = vpop.permute.xlu0 %224
      %v230 = vmax.f32 %v210, %v219
      %v231 = vmax.f32 %v211, %v221
      %v232 = vmax.f32 %v212, %v223
      %v233 = vmax.f32 %v213, %v225
      %v234 = vld [vmem:[%s1] sm:$0xff]
      %v235 = vld [vmem:[%s1 + $0x8] sm:$0xff]
      %vm236 = vcmask 130048
      %v238 = vsel %vm236, %v230, 0
      %v241 = vsel %vm236, %v231, 0
      %v244 = vsel %vm236, %v232, 0
      %v247 = vsel %vm236, %v233, 0
      %249 = vmatprep.subr.mxu0 0.0
      %v250 = vand.u32 %v234, 4294901760
      %251 = vmatpush1.msra.mxu0 %v250
      %252 = vmatprep.subr.mxu0 0.0
      %v253 = vand.u32 %v235, 4294901760
      %254 = vmatpush1.msra.mxu0 %v253
      %255 = vmatprep.subr.mxu0 0.0
      %256 = vmatpush1.msra.mxu0 0.0
      %257 = vmatprep.subr.mxu0 0.0
      %258 = vmatpush1.msra.mxu0 0.0
      %259 = vmatprep.subr.mxu0 0.0
      %260 = vmatpush1.msra.mxu0 0.0
      %261 = vmatprep.subr.mxu0 0.0
      %262 = vmatpush1.msra.mxu0 0.0
      %263 = vmatprep.subr.mxu0 0.0
      %264 = vmatpush1.msra.mxu0 0.0
      %265 = vmatprep.subr.mxu0 0.0
      %266 = vmatpush1.msra.mxu0 0.0
      %267 = vmatprep.subr.mxu0 0.0
      %268 = vmatpush1.msra.mxu0 0.0
      %269 = vmatprep.subr.mxu0 0.0
      %270 = vmatpush1.msra.mxu0 0.0
      %271 = vmatprep.subr.mxu0 0.0
      %272 = vmatpush1.msra.mxu0 0.0
      %273 = vmatprep.subr.mxu0 0.0
      %274 = vmatpush1.msra.mxu0 0.0
      %275 = vmatprep.subr.mxu0 0.0
      %276 = vmatpush1.msra.mxu0 0.0
      %277 = vmatprep.subr.mxu0 0.0
      %278 = vmatpush1.msra.mxu0 0.0
      %279 = vmatprep.subr.mxu0 0.0
      %280 = vmatpush1.msra.mxu0 0.0
      %281 = vmatprep.subr.mxu0 0.0
      %282 = vmatpush1.msra.mxu0 0.0
      %283 = vmatprep.subr.mxu0 0.0
      %284 = vmatpush1.msra.mxu0 0.0
      %285 = vmatprep.subr.mxu0 0.0
      %286 = vmatpush1.msra.mxu0 0.0
      %287 = vmatprep.subr.mxu0 0.0
      %288 = vmatpush1.msra.mxu0 0.0
      %289 = vmatprep.subr.mxu0 0.0
      %290 = vmatpush1.msra.mxu0 0.0
      %291 = vmatprep.subr.mxu0 0.0
      %292 = vmatpush1.msra.mxu0 0.0
      %293 = vmatprep.subr.mxu0 0.0
      %294 = vmatpush1.msra.mxu0 0.0
      %295 = vmatprep.subr.mxu0 0.0
      %296 = vmatpush1.msra.mxu0 0.0
      %297 = vmatprep.subr.mxu0 0.0
      %298 = vmatpush1.msra.mxu0 0.0
      %299 = vmatprep.subr.mxu0 0.0
      %300 = vmatpush1.msra.mxu0 0.0
      %301 = vmatprep.subr.mxu0 0.0
      %302 = vmatpush1.msra.mxu0 0.0
      %303 = vmatprep.subr.mxu0 0.0
      %304 = vmatpush1.msra.mxu0 0.0
      %305 = vmatprep.subr.mxu0 0.0
      %306 = vmatpush1.msra.mxu0 0.0
      %307 = vmatprep.subr.mxu0 0.0
      %308 = vmatpush1.msra.mxu0 0.0
      %309 = vmatprep.subr.mxu0 0.0
      %310 = vmatpush1.msra.mxu0 0.0
      %311 = vmatprep.subr.mxu0 0.0
      %312 = vmatpush1.msra.mxu0 0.0
      %313 = vmatprep.subr.mxu0 0.0
      %314 = vmatpush1.msra.mxu0 0.0
      %315 = vmatprep.mubr.f32.mxu0 0.0
      %v316 = vand.u32 %v238, 4294901760
      %v317 = vsub.f32 %v238, %v316
      %v318 = vand.u32 %v317, 4294901760
      %v319 = vsub.f32 %v317, %v318
      %v320 = vand.u32 %v319, 4294901760
      %321 = vmatmul.mubr.f32.gmra.mrb[0].mxu0 %v320
      %v322 = vpop.f32.mrb[0].mxu0
      %v323 = vadd.f32 0.0, %v322
      %v324 = vpop.f32.mrb[0].mxu0
      %325 = vmatprep.mubr.f32.mxu0 0.0
      %v326 = vand.u32 %v241, 4294901760
      %v327 = vsub.f32 %v241, %v326
      %v328 = vand.u32 %v327, 4294901760
      %v329 = vsub.f32 %v327, %v328
      %v330 = vand.u32 %v329, 4294901760
      %331 = vmatmul.mubr.f32.gmra.mrb[0].mxu0 %v330
      %v332 = vpop.f32.mrb[0].mxu0
      %v333 = vadd.f32 0.0, %v332
      %v334 = vpop.f32.mrb[0].mxu0
      %335 = vmatprep.mubr.f32.mxu0 0.0
      %v336 = vand.u32 %v244, 4294901760
      %v337 = vsub.f32 %v244, %v336
      %v338 = vand.u32 %v337, 4294901760
      %v339 = vsub.f32 %v337, %v338
      %v340 = vand.u32 %v339, 4294901760
      %341 = vmatmul.mubr.f32.gmra.mrb[0].mxu0 %v340
      %v342 = vpop.f32.mrb[0].mxu0
      %v343 = vadd.f32 0.0, %v342
      %v344 = vpop.f32.mrb[0].mxu0
      %345 = vmatprep.mubr.f32.mxu0 0.0
      %v346 = vand.u32 %v247, 4294901760
      %v347 = vsub.f32 %v247, %v346
      %v348 = vand.u32 %v347, 4294901760
      %v349 = vsub.f32 %v347, %v348
      %v350 = vand.u32 %v349, 4294901760
      %351 = vmatmul.mubr.f32.gmra.mrb[0].mxu0 %v350
      %v352 = vpop.f32.mrb[0].mxu0
      %v353 = vadd.f32 0.0, %v352
      %v354 = vpop.f32.mrb[0].mxu0
      %355 = vdwg.mxu0
      %356 = vmatprep.subr.mxu0 0.0
      %v357 = vand.u32 %v234, 4294901760
      %v358 = vsub.f32 %v234, %v357
      %v359 = vand.u32 %v358, 4294901760
      %v360 = vsub.f32 %v358, %v359
      %v361 = vand.u32 %v360, 4294901760
      %362 = vmatpush1.msra.mxu0 %v361
      %363 = vmatprep.subr.mxu0 0.0
      %v364 = vand.u32 %v235, 4294901760
      %v365 = vsub.f32 %v235, %v364
      %v366 = vand.u32 %v365, 4294901760
      %v367 = vsub.f32 %v365, %v366
      %v368 = vand.u32 %v367, 4294901760
      %369 = vmatpush1.msra.mxu0 %v368
      %370 = vmatprep.subr.mxu0 0.0
      %371 = vmatpush1.msra.mxu0 0.0
      %372 = vmatprep.subr.mxu0 0.0
      %373 = vmatpush1.msra.mxu0 0.0
      %374 = vmatprep.subr.mxu0 0.0
      %375 = vmatpush1.msra.mxu0 0.0
      %376 = vmatprep.subr.mxu0 0.0
      %377 = vmatpush1.msra.mxu0 0.0
      %378 = vmatprep.subr.mxu0 0.0
      %379 = vmatpush1.msra.mxu0 0.0
      %380 = vmatprep.subr.mxu0 0.0
      %381 = vmatpush1.msra.mxu0 0.0
      %382 = vmatprep.subr.mxu0 0.0
      %383 = vmatpush1.msra.mxu0 0.0
      %384 = vmatprep.subr.mxu0 0.0
      %385 = vmatpush1.msra.mxu0 0.0
      %386 = vmatprep.subr.mxu0 0.0
      %387 = vmatpush1.msra.mxu0 0.0
      %388 = vmatprep.subr.mxu0 0.0
      %389 = vmatpush1.msra.mxu0 0.0
      %390 = vmatprep.subr.mxu0 0.0
      %391 = vmatpush1.msra.mxu0 0.0
      %392 = vmatprep.subr.mxu0 0.0
      %393 = vmatpush1.msra.mxu0 0.0
      %394 = vmatprep.subr.mxu0 0.0
      %395 = vmatpush1.msra.mxu0 0.0
      %396 = vmatprep.subr.mxu0 0.0
      %397 = vmatpush1.msra.mxu0 0.0
      %398 = vmatprep.subr.mxu0 0.0
      %399 = vmatpush1.msra.mxu0 0.0
      %400 = vmatprep.subr.mxu0 0.0
      %401 = vmatpush1.msra.mxu0 0.0
      %402 = vmatprep.subr.mxu0 0.0
      %403 = vmatpush1.msra.mxu0 0.0
      %404 = vmatprep.subr.mxu0 0.0
      %405 = vmatpush1.msra.mxu0 0.0
      %406 = vmatprep.subr.mxu0 0.0
      %407 = vmatpush1.msra.mxu0 0.0
      %408 = vmatprep.subr.mxu0 0.0
      %409 = vmatpush1.msra.mxu0 0.0
      %410 = vmatprep.subr.mxu0 0.0
      %411 = vmatpush1.msra.mxu0 0.0
      %412 = vmatprep.subr.mxu0 0.0
      %413 = vmatpush1.msra.mxu0 0.0
      %414 = vmatprep.subr.mxu0 0.0
      %415 = vmatpush1.msra.mxu0 0.0
      %416 = vmatprep.subr.mxu0 0.0
      %417 = vmatpush1.msra.mxu0 0.0
      %418 = vmatprep.subr.mxu0 0.0
      %419 = vmatpush1.msra.mxu0 0.0
      %420 = vmatprep.subr.mxu0 0.0
      %421 = vmatpush1.msra.mxu0 0.0
      %422 = vmatprep.subr.mxu0 0.0
      %423 = vmatpush1.msra.mxu0 0.0
      %424 = vmatprep.subr.mxu0 0.0
      %425 = vmatpush1.msra.mxu0 0.0
      %426 = vmatprep.subr.mxu0 0.0
      %427 = vmatpush1.msra.mxu0 0.0
      %428 = vmatprep.subr.mxu0 0.0
      %429 = vmatpush1.msra.mxu0 0.0
      %430 = vmatprep.mubr.f32.mxu0 0.0
      %v431 = vand.u32 %v238, 4294901760
      %432 = vmatmul.mubr.f32.gmra.mrb[0].mxu0 %v431
      %v433 = vpop.f32.mrb[0].mxu0
      %v434 = vadd.f32 %v323, %v433
      %v435 = vpop.f32.mrb[0].mxu0
      %436 = vmatprep.mubr.f32.mxu0 0.0
      %v437 = vand.u32 %v241, 4294901760
      %438 = vmatmul.mubr.f32.gmra.mrb[0].mxu0 %v437
      %v439 = vpop.f32.mrb[0].mxu0
      %v440 = vadd.f32 %v333, %v439
      %v441 = vpop.f32.mrb[0].mxu0
      %442 = vmatprep.mubr.f32.mxu0 0.0
      %v443 = vand.u32 %v244, 4294901760
      %444 = vmatmul.mubr.f32.gmra.mrb[0].mxu0 %v443
      %v445 = vpop.f32.mrb[0].mxu0
      %v446 = vadd.f32 %v343, %v445
      %v447 = vpop.f32.mrb[0].mxu0
      %448 = vmatprep.mubr.f32.mxu0 0.0
      %v449 = vand.u32 %v247, 4294901760
      %450 = vmatmul.mubr.f32.gmra.mrb[0].mxu0 %v449
      %v451 = vpop.f32.mrb[0].mxu0
      %v452 = vadd.f32 %v353, %v451
      %v453 = vpop.f32.mrb[0].mxu0
      %454 = vdwg.mxu0
      %455 = vmatprep.subr.mxu0 0.0
      %v456 = vand.u32 %v234, 4294901760
      %v457 = vsub.f32 %v234, %v456
      %458 = vmatpush1.msra.mxu0 %v457
      %459 = vmatprep.subr.mxu0 0.0
      %v460 = vand.u32 %v235, 4294901760
      %v461 = vsub.f32 %v235, %v460
      %462 = vmatpush1.msra.mxu0 %v461
      %463 = vmatprep.subr.mxu0 0.0
      %464 = vmatpush1.msra.mxu0 0.0
      %465 = vmatprep.subr.mxu0 0.0
      %466 = vmatpush1.msra.mxu0 0.0
      %467 = vmatprep.subr.mxu0 0.0
      %468 = vmatpush1.msra.mxu0 0.0
      %469 = vmatprep.subr.mxu0 0.0
      %470 = vmatpush1.msra.mxu0 0.0
      %471 = vmatprep.subr.mxu0 0.0
      %472 = vmatpush1.msra.mxu0 0.0
      %473 = vmatprep.subr.mxu0 0.0
      %474 = vmatpush1.msra.mxu0 0.0
      %475 = vmatprep.subr.mxu0 0.0
      %476 = vmatpush1.msra.mxu0 0.0
      %477 = vmatprep.subr.mxu0 0.0
      %478 = vmatpush1.msra.mxu0 0.0
      %479 = vmatprep.subr.mxu0 0.0
      %480 = vmatpush1.msra.mxu0 0.0
      %481 = vmatprep.subr.mxu0 0.0
      %482 = vmatpush1.msra.mxu0 0.0
      %483 = vmatprep.subr.mxu0 0.0
      %484 = vmatpush1.msra.mxu0 0.0
      %485 = vmatprep.subr.mxu0 0.0
      %486 = vmatpush1.msra.mxu0 0.0
      %487 = vmatprep.subr.mxu0 0.0
      %488 = vmatpush1.msra.mxu0 0.0
      %489 = vmatprep.subr.mxu0 0.0
      %490 = vmatpush1.msra.mxu0 0.0
      %491 = vmatprep.subr.mxu0 0.0
      %492 = vmatpush1.msra.mxu0 0.0
      %493 = vmatprep.subr.mxu0 0.0
      %494 = vmatpush1.msra.mxu0 0.0
      %495 = vmatprep.subr.mxu0 0.0
      %496 = vmatpush1.msra.mxu0 0.0
      %497 = vmatprep.subr.mxu0 0.0
      %498 = vmatpush1.msra.mxu0 0.0
      %499 = vmatprep.subr.mxu0 0.0
      %500 = vmatpush1.msra.mxu0 0.0
      %501 = vmatprep.subr.mxu0 0.0
      %502 = vmatpush1.msra.mxu0 0.0
      %503 = vmatprep.subr.mxu0 0.0
      %504 = vmatpush1.msra.mxu0 0.0
      %505 = vmatprep.subr.mxu0 0.0
      %506 = vmatpush1.msra.mxu0 0.0
      %507 = vmatprep.subr.mxu0 0.0
      %508 = vmatpush1.msra.mxu0 0.0
      %509 = vmatprep.subr.mxu0 0.0
      %510 = vmatpush1.msra.mxu0 0.0
      %511 = vmatprep.subr.mxu0 0.0
      %512 = vmatpush1.msra.mxu0 0.0
      %513 = vmatprep.subr.mxu0 0.0
      %514 = vmatpush1.msra.mxu0 0.0
      %515 = vmatprep.subr.mxu0 0.0
      %516 = vmatpush1.msra.mxu0 0.0
      %517 = vmatprep.subr.mxu0 0.0
      %518 = vmatpush1.msra.mxu0 0.0
      %519 = vmatprep.subr.mxu0 0.0
      %520 = vmatpush1.msra.mxu0 0.0
      %521 = vmatprep.subr.mxu0 0.0
      %522 = vmatpush1.msra.mxu0 0.0
      %523 = vmatprep.mubr.f32.mxu0 0.0
      %v524 = vand.u32 %v238, 4294901760
      %v525 = vsub.f32 %v238, %v524
      %526 = vmatmul.mubr.f32.gmra.mrb[0].mxu0 %v525
      %v527 = vpop.f32.mrb[0].mxu0
      %v528 = vadd.f32 %v434, %v527
      %v529 = vpop.f32.mrb[0].mxu0
      %530 = vmatprep.mubr.f32.mxu0 0.0
      %v531 = vand.u32 %v241, 4294901760
      %v532 = vsub.f32 %v241, %v531
      %533 = vmatmul.mubr.f32.gmra.mrb[0].mxu0 %v532
      %v534 = vpop.f32.mrb[0].mxu0
      %v535 = vadd.f32 %v440, %v534
      %v536 = vpop.f32.mrb[0].mxu0
      %537 = vmatprep.mubr.f32.mxu0 0.0
      %v538 = vand.u32 %v244, 4294901760
      %v539 = vsub.f32 %v244, %v538
      %540 = vmatmul.mubr.f32.gmra.mrb[0].mxu0 %v539
      %v541 = vpop.f32.mrb[0].mxu0
      %v542 = vadd.f32 %v446, %v541
      %v543 = vpop.f32.mrb[0].mxu0
      %544 = vmatprep.mubr.f32.mxu0 0.0
      %v545 = vand.u32 %v247, 4294901760
      %v546 = vsub.f32 %v247, %v545
      %547 = vmatmul.mubr.f32.gmra.mrb[0].mxu0 %v546
      %v548 = vpop.f32.mrb[0].mxu0
      %v549 = vadd.f32 %v452, %v548
      %v550 = vpop.f32.mrb[0].mxu0
      %551 = vdwg.mxu0
      %552 = vmatprep.subr.mxu0 0.0
      %v553 = vand.u32 %v234, 4294901760
      %554 = vmatpush1.msra.mxu0 %v553
      %555 = vmatprep.subr.mxu0 0.0
      %v556 = vand.u32 %v235, 4294901760
      %557 = vmatpush1.msra.mxu0 %v556
      %558 = vmatprep.subr.mxu0 0.0
      %559 = vmatpush1.msra.mxu0 0.0
      %560 = vmatprep.subr.mxu0 0.0
      %561 = vmatpush1.msra.mxu0 0.0
      %562 = vmatprep.subr.mxu0 0.0
      %563 = vmatpush1.msra.mxu0 0.0
      %564 = vmatprep.subr.mxu0 0.0
      %565 = vmatpush1.msra.mxu0 0.0
      %566 = vmatprep.subr.mxu0 0.0
      %567 = vmatpush1.msra.mxu0 0.0
      %568 = vmatprep.subr.mxu0 0.0
      %569 = vmatpush1.msra.mxu0 0.0
      %570 = vmatprep.subr.mxu0 0.0
      %571 = vmatpush1.msra.mxu0 0.0
      %572 = vmatprep.subr.mxu0 0.0
      %573 = vmatpush1.msra.mxu0 0.0
      %574 = vmatprep.subr.mxu0 0.0
      %575 = vmatpush1.msra.mxu0 0.0
      %576 = vmatprep.subr.mxu0 0.0
      %577 = vmatpush1.msra.mxu0 0.0
      %578 = vmatprep.subr.mxu0 0.0
      %579 = vmatpush1.msra.mxu0 0.0
      %580 = vmatprep.subr.mxu0 0.0
      %581 = vmatpush1.msra.mxu0 0.0
      %582 = vmatprep.subr.mxu0 0.0
      %583 = vmatpush1.msra.mxu0 0.0
      %584 = vmatprep.subr.mxu0 0.0
      %585 = vmatpush1.msra.mxu0 0.0
      %586 = vmatprep.subr.mxu0 0.0
      %587 = vmatpush1.msra.mxu0 0.0
      %588 = vmatprep.subr.mxu0 0.0
      %589 = vmatpush1.msra.mxu0 0.0
      %590 = vmatprep.subr.mxu0 0.0
      %591 = vmatpush1.msra.mxu0 0.0
      %592 = vmatprep.subr.mxu0 0.0
      %593 = vmatpush1.msra.mxu0 0.0
      %594 = vmatprep.subr.mxu0 0.0
      %595 = vmatpush1.msra.mxu0 0.0
      %596 = vmatprep.subr.mxu0 0.0
      %597 = vmatpush1.msra.mxu0 0.0
      %598 = vmatprep.subr.mxu0 0.0
      %599 = vmatpush1.msra.mxu0 0.0
      %600 = vmatprep.subr.mxu0 0.0
      %601 = vmatpush1.msra.mxu0 0.0
      %602 = vmatprep.subr.mxu0 0.0
      %603 = vmatpush1.msra.mxu0 0.0
      %604 = vmatprep.subr.mxu0 0.0
      %605 = vmatpush1.msra.mxu0 0.0
      %606 = vmatprep.subr.mxu0 0.0
      %607 = vmatpush1.msra.mxu0 0.0
      %608 = vmatprep.subr.mxu0 0.0
      %609 = vmatpush1.msra.mxu0 0.0
      %610 = vmatprep.subr.mxu0 0.0
      %611 = vmatpush1.msra.mxu0 0.0
      %612 = vmatprep.subr.mxu0 0.0
      %613 = vmatpush1.msra.mxu0 0.0
      %614 = vmatprep.subr.mxu0 0.0
      %615 = vmatpush1.msra.mxu0 0.0
      %616 = vmatprep.subr.mxu0 0.0
      %617 = vmatpush1.msra.mxu0 0.0
      %618 = vmatprep.mubr.f32.mxu0 0.0
      %v619 = vand.u32 %v238, 4294901760
      %v620 = vsub.f32 %v238, %v619
      %v621 = vand.u32 %v620, 4294901760
      %622 = vmatmul.mubr.f32.gmra.mrb[0].mxu0 %v621
      %v623 = vpop.f32.mrb[0].mxu0
      %v624 = vadd.f32 %v528, %v623
      %v625 = vpop.f32.mrb[0].mxu0
      %626 = vmatprep.mubr.f32.mxu0 0.0
      %v627 = vand.u32 %v241, 4294901760
      %v628 = vsub.f32 %v241, %v627
      %v629 = vand.u32 %v628, 4294901760
      %630 = vmatmul.mubr.f32.gmra.mrb[0].mxu0 %v629
      %v631 = vpop.f32.mrb[0].mxu0
      %v632 = vadd.f32 %v535, %v631
      %v633 = vpop.f32.mrb[0].mxu0
      %634 = vmatprep.mubr.f32.mxu0 0.0
      %v635 = vand.u32 %v244, 4294901760
      %v636 = vsub.f32 %v244, %v635
      %v637 = vand.u32 %v636, 4294901760
      %638 = vmatmul.mubr.f32.gmra.mrb[0].mxu0 %v637
      %v639 = vpop.f32.mrb[0].mxu0
      %v640 = vadd.f32 %v542, %v639
      %v641 = vpop.f32.mrb[0].mxu0
      %642 = vmatprep.mubr.f32.mxu0 0.0
      %v643 = vand.u32 %v247, 4294901760
      %v644 = vsub.f32 %v247, %v643
      %v645 = vand.u32 %v644, 4294901760
      %646 = vmatmul.mubr.f32.gmra.mrb[0].mxu0 %v645
      %v647 = vpop.f32.mrb[0].mxu0
      %v648 = vadd.f32 %v549, %v647
      %v649 = vpop.f32.mrb[0].mxu0
      %650 = vdwg.mxu0
      %651 = vmatprep.subr.mxu0 0.0
      %v652 = vand.u32 %v234, 4294901760
      %v653 = vsub.f32 %v234, %v652
      %v654 = vand.u32 %v653, 4294901760
      %655 = vmatpush1.msra.mxu0 %v654
      %656 = vmatprep.subr.mxu0 0.0
      %v657 = vand.u32 %v235, 4294901760
      %v658 = vsub.f32 %v235, %v657
      %v659 = vand.u32 %v658, 4294901760
      %660 = vmatpush1.msra.mxu0 %v659
      %661 = vmatprep.subr.mxu0 0.0
      %662 = vmatpush1.msra.mxu0 0.0
      %663 = vmatprep.subr.mxu0 0.0
      %664 = vmatpush1.msra.mxu0 0.0
      %665 = vmatprep.subr.mxu0 0.0
      %666 = vmatpush1.msra.mxu0 0.0
      %667 = vmatprep.subr.mxu0 0.0
      %668 = vmatpush1.msra.mxu0 0.0
      %669 = vmatprep.subr.mxu0 0.0
      %670 = vmatpush1.msra.mxu0 0.0
      %671 = vmatprep.subr.mxu0 0.0
      %672 = vmatpush1.msra.mxu0 0.0
      %673 = vmatprep.subr.mxu0 0.0
      %674 = vmatpush1.msra.mxu0 0.0
      %675 = vmatprep.subr.mxu0 0.0
      %676 = vmatpush1.msra.mxu0 0.0
      %677 = vmatprep.subr.mxu0 0.0
      %678 = vmatpush1.msra.mxu0 0.0
      %679 = vmatprep.subr.mxu0 0.0
      %680 = vmatpush1.msra.mxu0 0.0
      %681 = vmatprep.subr.mxu0 0.0
      %682 = vmatpush1.msra.mxu0 0.0
      %683 = vmatprep.subr.mxu0 0.0
      %684 = vmatpush1.msra.mxu0 0.0
      %685 = vmatprep.subr.mxu0 0.0
      %686 = vmatpush1.msra.mxu0 0.0
      %687 = vmatprep.subr.mxu0 0.0
      %688 = vmatpush1.msra.mxu0 0.0
      %689 = vmatprep.subr.mxu0 0.0
      %690 = vmatpush1.msra.mxu0 0.0
      %691 = vmatprep.subr.mxu0 0.0
      %692 = vmatpush1.msra.mxu0 0.0
      %693 = vmatprep.subr.mxu0 0.0
      %694 = vmatpush1.msra.mxu0 0.0
      %695 = vmatprep.subr.mxu0 0.0
      %696 = vmatpush1.msra.mxu0 0.0
      %697 = vmatprep.subr.mxu0 0.0
      %698 = vmatpush1.msra.mxu0 0.0
      %699 = vmatprep.subr.mxu0 0.0
      %700 = vmatpush1.msra.mxu0 0.0
      %701 = vmatprep.subr.mxu0 0.0
      %702 = vmatpush1.msra.mxu0 0.0
      %703 = vmatprep.subr.mxu0 0.0
      %704 = vmatpush1.msra.mxu0 0.0
      %705 = vmatprep.subr.mxu0 0.0
      %706 = vmatpush1.msra.mxu0 0.0
      %707 = vmatprep.subr.mxu0 0.0
      %708 = vmatpush1.msra.mxu0 0.0
      %709 = vmatprep.subr.mxu0 0.0
      %710 = vmatpush1.msra.mxu0 0.0
      %711 = vmatprep.subr.mxu0 0.0
      %712 = vmatpush1.msra.mxu0 0.0
      %713 = vmatprep.subr.mxu0 0.0
      %714 = vmatpush1.msra.mxu0 0.0
      %715 = vmatprep.subr.mxu0 0.0
      %716 = vmatpush1.msra.mxu0 0.0
      %717 = vmatprep.subr.mxu0 0.0
      %718 = vmatpush1.msra.mxu0 0.0
      %719 = vmatprep.subr.mxu0 0.0
      %720 = vmatpush1.msra.mxu0 0.0
      %721 = vmatprep.mubr.f32.mxu0 0.0
      %v722 = vand.u32 %v238, 4294901760
      %723 = vmatmul.mubr.f32.gmra.mrb[0].mxu0 %v722
      %v724 = vpop.f32.mrb[0].mxu0
      %v725 = vadd.f32 %v624, %v724
      %v726 = vpop.f32.mrb[0].mxu0
      %727 = vmatprep.mubr.f32.mxu0 0.0
      %v728 = vand.u32 %v241, 4294901760
      %729 = vmatmul.mubr.f32.gmra.mrb[0].mxu0 %v728
      %v730 = vpop.f32.mrb[0].mxu0
      %v731 = vadd.f32 %v632, %v730
      %v732 = vpop.f32.mrb[0].mxu0
      %733 = vmatprep.mubr.f32.mxu0 0.0
      %v734 = vand.u32 %v244, 4294901760
      %735 = vmatmul.mubr.f32.gmra.mrb[0].mxu0 %v734
      %v736 = vpop.f32.mrb[0].mxu0
      %v737 = vadd.f32 %v640, %v736
      %v738 = vpop.f32.mrb[0].mxu0
      %739 = vmatprep.mubr.f32.mxu0 0.0
      %v740 = vand.u32 %v247, 4294901760
      %741 = vmatmul.mubr.f32.gmra.mrb[0].mxu0 %v740
      %v742 = vpop.f32.mrb[0].mxu0
      %v743 = vadd.f32 %v648, %v742
      %v744 = vpop.f32.mrb[0].mxu0
      %745 = vdwg.mxu0
      %746 = vmatprep.subr.mxu0 0.0
      %v747 = vand.u32 %v234, 4294901760
      %748 = vmatpush1.msra.mxu0 %v747
      %749 = vmatprep.subr.mxu0 0.0
      %v750 = vand.u32 %v235, 4294901760
      %751 = vmatpush1.msra.mxu0 %v750
      %752 = vmatprep.subr.mxu0 0.0
      %753 = vmatpush1.msra.mxu0 0.0
      %754 = vmatprep.subr.mxu0 0.0
      %755 = vmatpush1.msra.mxu0 0.0
      %756 = vmatprep.subr.mxu0 0.0
      %757 = vmatpush1.msra.mxu0 0.0
      %758 = vmatprep.subr.mxu0 0.0
      %759 = vmatpush1.msra.mxu0 0.0
      %760 = vmatprep.subr.mxu0 0.0
      %761 = vmatpush1.msra.mxu0 0.0
      %762 = vmatprep.subr.mxu0 0.0
      %763 = vmatpush1.msra.mxu0 0.0
      %764 = vmatprep.subr.mxu0 0.0
      %765 = vmatpush1.msra.mxu0 0.0
      %766 = vmatprep.subr.mxu0 0.0
      %767 = vmatpush1.msra.mxu0 0.0
      %768 = vmatprep.subr.mxu0 0.0
      %769 = vmatpush1.msra.mxu0 0.0
      %770 = vmatprep.subr.mxu0 0.0
      %771 = vmatpush1.msra.mxu0 0.0
      %772 = vmatprep.subr.mxu0 0.0
      %773 = vmatpush1.msra.mxu0 0.0
      %774 = vmatprep.subr.mxu0 0.0
      %775 = vmatpush1.msra.mxu0 0.0
      %776 = vmatprep.subr.mxu0 0.0
      %777 = vmatpush1.msra.mxu0 0.0
      %778 = vmatprep.subr.mxu0 0.0
      %779 = vmatpush1.msra.mxu0 0.0
      %780 = vmatprep.subr.mxu0 0.0
      %781 = vmatpush1.msra.mxu0 0.0
      %782 = vmatprep.subr.mxu0 0.0
      %783 = vmatpush1.msra.mxu0 0.0
      %784 = vmatprep.subr.mxu0 0.0
      %785 = vmatpush1.msra.mxu0 0.0
      %786 = vmatprep.subr.mxu0 0.0
      %787 = vmatpush1.msra.mxu0 0.0
      %788 = vmatprep.subr.mxu0 0.0
      %789 = vmatpush1.msra.mxu0 0.0
      %790 = vmatprep.subr.mxu0 0.0
      %791 = vmatpush1.msra.mxu0 0.0
      %792 = vmatprep.subr.mxu0 0.0
      %793 = vmatpush1.msra.mxu0 0.0
      %794 = vmatprep.subr.mxu0 0.0
      %795 = vmatpush1.msra.mxu0 0.0
      %796 = vmatprep.subr.mxu0 0.0
      %797 = vmatpush1.msra.mxu0 0.0
      %798 = vmatprep.subr.mxu0 0.0
      %799 = vmatpush1.msra.mxu0 0.0
      %800 = vmatprep.subr.mxu0 0.0
      %801 = vmatpush1.msra.mxu0 0.0
      %802 = vmatprep.subr.mxu0 0.0
      %803 = vmatpush1.msra.mxu0 0.0
      %804 = vmatprep.subr.mxu0 0.0
      %805 = vmatpush1.msra.mxu0 0.0
      %806 = vmatprep.subr.mxu0 0.0
      %807 = vmatpush1.msra.mxu0 0.0
      %808 = vmatprep.subr.mxu0 0.0
      %809 = vmatpush1.msra.mxu0 0.0
      %810 = vmatprep.subr.mxu0 0.0
      %811 = vmatpush1.msra.mxu0 0.0
      %812 = vmatprep.mubr.f32.mxu0 0.0
      %v813 = vand.u32 %v238, 4294901760
      %814 = vmatmul.mubr.f32.gmra.mrb[0].mxu0 %v813
      %v815 = vpop.f32.mrb[0].mxu0
      %v816 = vadd.f32 %v725, %v815
      %v817 = vpop.f32.mrb[0].mxu0
      %818 = vmatprep.mubr.f32.mxu0 0.0
      %v819 = vand.u32 %v241, 4294901760
      %820 = vmatmul.mubr.f32.gmra.mrb[0].mxu0 %v819
      %v821 = vpop.f32.mrb[0].mxu0
      %v822 = vadd.f32 %v731, %v821
      %v823 = vpop.f32.mrb[0].mxu0
      %824 = vmatprep.mubr.f32.mxu0 0.0
      %v825 = vand.u32 %v244, 4294901760
      %826 = vmatmul.mubr.f32.gmra.mrb[0].mxu0 %v825
      %v827 = vpop.f32.mrb[0].mxu0
      %v828 = vadd.f32 %v737, %v827
      %v829 = vpop.f32.mrb[0].mxu0
      %830 = vmatprep.mubr.f32.mxu0 0.0
      %v831 = vand.u32 %v247, 4294901760
      %832 = vmatmul.mubr.f32.gmra.mrb[0].mxu0 %v831
      %v833 = vpop.f32.mrb[0].mxu0
      %v834 = vadd.f32 %v743, %v833
      %v835 = vpop.f32.mrb[0].mxu0
      %836 = vdwg.mxu0
      %v837 = vld [vmem:[%s2] sm:$0xff]
      %v838 = vld [vmem:[%s2 + $0x8] sm:$0xff]
      %839 = vmatprep.subr.mxu0 0.0
      %v840 = vand.u32 %v837, 4294901760
      %841 = vmatpush1.msra.mxu0 %v840
      %842 = vmatprep.subr.mxu0 0.0
      %v843 = vand.u32 %v838, 4294901760
      %844 = vmatpush1.msra.mxu0 %v843
      %845 = vmatprep.subr.mxu0 0.0
      %846 = vmatpush1.msra.mxu0 0.0
      %847 = vmatprep.subr.mxu0 0.0
      %848 = vmatpush1.msra.mxu0 0.0
      %849 = vmatprep.subr.mxu0 0.0
      %850 = vmatpush1.msra.mxu0 0.0
      %851 = vmatprep.subr.mxu0 0.0
      %852 = vmatpush1.msra.mxu0 0.0
      %853 = vmatprep.subr.mxu0 0.0
      %854 = vmatpush1.msra.mxu0 0.0
      %855 = vmatprep.subr.mxu0 0.0
      %856 = vmatpush1.msra.mxu0 0.0
      %857 = vmatprep.subr.mxu0 0.0
      %858 = vmatpush1.msra.mxu0 0.0
      %859 = vmatprep.subr.mxu0 0.0
      %860 = vmatpush1.msra.mxu0 0.0
      %861 = vmatprep.subr.mxu0 0.0
      %862 = vmatpush1.msra.mxu0 0.0
      %863 = vmatprep.subr.mxu0 0.0
      %864 = vmatpush1.msra.mxu0 0.0
      %865 = vmatprep.subr.mxu0 0.0
      %866 = vmatpush1.msra.mxu0 0.0
      %867 = vmatprep.subr.mxu0 0.0
      %868 = vmatpush1.msra.mxu0 0.0
      %869 = vmatprep.subr.mxu0 0.0
      %870 = vmatpush1.msra.mxu0 0.0
      %871 = vmatprep.subr.mxu0 0.0
      %872 = vmatpush1.msra.mxu0 0.0
      %873 = vmatprep.subr.mxu0 0.0
      %874 = vmatpush1.msra.mxu0 0.0
      %875 = vmatprep.subr.mxu0 0.0
      %876 = vmatpush1.msra.mxu0 0.0
      %877 = vmatprep.subr.mxu0 0.0
      %878 = vmatpush1.msra.mxu0 0.0
      %879 = vmatprep.subr.mxu0 0.0
      %880 = vmatpush1.msra.mxu0 0.0
      %881 = vmatprep.subr.mxu0 0.0
      %882 = vmatpush1.msra.mxu0 0.0
      %883 = vmatprep.subr.mxu0 0.0
      %884 = vmatpush1.msra.mxu0 0.0
      %885 = vmatprep.subr.mxu0 0.0
      %886 = vmatpush1.msra.mxu0 0.0
      %887 = vmatprep.subr.mxu0 0.0
      %888 = vmatpush1.msra.mxu0 0.0
      %889 = vmatprep.subr.mxu0 0.0
      %890 = vmatpush1.msra.mxu0 0.0
      %891 = vmatprep.subr.mxu0 0.0
      %892 = vmatpush1.msra.mxu0 0.0
      %893 = vmatprep.subr.mxu0 0.0
      %894 = vmatpush1.msra.mxu0 0.0
      %895 = vmatprep.subr.mxu0 0.0
      %896 = vmatpush1.msra.mxu0 0.0
      %897 = vmatprep.subr.mxu0 0.0
      %898 = vmatpush1.msra.mxu0 0.0
      %899 = vmatprep.subr.mxu0 0.0
      %900 = vmatpush1.msra.mxu0 0.0
      %901 = vmatprep.subr.mxu0 0.0
      %902 = vmatpush1.msra.mxu0 0.0
      %903 = vmatprep.subr.mxu0 0.0
      %904 = vmatpush1.msra.mxu0 0.0
      %905 = vmatprep.mubr.f32.mxu0 0.0
      %v906 = vand.u32 %v238, 4294901760
      %v907 = vsub.f32 %v238, %v906
      %v908 = vand.u32 %v907, 4294901760
      %v909 = vsub.f32 %v907, %v908
      %v910 = vand.u32 %v909, 4294901760
      %911 = vmatmul.mubr.f32.gmra.mrb[0].mxu0 %v910
      %v912 = vpop.f32.mrb[0].mxu0
      %v913 = vadd.f32 0.0, %v912
      %v914 = vpop.f32.mrb[0].mxu0
      %915 = vmatprep.mubr.f32.mxu0 0.0
      %v916 = vand.u32 %v241, 4294901760
      %v917 = vsub.f32 %v241, %v916
      %v918 = vand.u32 %v917, 4294901760
      %v919 = vsub.f32 %v917, %v918
      %v920 = vand.u32 %v919, 4294901760
      %921 = vmatmul.mubr.f32.gmra.mrb[0].mxu0 %v920
      %v922 = vpop.f32.mrb[0].mxu0
      %v923 = vadd.f32 0.0, %v922
      %v924 = vpop.f32.mrb[0].mxu0
      %925 = vmatprep.mubr.f32.mxu0 0.0
      %v926 = vand.u32 %v244, 4294901760
      %v927 = vsub.f32 %v244, %v926
      %v928 = vand.u32 %v927, 4294901760
      %v929 = vsub.f32 %v927, %v928
      %v930 = vand.u32 %v929, 4294901760
      %931 = vmatmul.mubr.f32.gmra.mrb[0].mxu0 %v930
      %v932 = vpop.f32.mrb[0].mxu0
      %v933 = vadd.f32 0.0, %v932
      %v934 = vpop.f32.mrb[0].mxu0
      %935 = vmatprep.mubr.f32.mxu0 0.0
      %v936 = vand.u32 %v247, 4294901760
      %v937 = vsub.f32 %v247, %v936
      %v938 = vand.u32 %v937, 4294901760
      %v939 = vsub.f32 %v937, %v938
      %v940 = vand.u32 %v939, 4294901760
      %941 = vmatmul.mubr.f32.gmra.mrb[0].mxu0 %v940
      %v942 = vpop.f32.mrb[0].mxu0
      %v943 = vadd.f32 0.0, %v942
      %v944 = vpop.f32.mrb[0].mxu0
      %945 = vdwg.mxu0
      %946 = vmatprep.subr.mxu0 0.0
      %v947 = vand.u32 %v837, 4294901760
      %v948 = vsub.f32 %v837, %v947
      %v949 = vand.u32 %v948, 4294901760
      %v950 = vsub.f32 %v948, %v949
      %v951 = vand.u32 %v950, 4294901760
      %952 = vmatpush1.msra.mxu0 %v951
      %953 = vmatprep.subr.mxu0 0.0
      %v954 = vand.u32 %v838, 4294901760
      %v955 = vsub.f32 %v838, %v954
      %v956 = vand.u32 %v955, 4294901760
      %v957 = vsub.f32 %v955, %v956
      %v958 = vand.u32 %v957, 4294901760
      %959 = vmatpush1.msra.mxu0 %v958
      %960 = vmatprep.subr.mxu0 0.0
      %961 = vmatpush1.msra.mxu0 0.0
      %962 = vmatprep.subr.mxu0 0.0
      %963 = vmatpush1.msra.mxu0 0.0
      %964 = vmatprep.subr.mxu0 0.0
      %965 = vmatpush1.msra.mxu0 0.0
      %966 = vmatprep.subr.mxu0 0.0
      %967 = vmatpush1.msra.mxu0 0.0
      %968 = vmatprep.subr.mxu0 0.0
      %969 = vmatpush1.msra.mxu0 0.0
      %970 = vmatprep.subr.mxu0 0.0
      %971 = vmatpush1.msra.mxu0 0.0
      %972 = vmatprep.subr.mxu0 0.0
      %973 = vmatpush1.msra.mxu0 0.0
      %974 = vmatprep.subr.mxu0 0.0
      %975 = vmatpush1.msra.mxu0 0.0
      %976 = vmatprep.subr.mxu0 0.0
      %977 = vmatpush1.msra.mxu0 0.0
      %978 = vmatprep.subr.mxu0 0.0
      %979 = vmatpush1.msra.mxu0 0.0
      %980 = vmatprep.subr.mxu0 0.0
      %981 = vmatpush1.msra.mxu0 0.0
      %982 = vmatprep.subr.mxu0 0.0
      %983 = vmatpush1.msra.mxu0 0.0
      %984 = vmatprep.subr.mxu0 0.0
      %985 = vmatpush1.msra.mxu0 0.0
      %986 = vmatprep.subr.mxu0 0.0
      %987 = vmatpush1.msra.mxu0 0.0
      %988 = vmatprep.subr.mxu0 0.0
      %989 = vmatpush1.msra.mxu0 0.0
      %990 = vmatprep.subr.mxu0 0.0
      %991 = vmatpush1.msra.mxu0 0.0
      %992 = vmatprep.subr.mxu0 0.0
      %993 = vmatpush1.msra.mxu0 0.0
      %994 = vmatprep.subr.mxu0 0.0
      %995 = vmatpush1.msra.mxu0 0.0
      %996 = vmatprep.subr.mxu0 0.0
      %997 = vmatpush1.msra.mxu0 0.0
      %998 = vmatprep.subr.mxu0 0.0
      %999 = vmatpush1.msra.mxu0 0.0
      %1000 = vmatprep.subr.mxu0 0.0
      %1001 = vmatpush1.msra.mxu0 0.0
      %1002 = vmatprep.subr.mxu0 0.0
      %1003 = vmatpush1.msra.mxu0 0.0
      %1004 = vmatprep.subr.mxu0 0.0
      %1005 = vmatpush1.msra.mxu0 0.0
      %1006 = vmatprep.subr.mxu0 0.0
      %1007 = vmatpush1.msra.mxu0 0.0
      %1008 = vmatprep.subr.mxu0 0.0
      %1009 = vmatpush1.msra.mxu0 0.0
      %1010 = vmatprep.subr.mxu0 0.0
      %1011 = vmatpush1.msra.mxu0 0.0
      %1012 = vmatprep.subr.mxu0 0.0
      %1013 = vmatpush1.msra.mxu0 0.0
      %1014 = vmatprep.subr.mxu0 0.0
      %1015 = vmatpush1.msra.mxu0 0.0
      %1016 = vmatprep.subr.mxu0 0.0
      %1017 = vmatpush1.msra.mxu0 0.0
      %1018 = vmatprep.subr.mxu0 0.0
      %1019 = vmatpush1.msra.mxu0 0.0
      %1020 = vmatprep.mubr.f32.mxu0 0.0
      %v1021 = vand.u32 %v238, 4294901760
      %1022 = vmatmul.mubr.f32.gmra.mrb[0].mxu0 %v1021
      %v1023 = vpop.f32.mrb[0].mxu0
      %v1024 = vadd.f32 %v913, %v1023
      %v1025 = vpop.f32.mrb[0].mxu0
      %1026 = vmatprep.mubr.f32.mxu0 0.0
      %v1027 = vand.u32 %v241, 4294901760
      %1028 = vmatmul.mubr.f32.gmra.mrb[0].mxu0 %v1027
      %v1029 = vpop.f32.mrb[0].mxu0
      %v1030 = vadd.f32 %v923, %v1029
      %v1031 = vpop.f32.mrb[0].mxu0
      %1032 = vmatprep.mubr.f32.mxu0 0.0
      %v1033 = vand.u32 %v244, 4294901760
      %1034 = vmatmul.mubr.f32.gmra.mrb[0].mxu0 %v1033
      %v1035 = vpop.f32.mrb[0].mxu0
      %v1036 = vadd.f32 %v933, %v1035
      %v1037 = vpop.f32.mrb[0].mxu0
      %1038 = vmatprep.mubr.f32.mxu0 0.0
      %v1039 = vand.u32 %v247, 4294901760
      %1040 = vmatmul.mubr.f32.gmra.mrb[0].mxu0 %v1039
      %v1041 = vpop.f32.mrb[0].mxu0
      %v1042 = vadd.f32 %v943, %v1041
      %v1043 = vpop.f32.mrb[0].mxu0
      %1044 = vdwg.mxu0
      %1045 = vmatprep.subr.mxu0 0.0
      %v1046 = vand.u32 %v837, 4294901760
      %v1047 = vsub.f32 %v837, %v1046
      %1048 = vmatpush1.msra.mxu0 %v1047
      %1049 = vmatprep.subr.mxu0 0.0
      %v1050 = vand.u32 %v838, 4294901760
      %v1051 = vsub.f32 %v838, %v1050
      %1052 = vmatpush1.msra.mxu0 %v1051
      %1053 = vmatprep.subr.mxu0 0.0
      %1054 = vmatpush1.msra.mxu0 0.0
      %1055 = vmatprep.subr.mxu0 0.0
      %1056 = vmatpush1.msra.mxu0 0.0
      %1057 = vmatprep.subr.mxu0 0.0
      %1058 = vmatpush1.msra.mxu0 0.0
      %1059 = vmatprep.subr.mxu0 0.0
      %1060 = vmatpush1.msra.mxu0 0.0
      %1061 = vmatprep.subr.mxu0 0.0
      %1062 = vmatpush1.msra.mxu0 0.0
      %1063 = vmatprep.subr.mxu0 0.0
      %1064 = vmatpush1.msra.mxu0 0.0
      %1065 = vmatprep.subr.mxu0 0.0
      %1066 = vmatpush1.msra.mxu0 0.0
      %1067 = vmatprep.subr.mxu0 0.0
      %1068 = vmatpush1.msra.mxu0 0.0
      %1069 = vmatprep.subr.mxu0 0.0
      %1070 = vmatpush1.msra.mxu0 0.0
      %1071 = vmatprep.subr.mxu0 0.0
      %1072 = vmatpush1.msra.mxu0 0.0
      %1073 = vmatprep.subr.mxu0 0.0
      %1074 = vmatpush1.msra.mxu0 0.0
      %1075 = vmatprep.subr.mxu0 0.0
      %1076 = vmatpush1.msra.mxu0 0.0
      %1077 = vmatprep.subr.mxu0 0.0
      %1078 = vmatpush1.msra.mxu0 0.0
      %1079 = vmatprep.subr.mxu0 0.0
      %1080 = vmatpush1.msra.mxu0 0.0
      %1081 = vmatprep.subr.mxu0 0.0
      %1082 = vmatpush1.msra.mxu0 0.0
      %1083 = vmatprep.subr.mxu0 0.0
      %1084 = vmatpush1.msra.mxu0 0.0
      %1085 = vmatprep.subr.mxu0 0.0
      %1086 = vmatpush1.msra.mxu0 0.0
      %1087 = vmatprep.subr.mxu0 0.0
      %1088 = vmatpush1.msra.mxu0 0.0
      %1089 = vmatprep.subr.mxu0 0.0
      %1090 = vmatpush1.msra.mxu0 0.0
      %1091 = vmatprep.subr.mxu0 0.0
      %1092 = vmatpush1.msra.mxu0 0.0
      %1093 = vmatprep.subr.mxu0 0.0
      %1094 = vmatpush1.msra.mxu0 0.0
      %1095 = vmatprep.subr.mxu0 0.0
      %1096 = vmatpush1.msra.mxu0 0.0
      %1097 = vmatprep.subr.mxu0 0.0
      %1098 = vmatpush1.msra.mxu0 0.0
      %1099 = vmatprep.subr.mxu0 0.0
      %1100 = vmatpush1.msra.mxu0 0.0
      %1101 = vmatprep.subr.mxu0 0.0
      %1102 = vmatpush1.msra.mxu0 0.0
      %1103 = vmatprep.subr.mxu0 0.0
      %1104 = vmatpush1.msra.mxu0 0.0
      %1105 = vmatprep.subr.mxu0 0.0
      %1106 = vmatpush1.msra.mxu0 0.0
      %1107 = vmatprep.subr.mxu0 0.0
      %1108 = vmatpush1.msra.mxu0 0.0
      %1109 = vmatprep.subr.mxu0 0.0
      %1110 = vmatpush1.msra.mxu0 0.0
      %1111 = vmatprep.subr.mxu0 0.0
      %1112 = vmatpush1.msra.mxu0 0.0
      %1113 = vmatprep.mubr.f32.mxu0 0.0
      %v1114 = vand.u32 %v238, 4294901760
      %v1115 = vsub.f32 %v238, %v1114
      %1116 = vmatmul.mubr.f32.gmra.mrb[0].mxu0 %v1115
      %v1117 = vpop.f32.mrb[0].mxu0
      %v1118 = vadd.f32 %v1024, %v1117
      %v1119 = vpop.f32.mrb[0].mxu0
      %1120 = vmatprep.mubr.f32.mxu0 0.0
      %v1121 = vand.u32 %v241, 4294901760
      %v1122 = vsub.f32 %v241, %v1121
      %1123 = vmatmul.mubr.f32.gmra.mrb[0].mxu0 %v1122
      %v1124 = vpop.f32.mrb[0].mxu0
      %v1125 = vadd.f32 %v1030, %v1124
      %v1126 = vpop.f32.mrb[0].mxu0
      %1127 = vmatprep.mubr.f32.mxu0 0.0
      %v1128 = vand.u32 %v244, 4294901760
      %v1129 = vsub.f32 %v244, %v1128
      %1130 = vmatmul.mubr.f32.gmra.mrb[0].mxu0 %v1129
      %v1131 = vpop.f32.mrb[0].mxu0
      %v1132 = vadd.f32 %v1036, %v1131
      %v1133 = vpop.f32.mrb[0].mxu0
      %1134 = vmatprep.mubr.f32.mxu0 0.0
      %v1135 = vand.u32 %v247, 4294901760
      %v1136 = vsub.f32 %v247, %v1135
      %1137 = vmatmul.mubr.f32.gmra.mrb[0].mxu0 %v1136
      %v1138 = vpop.f32.mrb[0].mxu0
      %v1139 = vadd.f32 %v1042, %v1138
      %v1140 = vpop.f32.mrb[0].mxu0
      %1141 = vdwg.mxu0
      %1142 = vmatprep.subr.mxu0 0.0
      %v1143 = vand.u32 %v837, 4294901760
      %1144 = vmatpush1.msra.mxu0 %v1143
      %1145 = vmatprep.subr.mxu0 0.0
      %v1146 = vand.u32 %v838, 4294901760
      %1147 = vmatpush1.msra.mxu0 %v1146
      %1148 = vmatprep.subr.mxu0 0.0
      %1149 = vmatpush1.msra.mxu0 0.0
      %1150 = vmatprep.subr.mxu0 0.0
      %1151 = vmatpush1.msra.mxu0 0.0
      %1152 = vmatprep.subr.mxu0 0.0
      %1153 = vmatpush1.msra.mxu0 0.0
      %1154 = vmatprep.subr.mxu0 0.0
      %1155 = vmatpush1.msra.mxu0 0.0
      %1156 = vmatprep.subr.mxu0 0.0
      %1157 = vmatpush1.msra.mxu0 0.0
      %1158 = vmatprep.subr.mxu0 0.0
      %1159 = vmatpush1.msra.mxu0 0.0
      %1160 = vmatprep.subr.mxu0 0.0
      %1161 = vmatpush1.msra.mxu0 0.0
      %1162 = vmatprep.subr.mxu0 0.0
      %1163 = vmatpush1.msra.mxu0 0.0
      %1164 = vmatprep.subr.mxu0 0.0
      %1165 = vmatpush1.msra.mxu0 0.0
      %1166 = vmatprep.subr.mxu0 0.0
      %1167 = vmatpush1.msra.mxu0 0.0
      %1168 = vmatprep.subr.mxu0 0.0
      %1169 = vmatpush1.msra.mxu0 0.0
      %1170 = vmatprep.subr.mxu0 0.0
      %1171 = vmatpush1.msra.mxu0 0.0
      %1172 = vmatprep.subr.mxu0 0.0
      %1173 = vmatpush1.msra.mxu0 0.0
      %1174 = vmatprep.subr.mxu0 0.0
      %1175 = vmatpush1.msra.mxu0 0.0
      %1176 = vmatprep.subr.mxu0 0.0
      %1177 = vmatpush1.msra.mxu0 0.0
      %1178 = vmatprep.subr.mxu0 0.0
      %1179 = vmatpush1.msra.mxu0 0.0
      %1180 = vmatprep.subr.mxu0 0.0
      %1181 = vmatpush1.msra.mxu0 0.0
      %1182 = vmatprep.subr.mxu0 0.0
      %1183 = vmatpush1.msra.mxu0 0.0
      %1184 = vmatprep.subr.mxu0 0.0
      %1185 = vmatpush1.msra.mxu0 0.0
      %1186 = vmatprep.subr.mxu0 0.0
      %1187 = vmatpush1.msra.mxu0 0.0
      %1188 = vmatprep.subr.mxu0 0.0
      %1189 = vmatpush1.msra.mxu0 0.0
      %1190 = vmatprep.subr.mxu0 0.0
      %1191 = vmatpush1.msra.mxu0 0.0
      %1192 = vmatprep.subr.mxu0 0.0
      %1193 = vmatpush1.msra.mxu0 0.0
      %1194 = vmatprep.subr.mxu0 0.0
      %1195 = vmatpush1.msra.mxu0 0.0
      %1196 = vmatprep.subr.mxu0 0.0
      %1197 = vmatpush1.msra.mxu0 0.0
      %1198 = vmatprep.subr.mxu0 0.0
      %1199 = vmatpush1.msra.mxu0 0.0
      %1200 = vmatprep.subr.mxu0 0.0
      %1201 = vmatpush1.msra.mxu0 0.0
      %1202 = vmatprep.subr.mxu0 0.0
      %1203 = vmatpush1.msra.mxu0 0.0
      %1204 = vmatprep.subr.mxu0 0.0
      %1205 = vmatpush1.msra.mxu0 0.0
      %1206 = vmatprep.subr.mxu0 0.0
      %1207 = vmatpush1.msra.mxu0 0.0
      %1208 = vmatprep.mubr.f32.mxu0 0.0
      %v1209 = vand.u32 %v238, 4294901760
      %v1210 = vsub.f32 %v238, %v1209
      %v1211 = vand.u32 %v1210, 4294901760
      %1212 = vmatmul.mubr.f32.gmra.mrb[0].mxu0 %v1211
      %v1213 = vpop.f32.mrb[0].mxu0
      %v1214 = vadd.f32 %v1118, %v1213
      %v1215 = vpop.f32.mrb[0].mxu0
      %1216 = vmatprep.mubr.f32.mxu0 0.0
      %v1217 = vand.u32 %v241, 4294901760
      %v1218 = vsub.f32 %v241, %v1217
      %v1219 = vand.u32 %v1218, 4294901760
      %1220 = vmatmul.mubr.f32.gmra.mrb[0].mxu0 %v1219
      %v1221 = vpop.f32.mrb[0].mxu0
      %v1222 = vadd.f32 %v1125, %v1221
      %v1223 = vpop.f32.mrb[0].mxu0
      %1224 = vmatprep.mubr.f32.mxu0 0.0
      %v1225 = vand.u32 %v244, 4294901760
      %v1226 = vsub.f32 %v244, %v1225
      %v1227 = vand.u32 %v1226, 4294901760
      %1228 = vmatmul.mubr.f32.gmra.mrb[0].mxu0 %v1227
      %v1229 = vpop.f32.mrb[0].mxu0
      %v1230 = vadd.f32 %v1132, %v1229
      %v1231 = vpop.f32.mrb[0].mxu0
      %1232 = vmatprep.mubr.f32.mxu0 0.0
      %v1233 = vand.u32 %v247, 4294901760
      %v1234 = vsub.f32 %v247, %v1233
      %v1235 = vand.u32 %v1234, 4294901760
      %1236 = vmatmul.mubr.f32.gmra.mrb[0].mxu0 %v1235
      %v1237 = vpop.f32.mrb[0].mxu0
      %v1238 = vadd.f32 %v1139, %v1237
      %v1239 = vpop.f32.mrb[0].mxu0
      %1240 = vdwg.mxu0
      %1241 = vmatprep.subr.mxu0 0.0
      %v1242 = vand.u32 %v837, 4294901760
      %v1243 = vsub.f32 %v837, %v1242
      %v1244 = vand.u32 %v1243, 4294901760
      %1245 = vmatpush1.msra.mxu0 %v1244
      %1246 = vmatprep.subr.mxu0 0.0
      %v1247 = vand.u32 %v838, 4294901760
      %v1248 = vsub.f32 %v838, %v1247
      %v1249 = vand.u32 %v1248, 4294901760
      %1250 = vmatpush1.msra.mxu0 %v1249
      %1251 = vmatprep.subr.mxu0 0.0
      %1252 = vmatpush1.msra.mxu0 0.0
      %1253 = vmatprep.subr.mxu0 0.0
      %1254 = vmatpush1.msra.mxu0 0.0
      %1255 = vmatprep.subr.mxu0 0.0
      %1256 = vmatpush1.msra.mxu0 0.0
      %1257 = vmatprep.subr.mxu0 0.0
      %1258 = vmatpush1.msra.mxu0 0.0
      %1259 = vmatprep.subr.mxu0 0.0
      %1260 = vmatpush1.msra.mxu0 0.0
      %1261 = vmatprep.subr.mxu0 0.0
      %1262 = vmatpush1.msra.mxu0 0.0
      %1263 = vmatprep.subr.mxu0 0.0
      %1264 = vmatpush1.msra.mxu0 0.0
      %1265 = vmatprep.subr.mxu0 0.0
      %1266 = vmatpush1.msra.mxu0 0.0
      %1267 = vmatprep.subr.mxu0 0.0
      %1268 = vmatpush1.msra.mxu0 0.0
      %1269 = vmatprep.subr.mxu0 0.0
      %1270 = vmatpush1.msra.mxu0 0.0
      %1271 = vmatprep.subr.mxu0 0.0
      %1272 = vmatpush1.msra.mxu0 0.0
      %1273 = vmatprep.subr.mxu0 0.0
      %1274 = vmatpush1.msra.mxu0 0.0
      %1275 = vmatprep.subr.mxu0 0.0
      %1276 = vmatpush1.msra.mxu0 0.0
      %1277 = vmatprep.subr.mxu0 0.0
      %1278 = vmatpush1.msra.mxu0 0.0
      %1279 = vmatprep.subr.mxu0 0.0
      %1280 = vmatpush1.msra.mxu0 0.0
      %1281 = vmatprep.subr.mxu0 0.0
      %1282 = vmatpush1.msra.mxu0 0.0
      %1283 = vmatprep.subr.mxu0 0.0
      %1284 = vmatpush1.msra.mxu0 0.0
      %1285 = vmatprep.subr.mxu0 0.0
      %1286 = vmatpush1.msra.mxu0 0.0
      %1287 = vmatprep.subr.mxu0 0.0
      %1288 = vmatpush1.msra.mxu0 0.0
      %1289 = vmatprep.subr.mxu0 0.0
      %1290 = vmatpush1.msra.mxu0 0.0
      %1291 = vmatprep.subr.mxu0 0.0
      %1292 = vmatpush1.msra.mxu0 0.0
      %1293 = vmatprep.subr.mxu0 0.0
      %1294 = vmatpush1.msra.mxu0 0.0
      %1295 = vmatprep.subr.mxu0 0.0
      %1296 = vmatpush1.msra.mxu0 0.0
      %1297 = vmatprep.subr.mxu0 0.0
      %1298 = vmatpush1.msra.mxu0 0.0
      %1299 = vmatprep.subr.mxu0 0.0
      %1300 = vmatpush1.msra.mxu0 0.0
      %1301 = vmatprep.subr.mxu0 0.0
      %1302 = vmatpush1.msra.mxu0 0.0
      %1303 = vmatprep.subr.mxu0 0.0
      %1304 = vmatpush1.msra.mxu0 0.0
      %1305 = vmatprep.subr.mxu0 0.0
      %1306 = vmatpush1.msra.mxu0 0.0
      %1307 = vmatprep.subr.mxu0 0.0
      %1308 = vmatpush1.msra.mxu0 0.0
      %1309 = vmatprep.subr.mxu0 0.0
      %1310 = vmatpush1.msra.mxu0 0.0
      %1311 = vmatprep.mubr.f32.mxu0 0.0
      %v1312 = vand.u32 %v238, 4294901760
      %1313 = vmatmul.mubr.f32.gmra.mrb[0].mxu0 %v1312
      %v1314 = vpop.f32.mrb[0].mxu0
      %v1315 = vadd.f32 %v1214, %v1314
      %v1316 = vpop.f32.mrb[0].mxu0
      %1317 = vmatprep.mubr.f32.mxu0 0.0
      %v1318 = vand.u32 %v241, 4294901760
      %1319 = vmatmul.mubr.f32.gmra.mrb[0].mxu0 %v1318
      %v1320 = vpop.f32.mrb[0].mxu0
      %v1321 = vadd.f32 %v1222, %v1320
      %v1322 = vpop.f32.mrb[0].mxu0
      %1323 = vmatprep.mubr.f32.mxu0 0.0
      %v1324 = vand.u32 %v244, 4294901760
      %1325 = vmatmul.mubr.f32.gmra.mrb[0].mxu0 %v1324
      %v1326 = vpop.f32.mrb[0].mxu0
      %v1327 = vadd.f32 %v1230, %v1326
      %v1328 = vpop.f32.mrb[0].mxu0
      %1329 = vmatprep.mubr.f32.mxu0 0.0
      %v1330 = vand.u32 %v247, 4294901760
      %1331 = vmatmul.mubr.f32.gmra.mrb[0].mxu0 %v1330
      %v1332 = vpop.f32.mrb[0].mxu0
      %v1333 = vadd.f32 %v1238, %v1332
      %v1334 = vpop.f32.mrb[0].mxu0
      %1335 = vdwg.mxu0
      %1336 = vmatprep.subr.mxu0 0.0
      %v1337 = vand.u32 %v837, 4294901760
      %1338 = vmatpush1.msra.mxu0 %v1337
      %1339 = vmatprep.subr.mxu0 0.0
      %v1340 = vand.u32 %v838, 4294901760
      %1341 = vmatpush1.msra.mxu0 %v1340
      %1342 = vmatprep.subr.mxu0 0.0
      %1343 = vmatpush1.msra.mxu0 0.0
      %1344 = vmatprep.subr.mxu0 0.0
      %1345 = vmatpush1.msra.mxu0 0.0
      %1346 = vmatprep.subr.mxu0 0.0
      %1347 = vmatpush1.msra.mxu0 0.0
      %1348 = vmatprep.subr.mxu0 0.0
      %1349 = vmatpush1.msra.mxu0 0.0
      %1350 = vmatprep.subr.mxu0 0.0
      %1351 = vmatpush1.msra.mxu0 0.0
      %1352 = vmatprep.subr.mxu0 0.0
      %1353 = vmatpush1.msra.mxu0 0.0
      %1354 = vmatprep.subr.mxu0 0.0
      %1355 = vmatpush1.msra.mxu0 0.0
      %1356 = vmatprep.subr.mxu0 0.0
      %1357 = vmatpush1.msra.mxu0 0.0
      %1358 = vmatprep.subr.mxu0 0.0
      %1359 = vmatpush1.msra.mxu0 0.0
      %1360 = vmatprep.subr.mxu0 0.0
      %1361 = vmatpush1.msra.mxu0 0.0
      %1362 = vmatprep.subr.mxu0 0.0
      %1363 = vmatpush1.msra.mxu0 0.0
      %1364 = vmatprep.subr.mxu0 0.0
      %1365 = vmatpush1.msra.mxu0 0.0
      %1366 = vmatprep.subr.mxu0 0.0
      %1367 = vmatpush1.msra.mxu0 0.0
      %1368 = vmatprep.subr.mxu0 0.0
      %1369 = vmatpush1.msra.mxu0 0.0
      %1370 = vmatprep.subr.mxu0 0.0
      %1371 = vmatpush1.msra.mxu0 0.0
      %1372 = vmatprep.subr.mxu0 0.0
      %1373 = vmatpush1.msra.mxu0 0.0
      %1374 = vmatprep.subr.mxu0 0.0
      %1375 = vmatpush1.msra.mxu0 0.0
      %1376 = vmatprep.subr.mxu0 0.0
      %1377 = vmatpush1.msra.mxu0 0.0
      %1378 = vmatprep.subr.mxu0 0.0
      %1379 = vmatpush1.msra.mxu0 0.0
      %1380 = vmatprep.subr.mxu0 0.0
      %1381 = vmatpush1.msra.mxu0 0.0
      %1382 = vmatprep.subr.mxu0 0.0
      %1383 = vmatpush1.msra.mxu0 0.0
      %1384 = vmatprep.subr.mxu0 0.0
      %1385 = vmatpush1.msra.mxu0 0.0
      %1386 = vmatprep.subr.mxu0 0.0
      %1387 = vmatpush1.msra.mxu0 0.0
      %1388 = vmatprep.subr.mxu0 0.0
      %1389 = vmatpush1.msra.mxu0 0.0
      %1390 = vmatprep.subr.mxu0 0.0
      %1391 = vmatpush1.msra.mxu0 0.0
      %1392 = vmatprep.subr.mxu0 0.0
      %1393 = vmatpush1.msra.mxu0 0.0
      %1394 = vmatprep.subr.mxu0 0.0
      %1395 = vmatpush1.msra.mxu0 0.0
      %1396 = vmatprep.subr.mxu0 0.0
      %1397 = vmatpush1.msra.mxu0 0.0
      %1398 = vmatprep.subr.mxu0 0.0
      %1399 = vmatpush1.msra.mxu0 0.0
      %1400 = vmatprep.subr.mxu0 0.0
      %1401 = vmatpush1.msra.mxu0 0.0
      %1402 = vmatprep.mubr.f32.mxu0 0.0
      %v1403 = vand.u32 %v238, 4294901760
      %1404 = vmatmul.mubr.f32.gmra.mrb[0].mxu0 %v1403
      %v1405 = vpop.f32.mrb[0].mxu0
      %v1406 = vadd.f32 %v1315, %v1405
      %v1407 = vpop.f32.mrb[0].mxu0
      %1408 = vmatprep.mubr.f32.mxu0 0.0
      %v1409 = vand.u32 %v241, 4294901760
      %1410 = vmatmul.mubr.f32.gmra.mrb[0].mxu0 %v1409
      %v1411 = vpop.f32.mrb[0].mxu0
      %v1412 = vadd.f32 %v1321, %v1411
      %v1413 = vpop.f32.mrb[0].mxu0
      %1414 = vmatprep.mubr.f32.mxu0 0.0
      %v1415 = vand.u32 %v244, 4294901760
      %1416 = vmatmul.mubr.f32.gmra.mrb[0].mxu0 %v1415
      %v1417 = vpop.f32.mrb[0].mxu0
      %v1418 = vadd.f32 %v1327, %v1417
      %v1419 = vpop.f32.mrb[0].mxu0
      %1420 = vmatprep.mubr.f32.mxu0 0.0
      %v1421 = vand.u32 %v247, 4294901760
      %1422 = vmatmul.mubr.f32.gmra.mrb[0].mxu0 %v1421
      %v1423 = vpop.f32.mrb[0].mxu0
      %v1424 = vadd.f32 %v1333, %v1423
      %v1425 = vpop.f32.mrb[0].mxu0
      %1426 = vdwg.mxu0
      %v1427 = vmax.f32 %v816, %v1406
      %v1428 = vmax.f32 %v822, %v1412
      %v1429 = vmax.f32 %v828, %v1418
      %v1430 = vmax.f32 %v834, %v1424
      %vm1431 = vcmask 64512
      %1432 = vst.msk [vmem:[%s208] sm:$0xff] %vm1431, %v1427
      %1433 = vst.msk [vmem:[%s208 + $0x8] sm:$0xff] %vm1431, %v1428
      %1434 = vst.msk [vmem:[%s208 + $0x10] sm:$0xff] %vm1431, %v1429
      %1435 = vst.msk [vmem:[%s208 + $0x18] sm:$0xff] %vm1431, %v1430
      %s1436 = smul.u32 4, %s19
      %p1437 = scmp.lt.s32.totalorder %s18, 1
      %s1438 = scalar_select %p1437, %s18, 1
      %p1439 = scmp.lt.s32.totalorder %s1436, 3
      %s1440 = scalar_select %p1439, %s1436, 3
      %s1441 = smul.addr %s1438, 4
      %s1442 = sadd.s32 %s1440, %s1441
      %s1443 = smul.addr %s1442, 8
      %s1444 = scalar_lea.vmem %s3, %s1443
      // Predicated region
      $region33: #{down_block.2} parent=31 // pred_check
        %p1445 = pneg %p116
      $region34: #{down_block.2} parent=31 // pred_check_branch
        %1447 = sbr.rel (%p1445) target = $region36
      $region35: #{down_block.2} parent=31 // pred_region
        %s1448 = smul.u32 4, %s19
      $region36: #{down_block.2} parent=31 // pred_fallthru
        _
    $region32: #{down_block.2} parent=5 // pred_fallthru
      _
    %p1449 = scmp.le.s32.totalorder 2, %s9
    // Predicated region
    $region37: #{down_block.2} parent=5 // pred_check
      %p1450 = pneg %p1449
    $region38: #{down_block.2} parent=5 // pred_check_branch
      %1452 = sbr.rel (%p1450) target = $region40
    $region39: #{down_block.2} parent=5 // pred_region
      %s1453 = ssub.s32 %s9, 2
      // Predicated region
      $region41: #{down_block.2} parent=39 // pred_check
        %p1454 = pneg %p122
      $region42: #{down_block.2} parent=39 // pred_check_branch
        %1456 = sbr.rel (%p1454) target = $region44
      $region43: #{down_block.2} parent=39 // pred_region
        %s1457 = smul.u32 4, %s21
        %p1458 = scmp.lt.s32.totalorder %s20, 1
        %s1459 = scalar_select %p1458, %s20, 1
        %p1460 = scmp.lt.s32.totalorder %s1457, 3
        %s1461 = scalar_select %p1460, %s1457, 3
        %s1462 = smul.addr %s1459, 4
        %s1463 = sadd.s32 %s1461, %s1462
        %s1464 = smul.addr %s1463, 8
        %s1465 = scalar_lea.vmem %s3, %s1464
      $region44: #{down_block.2} parent=39 // pred_fallthru
        _
    $region40: #{down_block.2} parent=5 // pred_fallthru
      _
  $region6: #{down_block.2} parent=0 // loop_footer
    %s13 = sadd.s32 1, %s9
  $region7: #{down_block.2} parent=0 // loop_footer_branch
    %8 = sbr.rel target = $region3
  $region8: #{down_block.2} parent=0 // loop_exit
    _

// kernel: down_block.3
$region0: #{down_block.3}
  #allocation0 [shape = 'u32[]', space=smem, size = 0x4, offset = 0x4, fixed_abs, tag = 'smem constant byte address 0x4 - core index']
  #allocation1 [shape = 'u32[144,128]{1,0:T(1,128)}', space=vmem, size = 0x12000, scoped, tag = 'internal scratch']
  %s0 = inlined_call_operand.vmem [shape: f32[2,4,128], index: 0, kind: input, shape index: {}]
  %s1 = inlined_call_operand.vmem [shape: f32[8,128], index: 1, kind: input, shape index: {}]
  %s2 = inlined_call_operand.vmem [shape: f32[8,36], index: 2, kind: input, shape index: {}]
  %s3 = inlined_call_operand.vmem [shape: f32[8,1], index: 3, kind: input, shape index: {}]
  %s4 = inlined_call_operand.vmem [shape: f32[8,72], index: 4, kind: input, shape index: {}]
  %s5 = inlined_call_operand.vmem [shape: f32[8,1], index: 5, kind: input, shape index: {}]
  %s6 = inlined_call_operand.vmem [shape: f32[2,8,128], index: 6, kind: output, shape index: {}]
  %s7 = sld [smem:[#allocation0]]
  $region57: #{down_block.3} parent=0
    _
  %s9 = ssub.s32 1, %s7
  %s10 = scalar_select 0, %s9, %s7
  loop: start=0, step=1, limit=4
  $region2: #{down_block.3} parent=0 // loop_pre_header
    _
  $region3: #{down_block.3} parent=0 // loop_header
    %s12 = sphi 0, %s16
    %p13 = scmp.ge.s32.totalorder %s12, 4
    %s22 = sphi 0, %s24
    %s25 = sphi 0, %s22
    %s26 = sphi 0, %s25
    %s42 = sphi 0, %s26
    %s46 = sphi 0, %s46
    %s48 = sphi 0, %s46
    %s49 = sphi 0, %s48
    %s63 = sphi 0, %s49
    %s67 = sphi 0, %s67
    %s69 = sphi 0, %s67
    %s70 = sphi 0, %s69
    %s84 = sphi 0, %s70
    %s88 = sphi 0, %s88
    %s90 = sphi 0, %s88
    %s91 = sphi 0, %s90
    %s105 = sphi 0, %s91
    %s109 = sphi 0, %s109
    %s111 = sphi 0, %s109
    %s112 = sphi 0, %s111
    %s126 = sphi 0, %s112
    %s130 = sphi 0, %s130
    %s132 = sphi 0, %s130
    %s133 = sphi 0, %s132
    %s147 = sphi 0, %s133
    %s153 = sphi 0, %s155
    %s156 = sphi 0, %s153
    %s157 = sphi 0, %s156
    %s173 = sphi 0, %s157
  $region4: #{down_block.3} parent=0 // loop_header_branch
    %15 = sbr.rel (%p13) target = $region8
  $region5: #{down_block.3} parent=0 // loop_body
    %s17 = ssub.s32 %s12, 1
    %s18 = ssub.s32 %s12, 2
    %s19 = sadd.s32 %s12, 1
    %s20 = ssub.s32 %s12, %s19
    %p21 = scmp.eq.s32.totalorder %s20, 0
    %s23 = sadd.s32 %s22, 1
    %s24 = scalar_select %p21, %s22, %s23
    %p27 = pneg %p21
    %p28 = scmp.eq.s32.totalorder %s12, 1
    %p29 = por %p27, %p28
    %p30 = scmp.ne.s32.totalorder %s22, %s25
    %p31 = scmp.eq.s32.totalorder %s12, 0
    %p32 = por %p30, %p31
    %p33 = scmp.ne.s32.totalorder %s22, %s25
    %p34 = scmp.eq.s32.totalorder %s17, 1
    %p35 = por %p33, %p34
    %p36 = scmp.ne.s32.totalorder %s25, %s26
    %p37 = scmp.eq.s32.totalorder %s17, 0
    %p38 = por %p36, %p37
    %p39 = scmp.ne.s32.totalorder %s25, %s26
    %p40 = scmp.eq.s32.totalorder %s18, 1
    %p41 = por %p39, %p40
    %p43 = scmp.ne.s32.totalorder %s26, %s42
    %p44 = scmp.eq.s32.totalorder %s18, 0
    %p45 = por %p43, %p44
    %s47 = sadd.s32 %s46, 1
    %p50 = scmp.eq.s32.totalorder %s12, 1
    %p51 = scmp.ne.s32.totalorder %s46, %s48
    %p52 = scmp.eq.s32.totalorder %s12, 0
    %p53 = por %p51, %p52
    %p54 = scmp.ne.s32.totalorder %s46, %s48
    %p55 = scmp.eq.s32.totalorder %s17, 1
    %p56 = por %p54, %p55
    %p57 = scmp.ne.s32.totalorder %s48, %s49
    %p58 = scmp.eq.s32.totalorder %s17, 0
    %p59 = por %p57, %p58
    %p60 = scmp.ne.s32.totalorder %s48, %s49
    %p61 = scmp.eq.s32.totalorder %s18, 1
    %p62 = por %p60, %p61
    %p64 = scmp.ne.s32.totalorder %s49, %s63
    %p65 = scmp.eq.s32.totalorder %s18, 0
    %p66 = por %p64, %p65
    %s68 = sadd.s32 %s67, 1
    %p71 = scmp.eq.s32.totalorder %s12, 1
    %p72 = scmp.ne.s32.totalorder %s67, %s69
    %p73 = scmp.eq.s32.totalorder %s12, 0
    %p74 = por %p72, %p73
    %p75 = scmp.ne.s32.totalorder %s67, %s69
    %p76 = scmp.eq.s32.totalorder %s17, 1
    %p77 = por %p75, %p76
    %p78 = scmp.ne.s32.totalorder %s69, %s70
    %p79 = scmp.eq.s32.totalorder %s17, 0
    %p80 = por %p78, %p79
    %p81 = scmp.ne.s32.totalorder %s69, %s70
    %p82 = scmp.eq.s32.totalorder %s18, 1
    %p83 = por %p81, %p82
    %p85 = scmp.ne.s32.totalorder %s70, %s84
    %p86 = scmp.eq.s32.totalorder %s18, 0
    %p87 = por %p85, %p86
    %s89 = sadd.s32 %s88, 1
    %p92 = scmp.eq.s32.totalorder %s12, 1
    %p93 = scmp.ne.s32.totalorder %s88, %s90
    %p94 = scmp.eq.s32.totalorder %s12, 0
    %p95 = por %p93, %p94
    %p96 = scmp.ne.s32.totalorder %s88, %s90
    %p97 = scmp.eq.s32.totalorder %s17, 1
    %p98 = por %p96, %p97
    %p99 = scmp.ne.s32.totalorder %s90, %s91
    %p100 = scmp.eq.s32.totalorder %s17, 0
    %p101 = por %p99, %p100
    %p102 = scmp.ne.s32.totalorder %s90, %s91
    %p103 = scmp.eq.s32.totalorder %s18, 1
    %p104 = por %p102, %p103
    %p106 = scmp.ne.s32.totalorder %s91, %s105
    %p107 = scmp.eq.s32.totalorder %s18, 0
    %p108 = por %p106, %p107
    %s110 = sadd.s32 %s109, 1
    %p113 = scmp.eq.s32.totalorder %s12, 1
    %p114 = scmp.ne.s32.totalorder %s109, %s111
    %p115 = scmp.eq.s32.totalorder %s12, 0
    %p116 = por %p114, %p115
    %p117 = scmp.ne.s32.totalorder %s109, %s111
    %p118 = scmp.eq.s32.totalorder %s17, 1
    %p119 = por %p117, %p118
    %p120 = scmp.ne.s32.totalorder %s111, %s112
    %p121 = scmp.eq.s32.totalorder %s17, 0
    %p122 = por %p120, %p121
    %p123 = scmp.ne.s32.totalorder %s111, %s112
    %p124 = scmp.eq.s32.totalorder %s18, 1
    %p125 = por %p123, %p124
    %p127 = scmp.ne.s32.totalorder %s112, %s126
    %p128 = scmp.eq.s32.totalorder %s18, 0
    %p129 = por %p127, %p128
    %s131 = sadd.s32 %s130, 1
    %p134 = scmp.eq.s32.totalorder %s12, 1
    %p135 = scmp.ne.s32.totalorder %s130, %s132
    %p136 = scmp.eq.s32.totalorder %s12, 0
    %p137 = por %p135, %p136
    %p138 = scmp.ne.s32.totalorder %s130, %s132
    %p139 = scmp.eq.s32.totalorder %s17, 1
    %p140 = por %p138, %p139
    %p141 = scmp.ne.s32.totalorder %s132, %s133
    %p142 = scmp.eq.s32.totalorder %s17, 0
    %p143 = por %p141, %p142
    %p144 = scmp.ne.s32.totalorder %s132, %s133
    %p145 = scmp.eq.s32.totalorder %s18, 1
    %p146 = por %p144, %p145
    %p148 = scmp.ne.s32.totalorder %s133, %s147
    %p149 = scmp.eq.s32.totalorder %s18, 0
    %p150 = por %p148, %p149
    %s151 = ssub.s32 %s12, %s19
    %p152 = scmp.eq.s32.totalorder %s151, 0
    %s154 = sadd.s32 %s153, 1
    %s155 = scalar_select %p152, %s153, %s154
    %p158 = pneg %p152
    %p159 = scmp.eq.s32.totalorder %s12, 1
    %p160 = por %p158, %p159
    %p161 = scmp.ne.s32.totalorder %s153, %s156
    %p162 = scmp.eq.s32.totalorder %s12, 0
    %p163 = por %p161, %p162
    %p164 = scmp.ne.s32.totalorder %s153, %s156
    %p165 = scmp.eq.s32.totalorder %s17, 1
    %p166 = por %p164, %p165
    %p167 = scmp.ne.s32.totalorder %s156, %s157
    %p168 = scmp.eq.s32.totalorder %s17, 0
    %p169 = por %p167, %p168
    %p170 = scmp.ne.s32.totalorder %s156, %s157
    %p171 = scmp.eq.s32.totalorder %s18, 1
    %p172 = por %p170, %p171
    %p174 = scmp.ne.s32.totalorder %s157, %s173
    %p175 = scmp.eq.s32.totalorder %s18, 0
    %p176 = por %p174, %p175
    %p177 = scmp.le.s32.totalorder 1, %s12
    %p178 = scmp.lt.s32.totalorder %s12, 3
    %p179 = pnand %p177, %p178
    %p180 = pneg %p179
    // Predicated region
    $region9: #{down_block.3} parent=5 // pred_check
      _
    $region10: #{down_block.3} parent=5 // pred_check_branch
      %182 = sbr.rel (%p179) target = $region12
    $region11: #{down_block.3} parent=5 // pred_region
      %s183 = ssub.s32 %s12, 1
      // Predicated region
      $region13: #{down_block.3} parent=11 // pred_check
        %p184 = pneg %p59
      $region14: #{down_block.3} parent=11 // pred_check_branch
        %186 = sbr.rel (%p184) target = $region16
      $region15: #{down_block.3} parent=11 // pred_region
        _
      $region16: #{down_block.3} parent=11 // pred_fallthru
        _
      // Predicated region
      $region17: #{down_block.3} parent=11 // pred_check
        %p187 = pneg %p80
      $region18: #{down_block.3} parent=11 // pred_check_branch
        %189 = sbr.rel (%p187) target = $region20
      $region19: #{down_block.3} parent=11 // pred_region
        _
      $region20: #{down_block.3} parent=11 // pred_fallthru
        _
      // Predicated region
      $region21: #{down_block.3} parent=11 // pred_check
        %p190 = pneg %p101
      $region22: #{down_block.3} parent=11 // pred_check_branch
        %192 = sbr.rel (%p190) target = $region24
      $region23: #{down_block.3} parent=11 // pred_region
        _
      $region24: #{down_block.3} parent=11 // pred_fallthru
        _
      // Predicated region
      $region25: #{down_block.3} parent=11 // pred_check
        %p193 = pneg %p122
      $region26: #{down_block.3} parent=11 // pred_check_branch
        %195 = sbr.rel (%p193) target = $region28
      $region27: #{down_block.3} parent=11 // pred_region
        _
      $region28: #{down_block.3} parent=11 // pred_fallthru
        _
      // Predicated region
      $region29: #{down_block.3} parent=11 // pred_check
        %p196 = pneg %p143
      $region30: #{down_block.3} parent=11 // pred_check_branch
        %198 = sbr.rel (%p196) target = $region32
      $region31: #{down_block.3} parent=11 // pred_region
        _
      $region32: #{down_block.3} parent=11 // pred_fallthru
        _
    $region12: #{down_block.3} parent=5 // pred_fallthru
      _
    %p199 = scmp.lt.s32.totalorder %s12, 2
    // Predicated region
    $region33: #{down_block.3} parent=5 // pred_check
      %p200 = pneg %p199
    $region34: #{down_block.3} parent=5 // pred_check_branch
      %202 = sbr.rel (%p200) target = $region36
    $region35: #{down_block.3} parent=5 // pred_region
      // Predicated region
      $region37: #{down_block.3} parent=35 // pred_check
        %p203 = pneg %p32
      $region38: #{down_block.3} parent=35 // pred_check_branch
        %205 = sbr.rel (%p203) target = $region40
      $region39: #{down_block.3} parent=35 // pred_region
        %p206 = scmp.lt.s32.totalorder %s12, 1
        %s207 = scalar_select %p206, %s12, 1
        %s208 = smul.addr %s207, 4
        %s209 = scalar_lea.vmem %s0, %s208
      $region40: #{down_block.3} parent=35 // pred_fallthru
        _
    $region36: #{down_block.3} parent=5 // pred_fallthru
      _
    %p210 = scmp.le.s32.totalorder 1, %s12
    %p211 = scmp.lt.s32.totalorder %s12, 3
    %p212 = pnand %p210, %p211
    %p213 = pneg %p212
    // Predicated region
    $region41: #{down_block.3} parent=5 // pred_check
      _
    $region42: #{down_block.3} parent=5 // pred_check_branch
      %215 = sbr.rel (%p212) target = $region44
    $region43: #{down_block.3} parent=5 // pred_region
      %s216 = ssub.s32 %s12, 1
      %p217 = scmp.lt.s32.totalorder %s17, 1
      %s218 = scalar_select %p217, %s17, 1
      %s219 = smul.addr %s218, 4
      %s220 = scalar_lea.vmem %s0, %s219
      %p221 = pneg %p38
      %p222 = pneg %p35
      %p223 = pneg %p59
      %p224 = pneg %p56
      %p225 = pneg %p80
      %p226 = pneg %p77
      %p227 = pneg %p101
      %p228 = pneg %p98
      %p229 = pneg %p122
      %p230 = pneg %p119
      %p231 = pneg %p143
      %p232 = pneg %p140
      %p233 = pneg %p169
      %p234 = pneg %p166
      %p235 = scmp.lt.s32.totalorder %s17, 1
      %s236 = scalar_select %p235, %s17, 1
      %s237 = smul.addr %s236, 8
      %s238 = scalar_lea.vmem %s6, %s237
      %p239 = scmp.lt.s32.totalorder %s17, 1
      %s240 = scalar_select %p239, %s17, 1
      %s241 = smul.addr %s240, 4
      %s242 = scalar_lea.vmem %s0, %s241
      %p243 = scmp.lt.s32.totalorder %s17, 1
      %s244 = scalar_select %p243, %s17, 1
      %s245 = smul.addr %s244, 8
      %s246 = scalar_lea.vmem %s6, %s245
      %v247 = vld [vmem:[%s1] sm:$0xff]
      %v248 = vld [vmem:[%s242] sm:$0xf]
      %249 = vrot.lane.b32.xlu0 %v248, 9
      %v250 = vpop.permute.xlu0 %249
      %v251 = vlaneseq
      %v252 = vshrl.u32 %v251, 7
      %v253 = vsub.s32 0, %v252
      %v254 = vrot.slane %v247, %v253
      %v255 = vmul.f32 %v250, %v254
      %256 = vrot.lane.b32.xlu0 %v248, 8
      %v257 = vpop.permute.xlu0 %256
      %v258 = vlaneseq
      %v259 = vshrl.u32 %v258, 7
      %v260 = vsub.s32 1, %v259
      %v261 = vrot.slane %v247, %v260
      %v262 = vmul.f32 %v257, %v261
      %263 = vrot.lane.b32.xlu0 %v248, 7
      %v264 = vpop.permute.xlu0 %263
      %v265 = vlaneseq
      %v266 = vshrl.u32 %v265, 7
      %v267 = vsub.s32 2, %v266
      %v268 = vrot.slane %v247, %v267
      %v269 = vmul.f32 %v264, %v268
      %270 = vrot.lane.b32.xlu0 %v248, 1
      %v271 = vpop.permute.xlu0 %270
      %v272 = vlaneseq
      %v273 = vshrl.u32 %v272, 7
      %v274 = vsub.s32 3, %v273
      %v275 = vrot.slane %v247, %v274
      %v276 = vmul.f32 %v271, %v275
      %277 = vrot.lane.b32.xlu0 %v248, 127
      %v278 = vpop.permute.xlu0 %277
      %v279 = vlaneseq
      %v280 = vshrl.u32 %v279, 7
      %v281 = vsub.s32 4, %v280
      %v282 = vrot.slane %v247, %v281
      %v283 = vmul.f32 %v278, %v282
      %284 = vrot.lane.b32.xlu0 %v248, 121
      %v285 = vpop.permute.xlu0 %284
      %v286 = vlaneseq
      %v287 = vshrl.u32 %v286, 7
      %v288 = vsub.s32 5, %v287
      %v289 = vrot.slane %v247, %v288
      %v290 = vmul.f32 %v285, %v289
      %291 = vrot.lane.b32.xlu0 %v248, 120
      %v292 = vpop.permute.xlu0 %291
      %v293 = vlaneseq
      %v294 = vshrl.u32 %v293, 7
      %v295 = vsub.s32 6, %v294
      %v296 = vrot.slane %v247, %v295
      %v297 = vmul.f32 %v292, %v296
      %298 = vrot.lane.b32.xlu0 %v248, 119
      %v299 = vpop.permute.xlu0 %298
      %v300 = vlaneseq
      %v301 = vshrl.u32 %v300, 7
      %v302 = vsub.s32 7, %v301
      %v303 = vrot.slane %v247, %v302
      %v304 = vmul.f32 %v299, %v303
      %v306 = vrot.slane %v262, 4
      %v309 = vrot.slane %v276, 4
      %v312 = vrot.slane %v283, 4
      %v315 = vrot.slane %v297, 4
      %vm317 = vcmask 1043456
      %v318 = vsel %vm317, %v255, %v306
      %v319 = vsel %vm317, %v269, %v309
      %v320 = vsel %vm317, %v248, %v312
      %v321 = vsel %vm317, %v290, %v315
      %v322 = vld [vmem:[%s2] sm:$0xff]
      %v323 = vld [vmem:[%s3] sm:$0xff]
      %325 = vset.pattern.permute.xlu0 0
      %326 = vperm.xlu0 %325, %v323
      %v327 = vpop.permute.xlu0 %326
      %vm329 = vcmask 293888
      %v331 = vsel %vm329, %v322, 0
      %v334 = vsel %vm317, %v304, 0
      %336 = vmatprep.subr.mxu0 0.0
      %v337 = vand.u32 %v318, 4294901760
      %338 = vmatpush1.msra.mxu0 %v337
      %339 = vmatprep.subr.mxu0 0.0
      %v340 = vand.u32 %v319, 4294901760
      %341 = vmatpush1.msra.mxu0 %v340
      %342 = vmatprep.subr.mxu0 0.0
      %v343 = vand.u32 %v320, 4294901760
      %344 = vmatpush1.msra.mxu0 %v343
      %345 = vmatprep.subr.mxu0 0.0
      %v346 = vand.u32 %v321, 4294901760
      %347 = vmatpush1.msra.mxu0 %v346
      %348 = vmatprep.subr.mxu0 0.0
      %v349 = vand.u32 %v334, 4294901760
      %350 = vmatpush1.msra.mxu0 %v349
      %351 = vmatprep.subr.mxu0 0.0
      %352 = vmatpush1.msra.mxu0 0.0
      %353 = vmatprep.subr.mxu0 0.0
      %354 = vmatpush1.msra.mxu0 0.0
      %355 = vmatprep.subr.mxu0 0.0
      %356 = vmatpush1.msra.mxu0 0.0
      %357 = vmatprep.subr.mxu0 0.0
      %358 = vmatpush1.msra.mxu0 0.0
      %359 = vmatprep.subr.mxu0 0.0
      %360 = vmatpush1.msra.mxu0 0.0
      %361 = vmatprep.subr.mxu0 0.0
      %362 = vmatpush1.msra.mxu0 0.0
      %363 = vmatprep.subr.mxu0 0.0
      %364 = vmatpush1.msra.mxu0 0.0
      %365 = vmatprep.subr.mxu0 0.0
      %366 = vmatpush1.msra.mxu0 0.0
      %367 = vmatprep.subr.mxu0 0.0
      %368 = vmatpush1.msra.mxu0 0.0
      %369 = vmatprep.subr.mxu0 0.0
      %370 = vmatpush1.msra.mxu0 0.0
      %371 = vmatprep.subr.mxu0 0.0
      %372 = vmatpush1.msra.mxu0 0.0
      %373 = vmatprep.subr.mxu0 0.0
      %374 = vmatpush1.msra.mxu0 0.0
      %375 = vmatprep.subr.mxu0 0.0
      %376 = vmatpush1.msra.mxu0 0.0
      %377 = vmatprep.subr.mxu0 0.0
      %378 = vmatpush1.msra.mxu0 0.0
      %379 = vmatprep.subr.mxu0 0.0
      %380 = vmatpush1.msra.mxu0 0.0
      %381 = vmatprep.subr.mxu0 0.0
      %382 = vmatpush1.msra.mxu0 0.0
      %383 = vmatprep.subr.mxu0 0.0
      %384 = vmatpush1.msra.mxu0 0.0
      %385 = vmatprep.subr.mxu0 0.0
      %386 = vmatpush1.msra.mxu0 0.0
      %387 = vmatprep.subr.mxu0 0.0
      %388 = vmatpush1.msra.mxu0 0.0
      %389 = vmatprep.subr.mxu0 0.0
      %390 = vmatpush1.msra.mxu0 0.0
      %391 = vmatprep.subr.mxu0 0.0
      %392 = vmatpush1.msra.mxu0 0.0
      %393 = vmatprep.subr.mxu0 0.0
      %394 = vmatpush1.msra.mxu0 0.0
      %395 = vmatprep.subr.mxu0 0.0
      %396 = vmatpush1.msra.mxu0 0.0
      %397 = vmatprep.subr.mxu0 0.0
      %398 = vmatpush1.msra.mxu0 0.0
      %399 = vmatprep.subr.mxu0 0.0
      %400 = vmatpush1.msra.mxu0 0.0
      %401 = vmatprep.subr.mxu0 0.0
      %402 = vmatpush1.msra.mxu0 0.0
      %403 = vmatprep.subr.mxu0 0.0
      %404 = vmatpush1.msra.mxu0 0.0
      %405 = vmatprep.mubr.f32.mxu0 0.0
      %v406 = vand.u32 %v331, 4294901760
      %v407 = vsub.f32 %v331, %v406
      %v408 = vand.u32 %v407, 4294901760
      %v409 = vsub.f32 %v407, %v408
      %v410 = vand.u32 %v409, 4294901760
      %411 = vmatmul.mubr.f32.gmra.mrb[0].mxu0 %v410
      %v412 = vpop.f32.mrb[0].mxu0
      %v413 = vadd.f32 %v327, %v412
      %v414 = vpop.f32.mrb[0].mxu0
      %415 = vdwg.mxu0
      %416 = vmatprep.subr.mxu0 0.0
      %v417 = vand.u32 %v318, 4294901760
      %v418 = vsub.f32 %v318, %v417
      %v419 = vand.u32 %v418, 4294901760
      %v420 = vsub.f32 %v418, %v419
      %v421 = vand.u32 %v420, 4294901760
      %422 = vmatpush1.msra.mxu0 %v421
      %423 = vmatprep.subr.mxu0 0.0
      %v424 = vand.u32 %v319, 4294901760
      %v425 = vsub.f32 %v319, %v424
      %v426 = vand.u32 %v425, 4294901760
      %v427 = vsub.f32 %v425, %v426
      %v428 = vand.u32 %v427, 4294901760
      %429 = vmatpush1.msra.mxu0 %v428
      %430 = vmatprep.subr.mxu0 0.0
      %v431 = vand.u32 %v320, 4294901760
      %v432 = vsub.f32 %v320, %v431
      %v433 = vand.u32 %v432, 4294901760
      %v434 = vsub.f32 %v432, %v433
      %v435 = vand.u32 %v434, 4294901760
      %436 = vmatpush1.msra.mxu0 %v435
      %437 = vmatprep.subr.mxu0 0.0
      %v438 = vand.u32 %v321, 4294901760
      %v439 = vsub.f32 %v321, %v438
      %v440 = vand.u32 %v439, 4294901760
      %v441 = vsub.f32 %v439, %v440
      %v442 = vand.u32 %v441, 4294901760
      %443 = vmatpush1.msra.mxu0 %v442
      %444 = vmatprep.subr.mxu0 0.0
      %v445 = vand.u32 %v334, 4294901760
      %v446 = vsub.f32 %v334, %v445
      %v447 = vand.u32 %v446, 4294901760
      %v448 = vsub.f32 %v446, %v447
      %v449 = vand.u32 %v448, 4294901760
      %450 = vmatpush1.msra.mxu0 %v449
      %451 = vmatprep.subr.mxu0 0.0
      %452 = vmatpush1.msra.mxu0 0.0
      %453 = vmatprep.subr.mxu0 0.0
      %454 = vmatpush1.msra.mxu0 0.0
      %455 = vmatprep.subr.mxu0 0.0
      %456 = vmatpush1.msra.mxu0 0.0
      %457 = vmatprep.subr.mxu0 0.0
      %458 = vmatpush1.msra.mxu0 0.0
      %459 = vmatprep.subr.mxu0 0.0
      %460 = vmatpush1.msra.mxu0 0.0
      %461 = vmatprep.subr.mxu0 0.0
      %462 = vmatpush1.msra.mxu0 0.0
      %463 = vmatprep.subr.mxu0 0.0
      %464 = vmatpush1.msra.mxu0 0.0
      %465 = vmatprep.subr.mxu0 0.0
      %466 = vmatpush1.msra.mxu0 0.0
      %467 = vmatprep.subr.mxu0 0.0
      %468 = vmatpush1.msra.mxu0 0.0
      %469 = vmatprep.subr.mxu0 0.0
      %470 = vmatpush1.msra.mxu0 0.0
      %471 = vmatprep.subr.mxu0 0.0
      %472 = vmatpush1.msra.mxu0 0.0
      %473 = vmatprep.subr.mxu0 0.0
      %474 = vmatpush1.msra.mxu0 0.0
      %475 = vmatprep.subr.mxu0 0.0
      %476 = vmatpush1.msra.mxu0 0.0
      %477 = vmatprep.subr.mxu0 0.0
      %478 = vmatpush1.msra.mxu0 0.0
      %479 = vmatprep.subr.mxu0 0.0
      %480 = vmatpush1.msra.mxu0 0.0
      %481 = vmatprep.subr.mxu0 0.0
      %482 = vmatpush1.msra.mxu0 0.0
      %483 = vmatprep.subr.mxu0 0.0
      %484 = vmatpush1.msra.mxu0 0.0
      %485 = vmatprep.subr.mxu0 0.0
      %486 = vmatpush1.msra.mxu0 0.0
      %487 = vmatprep.subr.mxu0 0.0
      %488 = vmatpush1.msra.mxu0 0.0
      %489 = vmatprep.subr.mxu0 0.0
      %490 = vmatpush1.msra.mxu0 0.0
      %491 = vmatprep.subr.mxu0 0.0
      %492 = vmatpush1.msra.mxu0 0.0
      %493 = vmatprep.subr.mxu0 0.0
      %494 = vmatpush1.msra.mxu0 0.0
      %495 = vmatprep.subr.mxu0 0.0
      %496 = vmatpush1.msra.mxu0 0.0
      %497 = vmatprep.subr.mxu0 0.0
      %498 = vmatpush1.msra.mxu0 0.0
      %499 = vmatprep.subr.mxu0 0.0
      %500 = vmatpush1.msra.mxu0 0.0
      %501 = vmatprep.subr.mxu0 0.0
      %502 = vmatpush1.msra.mxu0 0.0
      %503 = vmatprep.subr.mxu0 0.0
      %504 = vmatpush1.msra.mxu0 0.0
      %505 = vmatprep.mubr.f32.mxu0 0.0
      %v506 = vand.u32 %v331, 4294901760
      %507 = vmatmul.mubr.f32.gmra.mrb[0].mxu0 %v506
      %v508 = vpop.f32.mrb[0].mxu0
      %v509 = vadd.f32 %v413, %v508
      %v510 = vpop.f32.mrb[0].mxu0
      %511 = vdwg.mxu0
      %512 = vmatprep.subr.mxu0 0.0
      %v513 = vand.u32 %v318, 4294901760
      %v514 = vsub.f32 %v318, %v513
      %515 = vmatpush1.msra.mxu0 %v514
      %516 = vmatprep.subr.mxu0 0.0
      %v517 = vand.u32 %v319, 4294901760
      %v518 = vsub.f32 %v319, %v517
      %519 = vmatpush1.msra.mxu0 %v518
      %520 = vmatprep.subr.mxu0 0.0
      %v521 = vand.u32 %v320, 4294901760
      %v522 = vsub.f32 %v320, %v521
      %523 = vmatpush1.msra.mxu0 %v522
      %524 = vmatprep.subr.mxu0 0.0
      %v525 = vand.u32 %v321, 4294901760
      %v526 = vsub.f32 %v321, %v525
      %527 = vmatpush1.msra.mxu0 %v526
      %528 = vmatprep.subr.mxu0 0.0
      %v529 = vand.u32 %v334, 4294901760
      %v530 = vsub.f32 %v334, %v529
      %531 = vmatpush1.msra.mxu0 %v530
      %532 = vmatprep.subr.mxu0 0.0
      %533 = vmatpush1.msra.mxu0 0.0
      %534 = vmatprep.subr.mxu0 0.0
      %535 = vmatpush1.msra.mxu0 0.0
      %536 = vmatprep.subr.mxu0 0.0
      %537 = vmatpush1.msra.mxu0 0.0
      %538 = vmatprep.subr.mxu0 0.0
      %539 = vmatpush1.msra.mxu0 0.0
      %540 = vmatprep.subr.mxu0 0.0
      %541 = vmatpush1.msra.mxu0 0.0
      %542 = vmatprep.subr.mxu0 0.0
      %543 = vmatpush1.msra.mxu0 0.0
      %544 = vmatprep.subr.mxu0 0.0
      %545 = vmatpush1.msra.mxu0 0.0
      %546 = vmatprep.subr.mxu0 0.0
      %547 = vmatpush1.msra.mxu0 0.0
      %548 = vmatprep.subr.mxu0 0.0
      %549 = vmatpush1.msra.mxu0 0.0
      %550 = vmatprep.subr.mxu0 0.0
      %551 = vmatpush1.msra.mxu0 0.0
      %552 = vmatprep.subr.mxu0 0.0
      %553 = vmatpush1.msra.mxu0 0.0
      %554 = vmatprep.subr.mxu0 0.0
      %555 = vmatpush1.msra.mxu0 0.0
      %556 = vmatprep.subr.mxu0 0.0
      %557 = vmatpush1.msra.mxu0 0.0
      %558 = vmatprep.subr.mxu0 0.0
      %559 = vmatpush1.msra.mxu0 0.0
      %560 = vmatprep.subr.mxu0 0.0
      %561 = vmatpush1.msra.mxu0 0.0
      %562 = vmatprep.subr.mxu0 0.0
      %563 = vmatpush1.msra.mxu0 0.0
      %564 = vmatprep.subr.mxu0 0.0
      %565 = vmatpush1.msra.mxu0 0.0
      %566 = vmatprep.subr.mxu0 0.0
      %567 = vmatpush1.msra.mxu0 0.0
      %568 = vmatprep.subr.mxu0 0.0
      %569 = vmatpush1.msra.mxu0 0.0
      %570 = vmatprep.subr.mxu0 0.0
      %571 = vmatpush1.msra.mxu0 0.0
      %572 = vmatprep.subr.mxu0 0.0
      %573 = vmatpush1.msra.mxu0 0.0
      %574 = vmatprep.subr.mxu0 0.0
      %575 = vmatpush1.msra.mxu0 0.0
      %576 = vmatprep.subr.mxu0 0.0
      %577 = vmatpush1.msra.mxu0 0.0
      %578 = vmatprep.subr.mxu0 0.0
      %579 = vmatpush1.msra.mxu0 0.0
      %580 = vmatprep.subr.mxu0 0.0
      %581 = vmatpush1.msra.mxu0 0.0
      %582 = vmatprep.subr.mxu0 0.0
      %583 = vmatpush1.msra.mxu0 0.0
      %584 = vmatprep.subr.mxu0 0.0
      %585 = vmatpush1.msra.mxu0 0.0
      %586 = vmatprep.mubr.f32.mxu0 0.0
      %v587 = vand.u32 %v331, 4294901760
      %v588 = vsub.f32 %v331, %v587
      %589 = vmatmul.mubr.f32.gmra.mrb[0].mxu0 %v588
      %v590 = vpop.f32.mrb[0].mxu0
      %v591 = vadd.f32 %v509, %v590
      %v592 = vpop.f32.mrb[0].mxu0
      %593 = vdwg.mxu0
      %594 = vmatprep.subr.mxu0 0.0
      %v595 = vand.u32 %v318, 4294901760
      %596 = vmatpush1.msra.mxu0 %v595
      %597 = vmatprep.subr.mxu0 0.0
      %v598 = vand.u32 %v319, 4294901760
      %599 = vmatpush1.msra.mxu0 %v598
      %600 = vmatprep.subr.mxu0 0.0
      %v601 = vand.u32 %v320, 4294901760
      %602 = vmatpush1.msra.mxu0 %v601
      %603 = vmatprep.subr.mxu0 0.0
      %v604 = vand.u32 %v321, 4294901760
      %605 = vmatpush1.msra.mxu0 %v604
      %606 = vmatprep.subr.mxu0 0.0
      %v607 = vand.u32 %v334, 4294901760
      %608 = vmatpush1.msra.mxu0 %v607
      %609 = vmatprep.subr.mxu0 0.0
      %610 = vmatpush1.msra.mxu0 0.0
      %611 = vmatprep.subr.mxu0 0.0
      %612 = vmatpush1.msra.mxu0 0.0
      %613 = vmatprep.subr.mxu0 0.0
      %614 = vmatpush1.msra.mxu0 0.0
      %615 = vmatprep.subr.mxu0 0.0
      %616 = vmatpush1.msra.mxu0 0.0
      %617 = vmatprep.subr.mxu0 0.0
      %618 = vmatpush1.msra.mxu0 0.0
      %619 = vmatprep.subr.mxu0 0.0
      %620 = vmatpush1.msra.mxu0 0.0
      %621 = vmatprep.subr.mxu0 0.0
      %622 = vmatpush1.msra.mxu0 0.0
      %623 = vmatprep.subr.mxu0 0.0
      %624 = vmatpush1.msra.mxu0 0.0
      %625 = vmatprep.subr.mxu0 0.0
      %626 = vmatpush1.msra.mxu0 0.0
      %627 = vmatprep.subr.mxu0 0.0
      %628 = vmatpush1.msra.mxu0 0.0
      %629 = vmatprep.subr.mxu0 0.0
      %630 = vmatpush1.msra.mxu0 0.0
      %631 = vmatprep.subr.mxu0 0.0
      %632 = vmatpush1.msra.mxu0 0.0
      %633 = vmatprep.subr.mxu0 0.0
      %634 = vmatpush1.msra.mxu0 0.0
      %635 = vmatprep.subr.mxu0 0.0
      %636 = vmatpush1.msra.mxu0 0.0
      %637 = vmatprep.subr.mxu0 0.0
      %638 = vmatpush1.msra.mxu0 0.0
      %639 = vmatprep.subr.mxu0 0.0
      %640 = vmatpush1.msra.mxu0 0.0
      %641 = vmatprep.subr.mxu0 0.0
      %642 = vmatpush1.msra.mxu0 0.0
      %643 = vmatprep.subr.mxu0 0.0
      %644 = vmatpush1.msra.mxu0 0.0
      %645 = vmatprep.subr.mxu0 0.0
      %646 = vmatpush1.msra.mxu0 0.0
      %647 = vmatprep.subr.mxu0 0.0
      %648 = vmatpush1.msra.mxu0 0.0
      %649 = vmatprep.subr.mxu0 0.0
      %650 = vmatpush1.msra.mxu0 0.0
      %651 = vmatprep.subr.mxu0 0.0
      %652 = vmatpush1.msra.mxu0 0.0
      %653 = vmatprep.subr.mxu0 0.0
      %654 = vmatpush1.msra.mxu0 0.0
      %655 = vmatprep.subr.mxu0 0.0
      %656 = vmatpush1.msra.mxu0 0.0
      %657 = vmatprep.subr.mxu0 0.0
      %658 = vmatpush1.msra.mxu0 0.0
      %659 = vmatprep.subr.mxu0 0.0
      %660 = vmatpush1.msra.mxu0 0.0
      %661 = vmatprep.subr.mxu0 0.0
      %662 = vmatpush1.msra.mxu0 0.0
      %663 = vmatprep.mubr.f32.mxu0 0.0
      %v664 = vand.u32 %v331, 4294901760
      %v665 = vsub.f32 %v331, %v664
      %v666 = vand.u32 %v665, 4294901760
      %667 = vmatmul.mubr.f32.gmra.mrb[0].mxu0 %v666
      %v668 = vpop.f32.mrb[0].mxu0
      %v669 = vadd.f32 %v591, %v668
      %v670 = vpop.f32.mrb[0].mxu0
      %671 = vdwg.mxu0
      %672 = vmatprep.subr.mxu0 0.0
      %v673 = vand.u32 %v318, 4294901760
      %v674 = vsub.f32 %v318, %v673
      %v675 = vand.u32 %v674, 4294901760
      %676 = vmatpush1.msra.mxu0 %v675
      %677 = vmatprep.subr.mxu0 0.0
      %v678 = vand.u32 %v319, 4294901760
      %v679 = vsub.f32 %v319, %v678
      %v680 = vand.u32 %v679, 4294901760
      %681 = vmatpush1.msra.mxu0 %v680
      %682 = vmatprep.subr.mxu0 0.0
      %v683 = vand.u32 %v320, 4294901760
      %v684 = vsub.f32 %v320, %v683
      %v685 = vand.u32 %v684, 4294901760
      %686 = vmatpush1.msra.mxu0 %v685
      %687 = vmatprep.subr.mxu0 0.0
      %v688 = vand.u32 %v321, 4294901760
      %v689 = vsub.f32 %v321, %v688
      %v690 = vand.u32 %v689, 4294901760
      %691 = vmatpush1.msra.mxu0 %v690
      %692 = vmatprep.subr.mxu0 0.0
      %v693 = vand.u32 %v334, 4294901760
      %v694 = vsub.f32 %v334, %v693
      %v695 = vand.u32 %v694, 4294901760
      %696 = vmatpush1.msra.mxu0 %v695
      %697 = vmatprep.subr.mxu0 0.0
      %698 = vmatpush1.msra.mxu0 0.0
      %699 = vmatprep.subr.mxu0 0.0
      %700 = vmatpush1.msra.mxu0 0.0
      %701 = vmatprep.subr.mxu0 0.0
      %702 = vmatpush1.msra.mxu0 0.0
      %703 = vmatprep.subr.mxu0 0.0
      %704 = vmatpush1.msra.mxu0 0.0
      %705 = vmatprep.subr.mxu0 0.0
      %706 = vmatpush1.msra.mxu0 0.0
      %707 = vmatprep.subr.mxu0 0.0
      %708 = vmatpush1.msra.mxu0 0.0
      %709 = vmatprep.subr.mxu0 0.0
      %710 = vmatpush1.msra.mxu0 0.0
      %711 = vmatprep.subr.mxu0 0.0
      %712 = vmatpush1.msra.mxu0 0.0
      %713 = vmatprep.subr.mxu0 0.0
      %714 = vmatpush1.msra.mxu0 0.0
      %715 = vmatprep.subr.mxu0 0.0
      %716 = vmatpush1.msra.mxu0 0.0
      %717 = vmatprep.subr.mxu0 0.0
      %718 = vmatpush1.msra.mxu0 0.0
      %719 = vmatprep.subr.mxu0 0.0
      %720 = vmatpush1.msra.mxu0 0.0
      %721 = vmatprep.subr.mxu0 0.0
      %722 = vmatpush1.msra.mxu0 0.0
      %723 = vmatprep.subr.mxu0 0.0
      %724 = vmatpush1.msra.mxu0 0.0
      %725 = vmatprep.subr.mxu0 0.0
      %726 = vmatpush1.msra.mxu0 0.0
      %727 = vmatprep.subr.mxu0 0.0
      %728 = vmatpush1.msra.mxu0 0.0
      %729 = vmatprep.subr.mxu0 0.0
      %730 = vmatpush1.msra.mxu0 0.0
      %731 = vmatprep.subr.mxu0 0.0
      %732 = vmatpush1.msra.mxu0 0.0
      %733 = vmatprep.subr.mxu0 0.0
      %734 = vmatpush1.msra.mxu0 0.0
      %735 = vmatprep.subr.mxu0 0.0
      %736 = vmatpush1.msra.mxu0 0.0
      %737 = vmatprep.subr.mxu0 0.0
      %738 = vmatpush1.msra.mxu0 0.0
      %739 = vmatprep.subr.mxu0 0.0
      %740 = vmatpush1.msra.mxu0 0.0
      %741 = vmatprep.subr.mxu0 0.0
      %742 = vmatpush1.msra.mxu0 0.0
      %743 = vmatprep.subr.mxu0 0.0
      %744 = vmatpush1.msra.mxu0 0.0
      %745 = vmatprep.subr.mxu0 0.0
      %746 = vmatpush1.msra.mxu0 0.0
      %747 = vmatprep.subr.mxu0 0.0
      %748 = vmatpush1.msra.mxu0 0.0
      %749 = vmatprep.subr.mxu0 0.0
      %750 = vmatpush1.msra.mxu0 0.0
      %751 = vmatprep.mubr.f32.mxu0 0.0
      %v752 = vand.u32 %v331, 4294901760
      %753 = vmatmul.mubr.f32.gmra.mrb[0].mxu0 %v752
      %v754 = vpop.f32.mrb[0].mxu0
      %v755 = vadd.f32 %v669, %v754
      %v756 = vpop.f32.mrb[0].mxu0
      %757 = vdwg.mxu0
      %758 = vmatprep.subr.mxu0 0.0
      %v759 = vand.u32 %v318, 4294901760
      %760 = vmatpush1.msra.mxu0 %v759
      %761 = vmatprep.subr.mxu0 0.0
      %v762 = vand.u32 %v319, 4294901760
      %763 = vmatpush1.msra.mxu0 %v762
      %764 = vmatprep.subr.mxu0 0.0
      %v765 = vand.u32 %v320, 4294901760
      %766 = vmatpush1.msra.mxu0 %v765
      %767 = vmatprep.subr.mxu0 0.0
      %v768 = vand.u32 %v321, 4294901760
      %769 = vmatpush1.msra.mxu0 %v768
      %770 = vmatprep.subr.mxu0 0.0
      %v771 = vand.u32 %v334, 4294901760
      %772 = vmatpush1.msra.mxu0 %v771
      %773 = vmatprep.subr.mxu0 0.0
      %774 = vmatpush1.msra.mxu0 0.0
      %775 = vmatprep.subr.mxu0 0.0
      %776 = vmatpush1.msra.mxu0 0.0
      %777 = vmatprep.subr.mxu0 0.0
      %778 = vmatpush1.msra.mxu0 0.0
      %779 = vmatprep.subr.mxu0 0.0
      %780 = vmatpush1.msra.mxu0 0.0
      %781 = vmatprep.subr.mxu0 0.0
      %782 = vmatpush1.msra.mxu0 0.0
      %783 = vmatprep.subr.mxu0 0.0
      %784 = vmatpush1.msra.mxu0 0.0
      %785 = vmatprep.subr.mxu0 0.0
      %786 = vmatpush1.msra.mxu0 0.0
      %787 = vmatprep.subr.mxu0 0.0
      %788 = vmatpush1.msra.mxu0 0.0
      %789 = vmatprep.subr.mxu0 0.0
      %790 = vmatpush1.msra.mxu0 0.0
      %791 = vmatprep.subr.mxu0 0.0
      %792 = vmatpush1.msra.mxu0 0.0
      %793 = vmatprep.subr.mxu0 0.0
      %794 = vmatpush1.msra.mxu0 0.0
      %795 = vmatprep.subr.mxu0 0.0
      %796 = vmatpush1.msra.mxu0 0.0
      %797 = vmatprep.subr.mxu0 0.0
      %798 = vmatpush1.msra.mxu0 0.0
      %799 = vmatprep.subr.mxu0 0.0
      %800 = vmatpush1.msra.mxu0 0.0
      %801 = vmatprep.subr.mxu0 0.0
      %802 = vmatpush1.msra.mxu0 0.0
      %803 = vmatprep.subr.mxu0 0.0
      %804 = vmatpush1.msra.mxu0 0.0
      %805 = vmatprep.subr.mxu0 0.0
      %806 = vmatpush1.msra.mxu0 0.0
      %807 = vmatprep.subr.mxu0 0.0
      %808 = vmatpush1.msra.mxu0 0.0
      %809 = vmatprep.subr.mxu0 0.0
      %810 = vmatpush1.msra.mxu0 0.0
      %811 = vmatprep.subr.mxu0 0.0
      %812 = vmatpush1.msra.mxu0 0.0
      %813 = vmatprep.subr.mxu0 0.0
      %814 = vmatpush1.msra.mxu0 0.0
      %815 = vmatprep.subr.mxu0 0.0
      %816 = vmatpush1.msra.mxu0 0.0
      %817 = vmatprep.subr.mxu0 0.0
      %818 = vmatpush1.msra.mxu0 0.0
      %819 = vmatprep.subr.mxu0 0.0
      %820 = vmatpush1.msra.mxu0 0.0
      %821 = vmatprep.subr.mxu0 0.0
      %822 = vmatpush1.msra.mxu0 0.0
      %823 = vmatprep.subr.mxu0 0.0
      %824 = vmatpush1.msra.mxu0 0.0
      %825 = vmatprep.subr.mxu0 0.0
      %826 = vmatpush1.msra.mxu0 0.0
      %827 = vmatprep.mubr.f32.mxu0 0.0
      %v828 = vand.u32 %v331, 4294901760
      %829 = vmatmul.mubr.f32.gmra.mrb[0].mxu0 %v828
      %v830 = vpop.f32.mrb[0].mxu0
      %v831 = vadd.f32 %v755, %v830
      %v832 = vpop.f32.mrb[0].mxu0
      %833 = vdwg.mxu0
      %v834 = vmax.f32 %v831, 0.0
      %835 = vrot.lane.b32.xlu0 %v834, 9
      %v836 = vpop.permute.xlu0 %835
      %v837 = vmul.f32 %v836, %v254
      %838 = vrot.lane.b32.xlu0 %v834, 8
      %v839 = vpop.permute.xlu0 %838
      %v840 = vmul.f32 %v839, %v261
      %841 = vrot.lane.b32.xlu0 %v834, 7
      %v842 = vpop.permute.xlu0 %841
      %v843 = vmul.f32 %v842, %v268
      %844 = vrot.lane.b32.xlu0 %v834, 1
      %v845 = vpop.permute.xlu0 %844
      %v846 = vmul.f32 %v845, %v275
      %847 = vrot.lane.b32.xlu0 %v834, 127
      %v848 = vpop.permute.xlu0 %847
      %v849 = vmul.f32 %v848, %v282
      %850 = vrot.lane.b32.xlu0 %v834, 121
      %v851 = vpop.permute.xlu0 %850
      %v852 = vmul.f32 %v851, %v289
      %853 = vrot.lane.b32.xlu0 %v834, 120
      %v854 = vpop.permute.xlu0 %853
      %v855 = vmul.f32 %v854, %v296
      %856 = vrot.lane.b32.xlu0 %v834, 119
      %v857 = vpop.permute.xlu0 %856
      %v858 = vmul.f32 %v857, %v303
      %v859 = vld [vmem:[%s4] sm:$0xff]
      %v860 = vld [vmem:[%s5] sm:$0xff]
      %862 = vset.pattern.permute.xlu0 0
      %863 = vperm.xlu0 %862, %v860
      %v864 = vpop.permute.xlu0 %863
      %vm866 = vcmask 588800
      %v868 = vsel %vm866, %v859, 0
      %870 = vmatprep.subr.mxu0 0.0
      %v871 = vand.u32 %v837, 4294901760
      %872 = vmatpush1.msra.mxu0 %v871
      %873 = vmatprep.subr.mxu0 0.0
      %v874 = vand.u32 %v840, 4294901760
      %875 = vmatpush1.msra.mxu0 %v874
      %876 = vmatprep.subr.mxu0 0.0
      %v877 = vand.u32 %v843, 4294901760
      %878 = vmatpush1.msra.mxu0 %v877
      %879 = vmatprep.subr.mxu0 0.0
      %v880 = vand.u32 %v846, 4294901760
      %881 = vmatpush1.msra.mxu0 %v880
      %882 = vmatprep.subr.mxu0 0.0
      %v883 = vand.u32 %v834, 4294901760
      %884 = vmatpush1.msra.mxu0 %v883
      %885 = vmatprep.subr.mxu0 0.0
      %v886 = vand.u32 %v849, 4294901760
      %887 = vmatpush1.msra.mxu0 %v886
      %888 = vmatprep.subr.mxu0 0.0
      %v889 = vand.u32 %v852, 4294901760
      %890 = vmatpush1.msra.mxu0 %v889
      %891 = vmatprep.subr.mxu0 0.0
      %v892 = vand.u32 %v855, 4294901760
      %893 = vmatpush1.msra.mxu0 %v892
      %894 = vmatprep.subr.mxu0 0.0
      %v895 = vand.u32 %v858, 4294901760
      %896 = vmatpush1.msra.mxu0 %v895
      %897 = vmatprep.subr.mxu0 0.0
      %898 = vmatpush1.msra.mxu0 0.0
      %899 = vmatprep.subr.mxu0 0.0
      %900 = vmatpush1.msra.mxu0 0.0
      %901 = vmatprep.subr.mxu0 0.0
      %902 = vmatpush1.msra.mxu0 0.0
      %903 = vmatprep.subr.mxu0 0.0
      %904 = vmatpush1.msra.mxu0 0.0
      %905 = vmatprep.subr.mxu0 0.0
      %906 = vmatpush1.msra.mxu0 0.0
      %907 = vmatprep.subr.mxu0 0.0
      %908 = vmatpush1.msra.mxu0 0.0
      %909 = vmatprep.subr.mxu0 0.0
      %910 = vmatpush1.msra.mxu0 0.0
      %911 = vmatprep.subr.mxu0 0.0
      %912 = vmatpush1.msra.mxu0 0.0
      %913 = vmatprep.subr.mxu0 0.0
      %914 = vmatpush1.msra.mxu0 0.0
      %915 = vmatprep.subr.mxu0 0.0
      %916 = vmatpush1.msra.mxu0 0.0
      %917 = vmatprep.subr.mxu0 0.0
      %918 = vmatpush1.msra.mxu0 0.0
      %919 = vmatprep.subr.mxu0 0.0
      %920 = vmatpush1.msra.mxu0 0.0
      %921 = vmatprep.subr.mxu0 0.0
      %922 = vmatpush1.msra.mxu0 0.0
      %923 = vmatprep.subr.mxu0 0.0
      %924 = vmatpush1.msra.mxu0 0.0
      %925 = vmatprep.subr.mxu0 0.0
      %926 = vmatpush1.msra.mxu0 0.0
      %927 = vmatprep.subr.mxu0 0.0
      %928 = vmatpush1.msra.mxu0 0.0
      %929 = vmatprep.subr.mxu0 0.0
      %930 = vmatpush1.msra.mxu0 0.0
      %931 = vmatprep.subr.mxu0 0.0
      %932 = vmatpush1.msra.mxu0 0.0
      %933 = vmatprep.subr.mxu0 0.0
      %934 = vmatpush1.msra.mxu0 0.0
      %935 = vmatprep.subr.mxu0 0.0
      %936 = vmatpush1.msra.mxu0 0.0
      %937 = vmatprep.subr.mxu0 0.0
      %938 = vmatpush1.msra.mxu0 0.0
      %939 = vmatprep.subr.mxu0 0.0
      %940 = vmatpush1.msra.mxu0 0.0
      %941 = vmatprep.subr.mxu0 0.0
      %942 = vmatpush1.msra.mxu0 0.0
      %943 = vmatprep.mubr.f32.mxu0 0.0
      %v944 = vand.u32 %v868, 4294901760
      %v945 = vsub.f32 %v868, %v944
      %v946 = vand.u32 %v945, 4294901760
      %v947 = vsub.f32 %v945, %v946
      %v948 = vand.u32 %v947, 4294901760
      %949 = vmatmul.mubr.f32.gmra.mrb[0].mxu0 %v948
      %v950 = vpop.f32.mrb[0].mxu0
      %v951 = vadd.f32 %v864, %v950
      %v952 = vpop.f32.mrb[0].mxu0
      %953 = vdwg.mxu0
      %954 = vmatprep.subr.mxu0 0.0
      %v955 = vand.u32 %v837, 4294901760
      %v956 = vsub.f32 %v837, %v955
      %v957 = vand.u32 %v956, 4294901760
      %v958 = vsub.f32 %v956, %v957
      %v959 = vand.u32 %v958, 4294901760
      %960 = vmatpush1.msra.mxu0 %v959
      %961 = vmatprep.subr.mxu0 0.0
      %v962 = vand.u32 %v840, 4294901760
      %v963 = vsub.f32 %v840, %v962
      %v964 = vand.u32 %v963, 4294901760
      %v965 = vsub.f32 %v963, %v964
      %v966 = vand.u32 %v965, 4294901760
      %967 = vmatpush1.msra.mxu0 %v966
      %968 = vmatprep.subr.mxu0 0.0
      %v969 = vand.u32 %v843, 4294901760
      %v970 = vsub.f32 %v843, %v969
      %v971 = vand.u32 %v970, 4294901760
      %v972 = vsub.f32 %v970, %v971
      %v973 = vand.u32 %v972, 4294901760
      %974 = vmatpush1.msra.mxu0 %v973
      %975 = vmatprep.subr.mxu0 0.0
      %v976 = vand.u32 %v846, 4294901760
      %v977 = vsub.f32 %v846, %v976
      %v978 = vand.u32 %v977, 4294901760
      %v979 = vsub.f32 %v977, %v978
      %v980 = vand.u32 %v979, 4294901760
      %981 = vmatpush1.msra.mxu0 %v980
      %982 = vmatprep.subr.mxu0 0.0
      %v983 = vand.u32 %v834, 4294901760
      %v984 = vsub.f32 %v834, %v983
      %v985 = vand.u32 %v984, 4294901760
      %v986 = vsub.f32 %v984, %v985
      %v987 = vand.u32 %v986, 4294901760
      %988 = vmatpush1.msra.mxu0 %v987
      %989 = vmatprep.subr.mxu0 0.0
      %v990 = vand.u32 %v849, 4294901760
      %v991 = vsub.f32 %v849, %v990
      %v992 = vand.u32 %v991, 4294901760
      %v993 = vsub.f32 %v991, %v992
      %v994 = vand.u32 %v993, 4294901760
      %995 = vmatpush1.msra.mxu0 %v994
      %996 = vmatprep.subr.mxu0 0.0
      %v997 = vand.u32 %v852, 4294901760
      %v998 = vsub.f32 %v852, %v997
      %v999 = vand.u32 %v998, 4294901760
      %v1000 = vsub.f32 %v998, %v999
      %v1001 = vand.u32 %v1000, 4294901760
      %1002 = vmatpush1.msra.mxu0 %v1001
      %1003 = vmatprep.subr.mxu0 0.0
      %v1004 = vand.u32 %v855, 4294901760
      %v1005 = vsub.f32 %v855, %v1004
      %v1006 = vand.u32 %v1005, 4294901760
      %v1007 = vsub.f32 %v1005, %v1006
      %v1008 = vand.u32 %v1007, 4294901760
      %1009 = vmatpush1.msra.mxu0 %v1008
      %1010 = vmatprep.subr.mxu0 0.0
      %v1011 = vand.u32 %v858, 4294901760
      %v1012 = vsub.f32 %v858, %v1011
      %v1013 = vand.u32 %v1012, 4294901760
      %v1014 = vsub.f32 %v1012, %v1013
      %v1015 = vand.u32 %v1014, 4294901760
      %1016 = vmatpush1.msra.mxu0 %v1015
      %1017 = vmatprep.subr.mxu0 0.0
      %1018 = vmatpush1.msra.mxu0 0.0
      %1019 = vmatprep.subr.mxu0 0.0
      %1020 = vmatpush1.msra.mxu0 0.0
      %1021 = vmatprep.subr.mxu0 0.0
      %1022 = vmatpush1.msra.mxu0 0.0
      %1023 = vmatprep.subr.mxu0 0.0
      %1024 = vmatpush1.msra.mxu0 0.0
      %1025 = vmatprep.subr.mxu0 0.0
      %1026 = vmatpush1.msra.mxu0 0.0
      %1027 = vmatprep.subr.mxu0 0.0
      %1028 = vmatpush1.msra.mxu0 0.0
      %1029 = vmatprep.subr.mxu0 0.0
      %1030 = vmatpush1.msra.mxu0 0.0
      %1031 = vmatprep.subr.mxu0 0.0
      %1032 = vmatpush1.msra.mxu0 0.0
      %1033 = vmatprep.subr.mxu0 0.0
      %1034 = vmatpush1.msra.mxu0 0.0
      %1035 = vmatprep.subr.mxu0 0.0
      %1036 = vmatpush1.msra.mxu0 0.0
      %1037 = vmatprep.subr.mxu0 0.0
      %1038 = vmatpush1.msra.mxu0 0.0
      %1039 = vmatprep.subr.mxu0 0.0
      %1040 = vmatpush1.msra.mxu0 0.0
      %1041 = vmatprep.subr.mxu0 0.0
      %1042 = vmatpush1.msra.mxu0 0.0
      %1043 = vmatprep.subr.mxu0 0.0
      %1044 = vmatpush1.msra.mxu0 0.0
      %1045 = vmatprep.subr.mxu0 0.0
      %1046 = vmatpush1.msra.mxu0 0.0
      %1047 = vmatprep.subr.mxu0 0.0
      %1048 = vmatpush1.msra.mxu0 0.0
      %1049 = vmatprep.subr.mxu0 0.0
      %1050 = vmatpush1.msra.mxu0 0.0
      %1051 = vmatprep.subr.mxu0 0.0
      %1052 = vmatpush1.msra.mxu0 0.0
      %1053 = vmatprep.subr.mxu0 0.0
      %1054 = vmatpush1.msra.mxu0 0.0
      %1055 = vmatprep.subr.mxu0 0.0
      %1056 = vmatpush1.msra.mxu0 0.0
      %1057 = vmatprep.subr.mxu0 0.0
      %1058 = vmatpush1.msra.mxu0 0.0
      %1059 = vmatprep.subr.mxu0 0.0
      %1060 = vmatpush1.msra.mxu0 0.0
      %1061 = vmatprep.subr.mxu0 0.0
      %1062 = vmatpush1.msra.mxu0 0.0
      %1063 = vmatprep.mubr.f32.mxu0 0.0
      %v1064 = vand.u32 %v868, 4294901760
      %1065 = vmatmul.mubr.f32.gmra.mrb[0].mxu0 %v1064
      %v1066 = vpop.f32.mrb[0].mxu0
      %v1067 = vadd.f32 %v951, %v1066
      %v1068 = vpop.f32.mrb[0].mxu0
      %1069 = vdwg.mxu0
      %1070 = vmatprep.subr.mxu0 0.0
      %v1071 = vand.u32 %v837, 4294901760
      %v1072 = vsub.f32 %v837, %v1071
      %1073 = vmatpush1.msra.mxu0 %v1072
      %1074 = vmatprep.subr.mxu0 0.0
      %v1075 = vand.u32 %v840, 4294901760
      %v1076 = vsub.f32 %v840, %v1075
      %1077 = vmatpush1.msra.mxu0 %v1076
      %1078 = vmatprep.subr.mxu0 0.0
      %v1079 = vand.u32 %v843, 4294901760
      %v1080 = vsub.f32 %v843, %v1079
      %1081 = vmatpush1.msra.mxu0 %v1080
      %1082 = vmatprep.subr.mxu0 0.0
      %v1083 = vand.u32 %v846, 4294901760
      %v1084 = vsub.f32 %v846, %v1083
      %1085 = vmatpush1.msra.mxu0 %v1084
      %1086 = vmatprep.subr.mxu0 0.0
      %v1087 = vand.u32 %v834, 4294901760
      %v1088 = vsub.f32 %v834, %v1087
      %1089 = vmatpush1.msra.mxu0 %v1088
      %1090 = vmatprep.subr.mxu0 0.0
      %v1091 = vand.u32 %v849, 4294901760
      %v1092 = vsub.f32 %v849, %v1091
      %1093 = vmatpush1.msra.mxu0 %v1092
      %1094 = vmatprep.subr.mxu0 0.0
      %v1095 = vand.u32 %v852, 4294901760
      %v1096 = vsub.f32 %v852, %v1095
      %1097 = vmatpush1.msra.mxu0 %v1096
      %1098 = vmatprep.subr.mxu0 0.0
      %v1099 = vand.u32 %v855, 4294901760
      %v1100 = vsub.f32 %v855, %v1099
      %1101 = vmatpush1.msra.mxu0 %v1100
      %1102 = vmatprep.subr.mxu0 0.0
      %v1103 = vand.u32 %v858, 4294901760
      %v1104 = vsub.f32 %v858, %v1103
      %1105 = vmatpush1.msra.mxu0 %v1104
      %1106 = vmatprep.subr.mxu0 0.0
      %1107 = vmatpush1.msra.mxu0 0.0
      %1108 = vmatprep.subr.mxu0 0.0
      %1109 = vmatpush1.msra.mxu0 0.0
      %1110 = vmatprep.subr.mxu0 0.0
      %1111 = vmatpush1.msra.mxu0 0.0
      %1112 = vmatprep.subr.mxu0 0.0
      %1113 = vmatpush1.msra.mxu0 0.0
      %1114 = vmatprep.subr.mxu0 0.0
      %1115 = vmatpush1.msra.mxu0 0.0
      %1116 = vmatprep.subr.mxu0 0.0
      %1117 = vmatpush1.msra.mxu0 0.0
      %1118 = vmatprep.subr.mxu0 0.0
      %1119 = vmatpush1.msra.mxu0 0.0
      %1120 = vmatprep.subr.mxu0 0.0
      %1121 = vmatpush1.msra.mxu0 0.0
      %1122 = vmatprep.subr.mxu0 0.0
      %1123 = vmatpush1.msra.mxu0 0.0
      %1124 = vmatprep.subr.mxu0 0.0
      %1125 = vmatpush1.msra.mxu0 0.0
      %1126 = vmatprep.subr.mxu0 0.0
      %1127 = vmatpush1.msra.mxu0 0.0
      %1128 = vmatprep.subr.mxu0 0.0
      %1129 = vmatpush1.msra.mxu0 0.0
      %1130 = vmatprep.subr.mxu0 0.0
      %1131 = vmatpush1.msra.mxu0 0.0
      %1132 = vmatprep.subr.mxu0 0.0
      %1133 = vmatpush1.msra.mxu0 0.0
      %1134 = vmatprep.subr.mxu0 0.0
      %1135 = vmatpush1.msra.mxu0 0.0
      %1136 = vmatprep.subr.mxu0 0.0
      %1137 = vmatpush1.msra.mxu0 0.0
      %1138 = vmatprep.subr.mxu0 0.0
      %1139 = vmatpush1.msra.mxu0 0.0
      %1140 = vmatprep.subr.mxu0 0.0
      %1141 = vmatpush1.msra.mxu0 0.0
      %1142 = vmatprep.subr.mxu0 0.0
      %1143 = vmatpush1.msra.mxu0 0.0
      %1144 = vmatprep.subr.mxu0 0.0
      %1145 = vmatpush1.msra.mxu0 0.0
      %1146 = vmatprep.subr.mxu0 0.0
      %1147 = vmatpush1.msra.mxu0 0.0
      %1148 = vmatprep.subr.mxu0 0.0
      %1149 = vmatpush1.msra.mxu0 0.0
      %1150 = vmatprep.subr.mxu0 0.0
      %1151 = vmatpush1.msra.mxu0 0.0
      %1152 = vmatprep.mubr.f32.mxu0 0.0
      %v1153 = vand.u32 %v868, 4294901760
      %v1154 = vsub.f32 %v868, %v1153
      %1155 = vmatmul.mubr.f32.gmra.mrb[0].mxu0 %v1154
      %v1156 = vpop.f32.mrb[0].mxu0
      %v1157 = vadd.f32 %v1067, %v1156
      %v1158 = vpop.f32.mrb[0].mxu0
      %1159 = vdwg.mxu0
      %1160 = vmatprep.subr.mxu0 0.0
      %v1161 = vand.u32 %v837, 4294901760
      %1162 = vmatpush1.msra.mxu0 %v1161
      %1163 = vmatprep.subr.mxu0 0.0
      %v1164 = vand.u32 %v840, 4294901760
      %1165 = vmatpush1.msra.mxu0 %v1164
      %1166 = vmatprep.subr.mxu0 0.0
      %v1167 = vand.u32 %v843, 4294901760
      %1168 = vmatpush1.msra.mxu0 %v1167
      %1169 = vmatprep.subr.mxu0 0.0
      %v1170 = vand.u32 %v846, 4294901760
      %1171 = vmatpush1.msra.mxu0 %v1170
      %1172 = vmatprep.subr.mxu0 0.0
      %v1173 = vand.u32 %v834, 4294901760
      %1174 = vmatpush1.msra.mxu0 %v1173
      %1175 = vmatprep.subr.mxu0 0.0
      %v1176 = vand.u32 %v849, 4294901760
      %1177 = vmatpush1.msra.mxu0 %v1176
      %1178 = vmatprep.subr.mxu0 0.0
      %v1179 = vand.u32 %v852, 4294901760
      %1180 = vmatpush1.msra.mxu0 %v1179
      %1181 = vmatprep.subr.mxu0 0.0
      %v1182 = vand.u32 %v855, 4294901760
      %1183 = vmatpush1.msra.mxu0 %v1182
      %1184 = vmatprep.subr.mxu0 0.0
      %v1185 = vand.u32 %v858, 4294901760
      %1186 = vmatpush1.msra.mxu0 %v1185
      %1187 = vmatprep.subr.mxu0 0.0
      %1188 = vmatpush1.msra.mxu0 0.0
      %1189 = vmatprep.subr.mxu0 0.0
      %1190 = vmatpush1.msra.mxu0 0.0
      %1191 = vmatprep.subr.mxu0 0.0
      %1192 = vmatpush1.msra.mxu0 0.0
      %1193 = vmatprep.subr.mxu0 0.0
      %1194 = vmatpush1.msra.mxu0 0.0
      %1195 = vmatprep.subr.mxu0 0.0
      %1196 = vmatpush1.msra.mxu0 0.0
      %1197 = vmatprep.subr.mxu0 0.0
      %1198 = vmatpush1.msra.mxu0 0.0
      %1199 = vmatprep.subr.mxu0 0.0
      %1200 = vmatpush1.msra.mxu0 0.0
      %1201 = vmatprep.subr.mxu0 0.0
      %1202 = vmatpush1.msra.mxu0 0.0
      %1203 = vmatprep.subr.mxu0 0.0
      %1204 = vmatpush1.msra.mxu0 0.0
      %1205 = vmatprep.subr.mxu0 0.0
      %1206 = vmatpush1.msra.mxu0 0.0
      %1207 = vmatprep.subr.mxu0 0.0
      %1208 = vmatpush1.msra.mxu0 0.0
      %1209 = vmatprep.subr.mxu0 0.0
      %1210 = vmatpush1.msra.mxu0 0.0
      %1211 = vmatprep.subr.mxu0 0.0
      %1212 = vmatpush1.msra.mxu0 0.0
      %1213 = vmatprep.subr.mxu0 0.0
      %1214 = vmatpush1.msra.mxu0 0.0
      %1215 = vmatprep.subr.mxu0 0.0
      %1216 = vmatpush1.msra.mxu0 0.0
      %1217 = vmatprep.subr.mxu0 0.0
      %1218 = vmatpush1.msra.mxu0 0.0
      %1219 = vmatprep.subr.mxu0 0.0
      %1220 = vmatpush1.msra.mxu0 0.0
      %1221 = vmatprep.subr.mxu0 0.0
      %1222 = vmatpush1.msra.mxu0 0.0
      %1223 = vmatprep.subr.mxu0 0.0
      %1224 = vmatpush1.msra.mxu0 0.0
      %1225 = vmatprep.subr.mxu0 0.0
      %1226 = vmatpush1.msra.mxu0 0.0
      %1227 = vmatprep.subr.mxu0 0.0
      %1228 = vmatpush1.msra.mxu0 0.0
      %1229 = vmatprep.subr.mxu0 0.0
      %1230 = vmatpush1.msra.mxu0 0.0
      %1231 = vmatprep.subr.mxu0 0.0
      %1232 = vmatpush1.msra.mxu0 0.0
      %1233 = vmatprep.mubr.f32.mxu0 0.0
      %v1234 = vand.u32 %v868, 4294901760
      %v1235 = vsub.f32 %v868, %v1234
      %v1236 = vand.u32 %v1235, 4294901760
      %1237 = vmatmul.mubr.f32.gmra.mrb[0].mxu0 %v1236
      %v1238 = vpop.f32.mrb[0].mxu0
      %v1239 = vadd.f32 %v1157, %v1238
      %v1240 = vpop.f32.mrb[0].mxu0
      %1241 = vdwg.mxu0
      %1242 = vmatprep.subr.mxu0 0.0
      %v1243 = vand.u32 %v837, 4294901760
      %v1244 = vsub.f32 %v837, %v1243
      %v1245 = vand.u32 %v1244, 4294901760
      %1246 = vmatpush1.msra.mxu0 %v1245
      %1247 = vmatprep.subr.mxu0 0.0
      %v1248 = vand.u32 %v840, 4294901760
      %v1249 = vsub.f32 %v840, %v1248
      %v1250 = vand.u32 %v1249, 4294901760
      %1251 = vmatpush1.msra.mxu0 %v1250
      %1252 = vmatprep.subr.mxu0 0.0
      %v1253 = vand.u32 %v843, 4294901760
      %v1254 = vsub.f32 %v843, %v1253
      %v1255 = vand.u32 %v1254, 4294901760
      %1256 = vmatpush1.msra.mxu0 %v1255
      %1257 = vmatprep.subr.mxu0 0.0
      %v1258 = vand.u32 %v846, 4294901760
      %v1259 = vsub.f32 %v846, %v1258
      %v1260 = vand.u32 %v1259, 4294901760
      %1261 = vmatpush1.msra.mxu0 %v1260
      %1262 = vmatprep.subr.mxu0 0.0
      %v1263 = vand.u32 %v834, 4294901760
      %v1264 = vsub.f32 %v834, %v1263
      %v1265 = vand.u32 %v1264, 4294901760
      %1266 = vmatpush1.msra.mxu0 %v1265
      %1267 = vmatprep.subr.mxu0 0.0
      %v1268 = vand.u32 %v849, 4294901760
      %v1269 = vsub.f32 %v849, %v1268
      %v1270 = vand.u32 %v1269, 4294901760
      %1271 = vmatpush1.msra.mxu0 %v1270
      %1272 = vmatprep.subr.mxu0 0.0
      %v1273 = vand.u32 %v852, 4294901760
      %v1274 = vsub.f32 %v852, %v1273
      %v1275 = vand.u32 %v1274, 4294901760
      %1276 = vmatpush1.msra.mxu0 %v1275
      %1277 = vmatprep.subr.mxu0 0.0
      %v1278 = vand.u32 %v855, 4294901760
      %v1279 = vsub.f32 %v855, %v1278
      %v1280 = vand.u32 %v1279, 4294901760
      %1281 = vmatpush1.msra.mxu0 %v1280
      %1282 = vmatprep.subr.mxu0 0.0
      %v1283 = vand.u32 %v858, 4294901760
      %v1284 = vsub.f32 %v858, %v1283
      %v1285 = vand.u32 %v1284, 4294901760
      %1286 = vmatpush1.msra.mxu0 %v1285
      %1287 = vmatprep.subr.mxu0 0.0
      %1288 = vmatpush1.msra.mxu0 0.0
      %1289 = vmatprep.subr.mxu0 0.0
      %1290 = vmatpush1.msra.mxu0 0.0
      %1291 = vmatprep.subr.mxu0 0.0
      %1292 = vmatpush1.msra.mxu0 0.0
      %1293 = vmatprep.subr.mxu0 0.0
      %1294 = vmatpush1.msra.mxu0 0.0
      %1295 = vmatprep.subr.mxu0 0.0
      %1296 = vmatpush1.msra.mxu0 0.0
      %1297 = vmatprep.subr.mxu0 0.0
      %1298 = vmatpush1.msra.mxu0 0.0
      %1299 = vmatprep.subr.mxu0 0.0
      %1300 = vmatpush1.msra.mxu0 0.0
      %1301 = vmatprep.subr.mxu0 0.0
      %1302 = vmatpush1.msra.mxu0 0.0
      %1303 = vmatprep.subr.mxu0 0.0
      %1304 = vmatpush1.msra.mxu0 0.0
      %1305 = vmatprep.subr.mxu0 0.0
      %1306 = vmatpush1.msra.mxu0 0.0
      %1307 = vmatprep.subr.mxu0 0.0
      %1308 = vmatpush1.msra.mxu0 0.0
      %1309 = vmatprep.subr.mxu0 0.0
      %1310 = vmatpush1.msra.mxu0 0.0
      %1311 = vmatprep.subr.mxu0 0.0
      %1312 = vmatpush1.msra.mxu0 0.0
      %1313 = vmatprep.subr.mxu0 0.0
      %1314 = vmatpush1.msra.mxu0 0.0
      %1315 = vmatprep.subr.mxu0 0.0
      %1316 = vmatpush1.msra.mxu0 0.0
      %1317 = vmatprep.subr.mxu0 0.0
      %1318 = vmatpush1.msra.mxu0 0.0
      %1319 = vmatprep.subr.mxu0 0.0
      %1320 = vmatpush1.msra.mxu0 0.0
      %1321 = vmatprep.subr.mxu0 0.0
      %1322 = vmatpush1.msra.mxu0 0.0
      %1323 = vmatprep.subr.mxu0 0.0
      %1324 = vmatpush1.msra.mxu0 0.0
      %1325 = vmatprep.subr.mxu0 0.0
      %1326 = vmatpush1.msra.mxu0 0.0
      %1327 = vmatprep.subr.mxu0 0.0
      %1328 = vmatpush1.msra.mxu0 0.0
      %1329 = vmatprep.subr.mxu0 0.0
      %1330 = vmatpush1.msra.mxu0 0.0
      %1331 = vmatprep.subr.mxu0 0.0
      %1332 = vmatpush1.msra.mxu0 0.0
      %1333 = vmatprep.mubr.f32.mxu0 0.0
      %v1334 = vand.u32 %v868, 4294901760
      %1335 = vmatmul.mubr.f32.gmra.mrb[0].mxu0 %v1334
      %v1336 = vpop.f32.mrb[0].mxu0
      %v1337 = vadd.f32 %v1239, %v1336
      %v1338 = vpop.f32.mrb[0].mxu0
      %1339 = vdwg.mxu0
      %1340 = vmatprep.subr.mxu0 0.0
      %v1341 = vand.u32 %v837, 4294901760
      %1342 = vmatpush1.msra.mxu0 %v1341
      %1343 = vmatprep.subr.mxu0 0.0
      %v1344 = vand.u32 %v840, 4294901760
      %1345 = vmatpush1.msra.mxu0 %v1344
      %1346 = vmatprep.subr.mxu0 0.0
      %v1347 = vand.u32 %v843, 4294901760
      %1348 = vmatpush1.msra.mxu0 %v1347
      %1349 = vmatprep.subr.mxu0 0.0
      %v1350 = vand.u32 %v846, 4294901760
      %1351 = vmatpush1.msra.mxu0 %v1350
      %1352 = vmatprep.subr.mxu0 0.0
      %v1353 = vand.u32 %v834, 4294901760
      %1354 = vmatpush1.msra.mxu0 %v1353
      %1355 = vmatprep.subr.mxu0 0.0
      %v1356 = vand.u32 %v849, 4294901760
      %1357 = vmatpush1.msra.mxu0 %v1356
      %1358 = vmatprep.subr.mxu0 0.0
      %v1359 = vand.u32 %v852, 4294901760
      %1360 = vmatpush1.msra.mxu0 %v1359
      %1361 = vmatprep.subr.mxu0 0.0
      %v1362 = vand.u32 %v855, 4294901760
      %1363 = vmatpush1.msra.mxu0 %v1362
      %1364 = vmatprep.subr.mxu0 0.0
      %v1365 = vand.u32 %v858, 4294901760
      %1366 = vmatpush1.msra.mxu0 %v1365
      %1367 = vmatprep.subr.mxu0 0.0
      %1368 = vmatpush1.msra.mxu0 0.0
      %1369 = vmatprep.subr.mxu0 0.0
      %1370 = vmatpush1.msra.mxu0 0.0
      %1371 = vmatprep.subr.mxu0 0.0
      %1372 = vmatpush1.msra.mxu0 0.0
      %1373 = vmatprep.subr.mxu0 0.0
      %1374 = vmatpush1.msra.mxu0 0.0
      %1375 = vmatprep.subr.mxu0 0.0
      %1376 = vmatpush1.msra.mxu0 0.0
      %1377 = vmatprep.subr.mxu0 0.0
      %1378 = vmatpush1.msra.mxu0 0.0
      %1379 = vmatprep.subr.mxu0 0.0
      %1380 = vmatpush1.msra.mxu0 0.0
      %1381 = vmatprep.subr.mxu0 0.0
      %1382 = vmatpush1.msra.mxu0 0.0
      %1383 = vmatprep.subr.mxu0 0.0
      %1384 = vmatpush1.msra.mxu0 0.0
      %1385 = vmatprep.subr.mxu0 0.0
      %1386 = vmatpush1.msra.mxu0 0.0
      %1387 = vmatprep.subr.mxu0 0.0
      %1388 = vmatpush1.msra.mxu0 0.0
      %1389 = vmatprep.subr.mxu0 0.0
      %1390 = vmatpush1.msra.mxu0 0.0
      %1391 = vmatprep.subr.mxu0 0.0
      %1392 = vmatpush1.msra.mxu0 0.0
      %1393 = vmatprep.subr.mxu0 0.0
      %1394 = vmatpush1.msra.mxu0 0.0
      %1395 = vmatprep.subr.mxu0 0.0
      %1396 = vmatpush1.msra.mxu0 0.0
      %1397 = vmatprep.subr.mxu0 0.0
      %1398 = vmatpush1.msra.mxu0 0.0
      %1399 = vmatprep.subr.mxu0 0.0
      %1400 = vmatpush1.msra.mxu0 0.0
      %1401 = vmatprep.subr.mxu0 0.0
      %1402 = vmatpush1.msra.mxu0 0.0
      %1403 = vmatprep.subr.mxu0 0.0
      %1404 = vmatpush1.msra.mxu0 0.0
      %1405 = vmatprep.subr.mxu0 0.0
      %1406 = vmatpush1.msra.mxu0 0.0
      %1407 = vmatprep.subr.mxu0 0.0
      %1408 = vmatpush1.msra.mxu0 0.0
      %1409 = vmatprep.subr.mxu0 0.0
      %1410 = vmatpush1.msra.mxu0 0.0
      %1411 = vmatprep.subr.mxu0 0.0
      %1412 = vmatpush1.msra.mxu0 0.0
      %1413 = vmatprep.mubr.f32.mxu0 0.0
      %v1414 = vand.u32 %v868, 4294901760
      %1415 = vmatmul.mubr.f32.gmra.mrb[0].mxu0 %v1414
      %v1416 = vpop.f32.mrb[0].mxu0
      %v1417 = vadd.f32 %v1337, %v1416
      %v1418 = vpop.f32.mrb[0].mxu0
      %1419 = vdwg.mxu0
      %v1420 = vmax.f32 %v1417, 0.0
      %1421 = vst [vmem:[%s246] sm:$0xff] %v1420
      %p1422 = scmp.lt.s32.totalorder %s17, 1
      %s1423 = scalar_select %p1422, %s17, 1
      %s1424 = smul.addr %s1423, 8
      %s1425 = scalar_lea.vmem %s6, %s1424
      // Predicated region
      $region45: #{down_block.3} parent=43 // pred_check
        %p1426 = pneg %p166
      $region46: #{down_block.3} parent=43 // pred_check_branch
        %1428 = sbr.rel (%p1426) target = $region48
      $region47: #{down_block.3} parent=43 // pred_region
        _
      $region48: #{down_block.3} parent=43 // pred_fallthru
        _
    $region44: #{down_block.3} parent=5 // pred_fallthru
      _
    %p1429 = scmp.le.s32.totalorder 2, %s12
    // Predicated region
    $region49: #{down_block.3} parent=5 // pred_check
      %p1430 = pneg %p1429
    $region50: #{down_block.3} parent=5 // pred_check_branch
      %1432 = sbr.rel (%p1430) target = $region52
    $region51: #{down_block.3} parent=5 // pred_region
      %s1433 = ssub.s32 %s12, 2
      // Predicated region
      $region53: #{down_block.3} parent=51 // pred_check
        %p1434 = pneg %p172
      $region54: #{down_block.3} parent=51 // pred_check_branch
        %1436 = sbr.rel (%p1434) target = $region56
      $region55: #{down_block.3} parent=51 // pred_region
        %p1437 = scmp.lt.s32.totalorder %s18, 1
        %s1438 = scalar_select %p1437, %s18, 1
        %s1439 = smul.addr %s1438, 8
        %s1440 = scalar_lea.vmem %s6, %s1439
      $region56: #{down_block.3} parent=51 // pred_fallthru
        _
    $region52: #{down_block.3} parent=5 // pred_fallthru
      _
  $region6: #{down_block.3} parent=0 // loop_footer
    %s16 = sadd.s32 1, %s12
  $region7: #{down_block.3} parent=0 // loop_footer_branch
    %11 = sbr.rel target = $region3
  $region8: #{down_block.3} parent=0 // loop_exit
    _

</llo_original>
